<compile_context>
chip_gen: v7x
topology: tpu7x:2x2x1
jax: 0.10.0
libtpu: 0.0.40
codegen_flags: <defaults>
</compile_context>

<pallas_src>
from functools import partial

import jax
import jax.numpy as jnp
from jax.experimental import pallas as pl
from jax.experimental.pallas import tpu as pltpu


# ------------------------------ small helpers --------------------------------

def _round_up(x, m):
    return -(-x // m) * m


def _elu(x):
    # ELU(alpha=1) in fp32; the minimum() guard keeps exp() out of overflow on the
    # junk spatial columns (jnp.where evaluates both branches).
    return jnp.where(x > 0, x, jnp.exp(jnp.minimum(x, 0.0)) - 1.0)


def _pick_lane_batch(n, max_b=8):
    """Images packed side-by-side on the lane axis per grid step.

    Largest divisor of n (<= max_b) that still leaves a grid of length >= 2, so on
    v7x both TensorCores get work; on v5e/v6e the serial grid just gets shorter."""
    best = 1
    for b in range(2, min(n, max_b) + 1):
        if n % b == 0 and n // b >= 2:
            best = b
    return best


# --------------------------------- kernel ------------------------------------

def _conv_coup_kernel(H, W, B, S, cin, chan, nlay, oc,
                      skip_ref, w_ref, b_ref, out_ref,
                      s_ref, m_ref, hp_ref):
    # Lane layouts (lane axis = flattened spatial, B images side by side, stride S):
    #   P-layout: per image, the zero-padded (H+2)x(W+2) grid flattened into its
    #             S-lane slot; buffers carry an extra 128-lane zero tail.
    #   Q-layout: per image, the conv-output (H)x(W+2) grid flattened (H*(W+2)
    #             lanes; cols j >= W of each row are junk and masked/dropped).
    pw = W + 2
    L = B * S                                     # matmul N dim (128-multiple)

    # weight/bias pack row offsets (static)
    r_head, k_head = 0, 9 * cin
    r_mid, k_mid = chan, chan + cin
    r_wt2 = chan * (1 + nlay)
    r_wt1 = r_wt2 + oc
    r_bt = chan * (1 + nlay)

    skip = skip_ref[0]                            # (cin, L+tail) bf16, zero-padded

    # ---- skip im2col slab (bf16): row [cin*t + c] = skip[c, off_t : off_t + L] ---
    for t in range(9):
        kh, kw = divmod(t, 3)
        off = kh * pw + kw
        s_ref[cin * t:cin * (t + 1), :] = skip[:, off:off + L]

    # ---- head: 3x3 conv == one matmul over the 9-tap slab (K = 9*cin) ------------
    h = jnp.dot(w_ref[r_head:r_head + chan, 0:k_head], s_ref[...],
                preferred_element_type=jnp.float32) + b_ref[0:chan, :]  # (chan, L)

    # ---- body: nlay x [ELU -> 1x1 conv over concat(h, skip)] (K = chan + cin) ----
    m_ref[chan:chan + cin, :] = s_ref[4 * cin:5 * cin, :]    # center tap == skip
    for i in range(nlay):
        m_ref[0:chan, :] = _elu(h).astype(jnp.bfloat16)
        h = (jnp.dot(w_ref[r_mid + i * chan:r_mid + (i + 1) * chan, 0:k_mid],
                     m_ref[...], preferred_element_type=jnp.float32)
             + b_ref[chan + i * chan:chan + (i + 1) * chan, :])

    # ---- valid-column mask, built in-kernel (iota + compares only, no DMA) -------
    q = jax.lax.broadcasted_iota(jnp.int32, (1, L), 1)
    valid = None
    for b in range(B):
        for r in range(H):
            lo = b * S + r * pw
            term = (q >= lo) & (q < lo + W)
            valid = term if valid is None else (valid | term)
    mask = jnp.where(valid, 1.0, 0.0)                                   # (1, L) f32

    # ---- tail: ELU -> 3x3 conv over concat(h, skip) ------------------------------
    # Re-embed masked elu(h) into the zero-padded P-layout.  Only the border lanes
    # the interior write does not cover are re-zeroed each step (cheap, and NOT
    # gated on program_id so it stays correct when the grid is split across cores).
    hp_ref[:, 0:128] = jnp.zeros((chan, 128), hp_ref.dtype)
    hp_ref[:, L:] = jnp.zeros((chan, hp_ref.shape[1] - L), hp_ref.dtype)
    hp_ref[:, pw + 1:pw + 1 + L] = (_elu(h) * mask).astype(jnp.bfloat16)

    # skip contribution: one matmul over the reused skip slab; bias added once.
    out = (jnp.dot(w_ref[r_wt2:r_wt2 + oc, 0:k_head], s_ref[...],
                   preferred_element_type=jnp.float32)
           + b_ref[r_bt:r_bt + oc, :])                                  # (oc, L) f32
    # elu(h) contribution: 9 accumulating per-tap matmuls straight off hp
    # (no 9*chan x L im2col slab, no fp32 slab copies).
    for t in range(9):
        kh, kw = divmod(t, 3)
        off = kh * pw + kw
        out = out + jnp.dot(w_ref[r_wt1 + t * oc:r_wt1 + (t + 1) * oc, 0:chan],
                            hp_ref[:, off:off + L],
                            preferred_element_type=jnp.float32)
    out_ref[0] = out


# ------------------------------ module forward -------------------------------

def conv_coup_forward(params, x_nchw, lane_batch=None):
    """ConvCoup.forward. x_nchw: (N, Cin, H, W). Returns the two output-channel
    halves, each (N, oc//2, H, W) — same as the PyTorch module."""
    N, cin, H, W = x_nchw.shape
    ph, pw = H + 2, W + 2
    lq = H * pw

    chan = params["head_b"].shape[0]
    oc = params["tail_b"].shape[0]
    nlay = len(params["mid"])

    B = _pick_lane_batch(N) if lane_batch is None else lane_batch
    assert N % B == 0, "lane_batch must divide the batch size"
    G = N // B

    # per-image lane stride: covers the padded grid plus the largest tap-slice end,
    # rounded up to a whole number of 128-lane vregs (384 for 16x16 images).
    S = _round_up(ph * pw + 2, 128)
    L = B * S                                     # matmul N dim per grid step
    tail = _round_up(2 * pw + 2, 128)             # zero tail so tap slices never OOB
    LP = L + tail

    # ---- layout plumbing (one-time, wrapper-side) --------------------------------
    bf = jnp.bfloat16
    xpad = jnp.pad(x_nchw, ((0, 0), (0, 0), (1, 1), (1, 1)))            # (N,cin,ph,pw)
    xflat = jnp.pad(xpad.reshape(N, cin, ph * pw),
                    ((0, 0), (0, 0), (0, S - ph * pw)))                 # (N,cin,S)
    skip_p = (xflat.reshape(G, B, cin, S).transpose(0, 2, 1, 3)
              .reshape(G, cin, B * S))
    skip_p = jnp.pad(skip_p, ((0, 0), (0, 0), (0, tail))).astype(bf)    # (G,cin,LP)

    # ---- weight / bias packing (2 resident inputs instead of 8 tiny ones) --------
    KW = max(9 * cin, chan + cin, chan)

    def padk(w):
        return jnp.pad(w, ((0, 0), (0, KW - w.shape[1])))

    wh = params["head_w"].transpose(3, 0, 1, 2).reshape(chan, 9 * cin)
    wm = [jnp.concatenate([w1.T, w2.T], axis=1) for (w1, w2, _) in params["mid"]]
    wt2 = params["tail_w2"].transpose(3, 0, 1, 2).reshape(oc, 9 * cin)
    wt1 = (params["tail_w1"].transpose(3, 0, 1, 2)            # (oc, 3, 3, chan)
           .reshape(oc, 9, chan).transpose(1, 0, 2).reshape(9 * oc, chan))
    wpack = jnp.concatenate([padk(wh)] + [padk(w) for w in wm]
                            + [padk(wt2), padk(wt1)], axis=0).astype(bf)
    bpack = jnp.concatenate([params["head_b"]]
                            + [b for (_, _, b) in params["mid"]]
                            + [params["tail_b"]]).reshape(-1, 1)        # f32
    RW, RB = wpack.shape[0], bpack.shape[0]

    out = pl.pallas_call(
        partial(_conv_coup_kernel, H, W, B, S, cin, chan, nlay, oc),
        out_shape=jax.ShapeDtypeStruct((G, oc, L), jnp.float32),
        grid=(G,),
        in_specs=[
            pl.BlockSpec((1, cin, LP), lambda g: (g, 0, 0)),   # padded skip (B imgs)
            pl.BlockSpec((RW, KW), lambda g: (0, 0)),          # all matmul weights
            pl.BlockSpec((RB, 1), lambda g: (0, 0)),           # all biases
        ],
        out_specs=pl.BlockSpec((1, oc, L), lambda g: (g, 0, 0)),
        scratch_shapes=[
            pltpu.VMEM((9 * cin, L), jnp.bfloat16),            # skip 9-tap slab
            pltpu.VMEM((chan + cin, L), jnp.bfloat16),          # concat(elu(h), skip)
            pltpu.VMEM((chan, LP), jnp.bfloat16),                # zero-padded elu(h)
        ],
        compiler_params=pltpu.CompilerParams(dimension_semantics=("parallel",)),
    )(skip_p, wpack, bpack)

    # drop per-image lane padding + junk columns -> (N, oc, H, W)
    out = (out.reshape(G, oc, B, S).transpose(0, 2, 1, 3).reshape(N, oc, S)
           [:, :, :lq].reshape(N, oc, H, pw)[:, :, :, :W])
    return out[:, : oc // 2], out[:, oc // 2:]


# -------------------------- parameters (synthetic) ----------------------------

def init_params(key, input_chan, output_chan, lay=3, chan=32, ks=3):
    assert output_chan % 2 == 0
    assert ks == 3
    keys = jax.random.split(key, 4 + 3 * lay + 3)
    it = iter(keys)

    def w_init(k, shape, fan_in):
        return (jax.random.normal(k, shape, jnp.float32) / jnp.sqrt(fan_in)).astype(jnp.float32)

    def b_init(k, shape):
        return 0.05 * jax.random.normal(k, shape, jnp.float32)

    params = {
        "head_w": w_init(next(it), (3, 3, input_chan, chan), 9 * input_chan),
        "head_b": b_init(next(it), (chan,)),
        "mid": [],
    }
    for _ in range(lay):
        w1 = w_init(next(it), (chan, chan), chan + input_chan)
        w2 = w_init(next(it), (input_chan, chan), chan + input_chan)
        b = b_init(next(it), (chan,))
        params["mid"].append((w1, w2, b))
    fan = 9 * (chan + input_chan)
    params["tail_w1"] = w_init(next(it), (3, 3, chan, output_chan), fan)
    params["tail_w2"] = w_init(next(it), (3, 3, input_chan, output_chan), fan)
    params["tail_b"] = b_init(next(it), (output_chan,))
    return params


# ------------------------------ pure-JAX reference ----------------------------

def _conv_ref(x, w, b, pad):
    out = jax.lax.conv_general_dilated(
        x, w, window_strides=(1, 1), padding=[(pad, pad), (pad, pad)],
        dimension_numbers=("NHWC", "HWIO", "NHWC"))
    return out + b


def conv_coup_reference(params, x_nchw):
    x = jnp.transpose(x_nchw, (0, 2, 3, 1))
    skip = x
    h = _conv_ref(x, params["head_w"], params["head_b"], 1)
    for (w1, w2, b) in params["mid"]:
        a = jax.nn.elu(h)
        cat = jnp.concatenate([a, skip], axis=-1)
        w = jnp.concatenate([w1, w2], axis=0)[None, None]
        h = _conv_ref(cat, w, b, 0)
    a = jax.nn.elu(h)
    cat = jnp.concatenate([a, skip], axis=-1)
    w = jnp.concatenate([params["tail_w1"], params["tail_w2"]], axis=2)
    out = _conv_ref(cat, w, params["tail_b"], 1)
    oc = out.shape[-1]
    return (jnp.transpose(out[..., : oc // 2], (0, 3, 1, 2)),
            jnp.transpose(out[..., oc // 2:], (0, 3, 1, 2)))


# ----------------------------------- main -------------------------------------

if __name__ == "__main__":
    N, Cin, H, W = 2, 4, 16, 16
    output_chan, lay, chan, ks = 8, 3, 32, 3

    key = jax.random.PRNGKey(0)
    k_x, k_p = jax.random.split(key)
    x = jax.random.normal(k_x, (N, Cin, H, W), jnp.float32)
    params = init_params(k_p, Cin, output_chan, lay=lay, chan=chan, ks=ks)

    y1, y2 = conv_coup_forward(params, x)
    jax.block_until_ready((y1, y2))

    assert y1.shape == (N, output_chan // 2, H, W), y1.shape
    assert y2.shape == (N, output_chan // 2, H, W), y2.shape

    r1, r2 = conv_coup_reference(params, x)
    err = max(float(jnp.max(jnp.abs(y1 - r1))), float(jnp.max(jnp.abs(y2 - r2))))
    assert err < 5e-2, f"mismatch vs reference (bf16 MXU operands): max abs err = {err}"

    # Also exercise the lane-batched path (B=2 images per grid step, grid of 2).
    x4 = jax.random.normal(jax.random.PRNGKey(1), (4, Cin, H, W), jnp.float32)
    z1, z2 = conv_coup_forward(params, x4)
    jax.block_until_ready((z1, z2))
    s1, s2 = conv_coup_reference(params, x4)
    err4 = max(float(jnp.max(jnp.abs(z1 - s1))), float(jnp.max(jnp.abs(z2 - s2))))
    assert err4 < 5e-2, f"lane-batched path mismatch vs reference: max abs err = {err4}"

    print("KERNEL_OK")
</pallas_src>

<mosaic_0001>
module attributes {stable_mosaic.version = 11 : i64} {
  func.func @_conv_coup_kernel(%arg0: i32, %arg1: memref<1x4x512xbf16, #tpu.memory_space<vmem>>, %arg2: memref<208x36xbf16, #tpu.memory_space<vmem>>, %arg3: memref<136x1xf32, #tpu.memory_space<vmem>>, %arg4: memref<1x8x384xf32, #tpu.memory_space<vmem>>, %arg5: memref<36x384xbf16, #tpu.memory_space<vmem>>, %arg6: memref<36x384xbf16, #tpu.memory_space<vmem>>, %arg7: memref<32x512xbf16, #tpu.memory_space<vmem>>) attributes {dimension_semantics = [#tpu.dimension_semantics<parallel>], iteration_bounds = array<i64: 2>, scalar_prefetch = 0 : i64, scratch_operands = 3 : i64, tpu.core_type = #tpu.core_type<tc>, window_params = [{transform_indices = @transform_0, window_bounds = array<i64: 1, 4, 512>}, {pipeline_mode = #tpu.pipeline_mode<synchronous>, transform_indices = @transform_1, window_bounds = array<i64: 208, 36>}, {pipeline_mode = #tpu.pipeline_mode<synchronous>, transform_indices = @transform_2, window_bounds = array<i64: 136, 1>}, {transform_indices = @transform_3, window_bounds = array<i64: 1, 8, 384>}]} {
    %c0 = arith.constant 0 : index
    %c0_0 = arith.constant 0 : index
    %c0_1 = arith.constant 0 : index
    %0 = vector.load %arg1[%c0, %c0_0, %c0_1] : memref<1x4x512xbf16, #tpu.memory_space<vmem>>, vector<1x4x512xbf16>
    %1 = vector.shape_cast %0 : vector<1x4x512xbf16> to vector<4x512xbf16>
    %2 = vector.extract_strided_slice %1 {offsets = [0, 0], sizes = [4, 384], strides = [1, 1]} : vector<4x512xbf16> to vector<4x384xbf16>
    %c0_2 = arith.constant 0 : index
    %c0_3 = arith.constant 0 : index
    %3 = vector.load %arg5[%c0_2, %c0_3] : memref<36x384xbf16, #tpu.memory_space<vmem>>, vector<4x384xbf16>
    tpu.vector_store %arg5[%c0_2, %c0_3], %2 {strides = array<i32>} : memref<36x384xbf16, #tpu.memory_space<vmem>>, vector<4x384xbf16>,
    %4 = vector.extract_strided_slice %1 {offsets = [0, 1], sizes = [4, 384], strides = [1, 1]} : vector<4x512xbf16> to vector<4x384xbf16>
    %c4 = arith.constant 4 : index
    %c0_4 = arith.constant 0 : index
    %5 = vector.load %arg5[%c4, %c0_4] : memref<36x384xbf16, #tpu.memory_space<vmem>>, vector<4x384xbf16>
    tpu.vector_store %arg5[%c4, %c0_4], %4 {strides = array<i32>} : memref<36x384xbf16, #tpu.memory_space<vmem>>, vector<4x384xbf16>,
    %6 = vector.extract_strided_slice %1 {offsets = [0, 2], sizes = [4, 384], strides = [1, 1]} : vector<4x512xbf16> to vector<4x384xbf16>
    %c8 = arith.constant 8 : index
    %c0_5 = arith.constant 0 : index
    %7 = vector.load %arg5[%c8, %c0_5] : memref<36x384xbf16, #tpu.memory_space<vmem>>, vector<4x384xbf16>
    tpu.vector_store %arg5[%c8, %c0_5], %6 {strides = array<i32>} : memref<36x384xbf16, #tpu.memory_space<vmem>>, vector<4x384xbf16>,
    %8 = vector.extract_strided_slice %1 {offsets = [0, 18], sizes = [4, 384], strides = [1, 1]} : vector<4x512xbf16> to vector<4x384xbf16>
    %c12 = arith.constant 12 : index
    %c0_6 = arith.constant 0 : index
    %9 = vector.load %arg5[%c12, %c0_6] : memref<36x384xbf16, #tpu.memory_space<vmem>>, vector<4x384xbf16>
    tpu.vector_store %arg5[%c12, %c0_6], %8 {strides = array<i32>} : memref<36x384xbf16, #tpu.memory_space<vmem>>, vector<4x384xbf16>,
    %10 = vector.extract_strided_slice %1 {offsets = [0, 19], sizes = [4, 384], strides = [1, 1]} : vector<4x512xbf16> to vector<4x384xbf16>
    %c16 = arith.constant 16 : index
    %c0_7 = arith.constant 0 : index
    %11 = vector.load %arg5[%c16, %c0_7] : memref<36x384xbf16, #tpu.memory_space<vmem>>, vector<4x384xbf16>
    tpu.vector_store %arg5[%c16, %c0_7], %10 {strides = array<i32>} : memref<36x384xbf16, #tpu.memory_space<vmem>>, vector<4x384xbf16>,
    %12 = vector.extract_strided_slice %1 {offsets = [0, 20], sizes = [4, 384], strides = [1, 1]} : vector<4x512xbf16> to vector<4x384xbf16>
    %c20 = arith.constant 20 : index
    %c0_8 = arith.constant 0 : index
    %13 = vector.load %arg5[%c20, %c0_8] : memref<36x384xbf16, #tpu.memory_space<vmem>>, vector<4x384xbf16>
    tpu.vector_store %arg5[%c20, %c0_8], %12 {strides = array<i32>} : memref<36x384xbf16, #tpu.memory_space<vmem>>, vector<4x384xbf16>,
    %14 = vector.extract_strided_slice %1 {offsets = [0, 36], sizes = [4, 384], strides = [1, 1]} : vector<4x512xbf16> to vector<4x384xbf16>
    %c24 = arith.constant 24 : index
    %c0_9 = arith.constant 0 : index
    %15 = vector.load %arg5[%c24, %c0_9] : memref<36x384xbf16, #tpu.memory_space<vmem>>, vector<4x384xbf16>
    tpu.vector_store %arg5[%c24, %c0_9], %14 {strides = array<i32>} : memref<36x384xbf16, #tpu.memory_space<vmem>>, vector<4x384xbf16>,
    %16 = vector.extract_strided_slice %1 {offsets = [0, 37], sizes = [4, 384], strides = [1, 1]} : vector<4x512xbf16> to vector<4x384xbf16>
    %c28 = arith.constant 28 : index
    %c0_10 = arith.constant 0 : index
    %17 = vector.load %arg5[%c28, %c0_10] : memref<36x384xbf16, #tpu.memory_space<vmem>>, vector<4x384xbf16>
    tpu.vector_store %arg5[%c28, %c0_10], %16 {strides = array<i32>} : memref<36x384xbf16, #tpu.memory_space<vmem>>, vector<4x384xbf16>,
    %18 = vector.extract_strided_slice %1 {offsets = [0, 38], sizes = [4, 384], strides = [1, 1]} : vector<4x512xbf16> to vector<4x384xbf16>
    %c32 = arith.constant 32 : index
    %c0_11 = arith.constant 0 : index
    %19 = vector.load %arg5[%c32, %c0_11] : memref<36x384xbf16, #tpu.memory_space<vmem>>, vector<4x384xbf16>
    tpu.vector_store %arg5[%c32, %c0_11], %18 {strides = array<i32>} : memref<36x384xbf16, #tpu.memory_space<vmem>>, vector<4x384xbf16>,
    %c0_12 = arith.constant 0 : index
    %c0_13 = arith.constant 0 : index
    %20 = vector.load %arg2[%c0_12, %c0_13] : memref<208x36xbf16, #tpu.memory_space<vmem>>, vector<32x36xbf16>
    %c0_14 = arith.constant 0 : index
    %c0_15 = arith.constant 0 : index
    %21 = vector.load %arg5[%c0_14, %c0_15] : memref<36x384xbf16, #tpu.memory_space<vmem>>, vector<36x384xbf16>
    %cst = arith.constant dense<0.000000e+00> : vector<32x384xf32>
    %22 = tpu.matmul %20, %21, %cst {dimension_numbers = #tpu.dot_dimension_numbers<[1], [0], [0], [1], [0, 0, 1, 1], [], []>} : vector<32x36xbf16>, vector<36x384xbf16>, vector<32x384xf32> -> vector<32x384xf32>
    %c0_16 = arith.constant 0 : index
    %c0_17 = arith.constant 0 : index
    %23 = vector.load %arg3[%c0_16, %c0_17] : memref<136x1xf32, #tpu.memory_space<vmem>>, vector<32x1xf32>
    %24 = vector.broadcast %23 : vector<32x1xf32> to vector<32x384xf32>
    %25 = arith.addf %22, %24 : vector<32x384xf32>
    %c16_18 = arith.constant 16 : index
    %c0_19 = arith.constant 0 : index
    %26 = vector.load %arg5[%c16_18, %c0_19] : memref<36x384xbf16, #tpu.memory_space<vmem>>, vector<4x384xbf16>
    %c32_20 = arith.constant 32 : index
    %c0_21 = arith.constant 0 : index
    %27 = vector.load %arg6[%c32_20, %c0_21] : memref<36x384xbf16, #tpu.memory_space<vmem>>, vector<4x384xbf16>
    tpu.vector_store %arg6[%c32_20, %c0_21], %26 {strides = array<i32>} : memref<36x384xbf16, #tpu.memory_space<vmem>>, vector<4x384xbf16>,
    %cst_22 = arith.constant 0.000000e+00 : f32
    %28 = vector.broadcast %cst_22 : f32 to vector<32x384xf32>
    %29 = arith.cmpf ogt, %25, %28 : vector<32x384xf32>
    %cst_23 = arith.constant 0.000000e+00 : f32
    %30 = vector.broadcast %cst_23 : f32 to vector<32x384xf32>
    %31 = arith.minimumf %25, %30 : vector<32x384xf32>
    %32 = math.exp %31 : vector<32x384xf32>
    %cst_24 = arith.constant 1.000000e+00 : f32
    %33 = vector.broadcast %cst_24 : f32 to vector<32x384xf32>
    %34 = arith.subf %32, %33 : vector<32x384xf32>
    %35 = arith.select %29, %25, %34 : vector<32x384xi1>, vector<32x384xf32>
    %36 = arith.truncf %35 : vector<32x384xf32> to vector<32x384xbf16>
    %c0_25 = arith.constant 0 : index
    %c0_26 = arith.constant 0 : index
    %37 = vector.load %arg6[%c0_25, %c0_26] : memref<36x384xbf16, #tpu.memory_space<vmem>>, vector<32x384xbf16>
    tpu.vector_store %arg6[%c0_25, %c0_26], %36 {strides = array<i32>} : memref<36x384xbf16, #tpu.memory_space<vmem>>, vector<32x384xbf16>,
    %c32_27 = arith.constant 32 : index
    %c0_28 = arith.constant 0 : index
    %38 = vector.load %arg2[%c32_27, %c0_28] : memref<208x36xbf16, #tpu.memory_space<vmem>>, vector<32x36xbf16>
    %c0_29 = arith.constant 0 : index
    %c0_30 = arith.constant 0 : index
    %39 = vector.load %arg6[%c0_29, %c0_30] : memref<36x384xbf16, #tpu.memory_space<vmem>>, vector<36x384xbf16>
    %cst_31 = arith.constant dense<0.000000e+00> : vector<32x384xf32>
    %40 = tpu.matmul %38, %39, %cst_31 {dimension_numbers = #tpu.dot_dimension_numbers<[1], [0], [0], [1], [0, 0, 1, 1], [], []>} : vector<32x36xbf16>, vector<36x384xbf16>, vector<32x384xf32> -> vector<32x384xf32>
    %c32_32 = arith.constant 32 : index
    %c0_33 = arith.constant 0 : index
    %41 = vector.load %arg3[%c32_32, %c0_33] : memref<136x1xf32, #tpu.memory_space<vmem>>, vector<32x1xf32>
    %42 = vector.broadcast %41 : vector<32x1xf32> to vector<32x384xf32>
    %43 = arith.addf %40, %42 : vector<32x384xf32>
    %cst_34 = arith.constant 0.000000e+00 : f32
    %44 = vector.broadcast %cst_34 : f32 to vector<32x384xf32>
    %45 = arith.cmpf ogt, %43, %44 : vector<32x384xf32>
    %cst_35 = arith.constant 0.000000e+00 : f32
    %46 = vector.broadcast %cst_35 : f32 to vector<32x384xf32>
    %47 = arith.minimumf %43, %46 : vector<32x384xf32>
    %48 = math.exp %47 : vector<32x384xf32>
    %cst_36 = arith.constant 1.000000e+00 : f32
    %49 = vector.broadcast %cst_36 : f32 to vector<32x384xf32>
    %50 = arith.subf %48, %49 : vector<32x384xf32>
    %51 = arith.select %45, %43, %50 : vector<32x384xi1>, vector<32x384xf32>
    %52 = arith.truncf %51 : vector<32x384xf32> to vector<32x384xbf16>
    %c0_37 = arith.constant 0 : index
    %c0_38 = arith.constant 0 : index
    %53 = vector.load %arg6[%c0_37, %c0_38] : memref<36x384xbf16, #tpu.memory_space<vmem>>, vector<32x384xbf16>
    tpu.vector_store %arg6[%c0_37, %c0_38], %52 {strides = array<i32>} : memref<36x384xbf16, #tpu.memory_space<vmem>>, vector<32x384xbf16>,
    %c64 = arith.constant 64 : index
    %c0_39 = arith.constant 0 : index
    %54 = vector.load %arg2[%c64, %c0_39] : memref<208x36xbf16, #tpu.memory_space<vmem>>, vector<32x36xbf16>
    %c0_40 = arith.constant 0 : index
    %c0_41 = arith.constant 0 : index
    %55 = vector.load %arg6[%c0_40, %c0_41] : memref<36x384xbf16, #tpu.memory_space<vmem>>, vector<36x384xbf16>
    %cst_42 = arith.constant dense<0.000000e+00> : vector<32x384xf32>
    %56 = tpu.matmul %54, %55, %cst_42 {dimension_numbers = #tpu.dot_dimension_numbers<[1], [0], [0], [1], [0, 0, 1, 1], [], []>} : vector<32x36xbf16>, vector<36x384xbf16>, vector<32x384xf32> -> vector<32x384xf32>
    %c64_43 = arith.constant 64 : index
    %c0_44 = arith.constant 0 : index
    %57 = vector.load %arg3[%c64_43, %c0_44] : memref<136x1xf32, #tpu.memory_space<vmem>>, vector<32x1xf32>
    %58 = vector.broadcast %57 : vector<32x1xf32> to vector<32x384xf32>
    %59 = arith.addf %56, %58 : vector<32x384xf32>
    %cst_45 = arith.constant 0.000000e+00 : f32
    %60 = vector.broadcast %cst_45 : f32 to vector<32x384xf32>
    %61 = arith.cmpf ogt, %59, %60 : vector<32x384xf32>
    %cst_46 = arith.constant 0.000000e+00 : f32
    %62 = vector.broadcast %cst_46 : f32 to vector<32x384xf32>
    %63 = arith.minimumf %59, %62 : vector<32x384xf32>
    %64 = math.exp %63 : vector<32x384xf32>
    %cst_47 = arith.constant 1.000000e+00 : f32
    %65 = vector.broadcast %cst_47 : f32 to vector<32x384xf32>
    %66 = arith.subf %64, %65 : vector<32x384xf32>
    %67 = arith.select %61, %59, %66 : vector<32x384xi1>, vector<32x384xf32>
    %68 = arith.truncf %67 : vector<32x384xf32> to vector<32x384xbf16>
    %c0_48 = arith.constant 0 : index
    %c0_49 = arith.constant 0 : index
    %69 = vector.load %arg6[%c0_48, %c0_49] : memref<36x384xbf16, #tpu.memory_space<vmem>>, vector<32x384xbf16>
    tpu.vector_store %arg6[%c0_48, %c0_49], %68 {strides = array<i32>} : memref<36x384xbf16, #tpu.memory_space<vmem>>, vector<32x384xbf16>,
    %c96 = arith.constant 96 : index
    %c0_50 = arith.constant 0 : index
    %70 = vector.load %arg2[%c96, %c0_50] : memref<208x36xbf16, #tpu.memory_space<vmem>>, vector<32x36xbf16>
    %c0_51 = arith.constant 0 : index
    %c0_52 = arith.constant 0 : index
    %71 = vector.load %arg6[%c0_51, %c0_52] : memref<36x384xbf16, #tpu.memory_space<vmem>>, vector<36x384xbf16>
    %cst_53 = arith.constant dense<0.000000e+00> : vector<32x384xf32>
    %72 = tpu.matmul %70, %71, %cst_53 {dimension_numbers = #tpu.dot_dimension_numbers<[1], [0], [0], [1], [0, 0, 1, 1], [], []>} : vector<32x36xbf16>, vector<36x384xbf16>, vector<32x384xf32> -> vector<32x384xf32>
    %c96_54 = arith.constant 96 : index
    %c0_55 = arith.constant 0 : index
    %73 = vector.load %arg3[%c96_54, %c0_55] : memref<136x1xf32, #tpu.memory_space<vmem>>, vector<32x1xf32>
    %74 = vector.broadcast %73 : vector<32x1xf32> to vector<32x384xf32>
    %75 = arith.addf %72, %74 : vector<32x384xf32>
    %76 = tpu.iota {dimensions = array<i32: 1>} : vector<1x384xi32>
    %c0_i32 = arith.constant 0 : i32
    %77 = vector.broadcast %c0_i32 : i32 to vector<1x384xi32>
    %78 = arith.cmpi sge, %76, %77 : vector<1x384xi32>
    %c16_i32 = arith.constant 16 : i32
    %79 = vector.broadcast %c16_i32 : i32 to vector<1x384xi32>
    %80 = arith.cmpi slt, %76, %79 : vector<1x384xi32>
    %81 = arith.andi %78, %80 : vector<1x384xi1>
    %c18_i32 = arith.constant 18 : i32
    %82 = vector.broadcast %c18_i32 : i32 to vector<1x384xi32>
    %83 = arith.cmpi sge, %76, %82 : vector<1x384xi32>
    %c34_i32 = arith.constant 34 : i32
    %84 = vector.broadcast %c34_i32 : i32 to vector<1x384xi32>
    %85 = arith.cmpi slt, %76, %84 : vector<1x384xi32>
    %86 = arith.andi %83, %85 : vector<1x384xi1>
    %87 = arith.ori %81, %86 : vector<1x384xi1>
    %c36_i32 = arith.constant 36 : i32
    %88 = vector.broadcast %c36_i32 : i32 to vector<1x384xi32>
    %89 = arith.cmpi sge, %76, %88 : vector<1x384xi32>
    %c52_i32 = arith.constant 52 : i32
    %90 = vector.broadcast %c52_i32 : i32 to vector<1x384xi32>
    %91 = arith.cmpi slt, %76, %90 : vector<1x384xi32>
    %92 = arith.andi %89, %91 : vector<1x384xi1>
    %93 = arith.ori %87, %92 : vector<1x384xi1>
    %c54_i32 = arith.constant 54 : i32
    %94 = vector.broadcast %c54_i32 : i32 to vector<1x384xi32>
    %95 = arith.cmpi sge, %76, %94 : vector<1x384xi32>
    %c70_i32 = arith.constant 70 : i32
    %96 = vector.broadcast %c70_i32 : i32 to vector<1x384xi32>
    %97 = arith.cmpi slt, %76, %96 : vector<1x384xi32>
    %98 = arith.andi %95, %97 : vector<1x384xi1>
    %99 = arith.ori %93, %98 : vector<1x384xi1>
    %c72_i32 = arith.constant 72 : i32
    %100 = vector.broadcast %c72_i32 : i32 to vector<1x384xi32>
    %101 = arith.cmpi sge, %76, %100 : vector<1x384xi32>
    %c88_i32 = arith.constant 88 : i32
    %102 = vector.broadcast %c88_i32 : i32 to vector<1x384xi32>
    %103 = arith.cmpi slt, %76, %102 : vector<1x384xi32>
    %104 = arith.andi %101, %103 : vector<1x384xi1>
    %105 = arith.ori %99, %104 : vector<1x384xi1>
    %c90_i32 = arith.constant 90 : i32
    %106 = vector.broadcast %c90_i32 : i32 to vector<1x384xi32>
    %107 = arith.cmpi sge, %76, %106 : vector<1x384xi32>
    %c106_i32 = arith.constant 106 : i32
    %108 = vector.broadcast %c106_i32 : i32 to vector<1x384xi32>
    %109 = arith.cmpi slt, %76, %108 : vector<1x384xi32>
    %110 = arith.andi %107, %109 : vector<1x384xi1>
    %111 = arith.ori %105, %110 : vector<1x384xi1>
    %c108_i32 = arith.constant 108 : i32
    %112 = vector.broadcast %c108_i32 : i32 to vector<1x384xi32>
    %113 = arith.cmpi sge, %76, %112 : vector<1x384xi32>
    %c124_i32 = arith.constant 124 : i32
    %114 = vector.broadcast %c124_i32 : i32 to vector<1x384xi32>
    %115 = arith.cmpi slt, %76, %114 : vector<1x384xi32>
    %116 = arith.andi %113, %115 : vector<1x384xi1>
    %117 = arith.ori %111, %116 : vector<1x384xi1>
    %c126_i32 = arith.constant 126 : i32
    %118 = vector.broadcast %c126_i32 : i32 to vector<1x384xi32>
    %119 = arith.cmpi sge, %76, %118 : vector<1x384xi32>
    %c142_i32 = arith.constant 142 : i32
    %120 = vector.broadcast %c142_i32 : i32 to vector<1x384xi32>
    %121 = arith.cmpi slt, %76, %120 : vector<1x384xi32>
    %122 = arith.andi %119, %121 : vector<1x384xi1>
    %123 = arith.ori %117, %122 : vector<1x384xi1>
    %c144_i32 = arith.constant 144 : i32
    %124 = vector.broadcast %c144_i32 : i32 to vector<1x384xi32>
    %125 = arith.cmpi sge, %76, %124 : vector<1x384xi32>
    %c160_i32 = arith.constant 160 : i32
    %126 = vector.broadcast %c160_i32 : i32 to vector<1x384xi32>
    %127 = arith.cmpi slt, %76, %126 : vector<1x384xi32>
    %128 = arith.andi %125, %127 : vector<1x384xi1>
    %129 = arith.ori %123, %128 : vector<1x384xi1>
    %c162_i32 = arith.constant 162 : i32
    %130 = vector.broadcast %c162_i32 : i32 to vector<1x384xi32>
    %131 = arith.cmpi sge, %76, %130 : vector<1x384xi32>
    %c178_i32 = arith.constant 178 : i32
    %132 = vector.broadcast %c178_i32 : i32 to vector<1x384xi32>
    %133 = arith.cmpi slt, %76, %132 : vector<1x384xi32>
    %134 = arith.andi %131, %133 : vector<1x384xi1>
    %135 = arith.ori %129, %134 : vector<1x384xi1>
    %c180_i32 = arith.constant 180 : i32
    %136 = vector.broadcast %c180_i32 : i32 to vector<1x384xi32>
    %137 = arith.cmpi sge, %76, %136 : vector<1x384xi32>
    %c196_i32 = arith.constant 196 : i32
    %138 = vector.broadcast %c196_i32 : i32 to vector<1x384xi32>
    %139 = arith.cmpi slt, %76, %138 : vector<1x384xi32>
    %140 = arith.andi %137, %139 : vector<1x384xi1>
    %141 = arith.ori %135, %140 : vector<1x384xi1>
    %c198_i32 = arith.constant 198 : i32
    %142 = vector.broadcast %c198_i32 : i32 to vector<1x384xi32>
    %143 = arith.cmpi sge, %76, %142 : vector<1x384xi32>
    %c214_i32 = arith.constant 214 : i32
    %144 = vector.broadcast %c214_i32 : i32 to vector<1x384xi32>
    %145 = arith.cmpi slt, %76, %144 : vector<1x384xi32>
    %146 = arith.andi %143, %145 : vector<1x384xi1>
    %147 = arith.ori %141, %146 : vector<1x384xi1>
    %c216_i32 = arith.constant 216 : i32
    %148 = vector.broadcast %c216_i32 : i32 to vector<1x384xi32>
    %149 = arith.cmpi sge, %76, %148 : vector<1x384xi32>
    %c232_i32 = arith.constant 232 : i32
    %150 = vector.broadcast %c232_i32 : i32 to vector<1x384xi32>
    %151 = arith.cmpi slt, %76, %150 : vector<1x384xi32>
    %152 = arith.andi %149, %151 : vector<1x384xi1>
    %153 = arith.ori %147, %152 : vector<1x384xi1>
    %c234_i32 = arith.constant 234 : i32
    %154 = vector.broadcast %c234_i32 : i32 to vector<1x384xi32>
    %155 = arith.cmpi sge, %76, %154 : vector<1x384xi32>
    %c250_i32 = arith.constant 250 : i32
    %156 = vector.broadcast %c250_i32 : i32 to vector<1x384xi32>
    %157 = arith.cmpi slt, %76, %156 : vector<1x384xi32>
    %158 = arith.andi %155, %157 : vector<1x384xi1>
    %159 = arith.ori %153, %158 : vector<1x384xi1>
    %c252_i32 = arith.constant 252 : i32
    %160 = vector.broadcast %c252_i32 : i32 to vector<1x384xi32>
    %161 = arith.cmpi sge, %76, %160 : vector<1x384xi32>
    %c268_i32 = arith.constant 268 : i32
    %162 = vector.broadcast %c268_i32 : i32 to vector<1x384xi32>
    %163 = arith.cmpi slt, %76, %162 : vector<1x384xi32>
    %164 = arith.andi %161, %163 : vector<1x384xi1>
    %165 = arith.ori %159, %164 : vector<1x384xi1>
    %c270_i32 = arith.constant 270 : i32
    %166 = vector.broadcast %c270_i32 : i32 to vector<1x384xi32>
    %167 = arith.cmpi sge, %76, %166 : vector<1x384xi32>
    %c286_i32 = arith.constant 286 : i32
    %168 = vector.broadcast %c286_i32 : i32 to vector<1x384xi32>
    %169 = arith.cmpi slt, %76, %168 : vector<1x384xi32>
    %170 = arith.andi %167, %169 : vector<1x384xi1>
    %171 = arith.ori %165, %170 : vector<1x384xi1>
    %cst_56 = arith.constant 1.000000e+00 : f32
    %cst_57 = arith.constant 0.000000e+00 : f32
    %172 = vector.broadcast %cst_56 : f32 to vector<1x384xf32>
    %173 = vector.broadcast %cst_57 : f32 to vector<1x384xf32>
    %174 = arith.select %171, %172, %173 : vector<1x384xi1>, vector<1x384xf32>
    %cst_58 = arith.constant 0.000000e+00 : bf16
    %175 = vector.broadcast %cst_58 : bf16 to vector<32x128xbf16>
    %c0_59 = arith.constant 0 : index
    %c0_60 = arith.constant 0 : index
    %176 = vector.load %arg7[%c0_59, %c0_60] : memref<32x512xbf16, #tpu.memory_space<vmem>>, vector<32x128xbf16>
    tpu.vector_store %arg7[%c0_59, %c0_60], %175 {strides = array<i32>} : memref<32x512xbf16, #tpu.memory_space<vmem>>, vector<32x128xbf16>,
    %cst_61 = arith.constant 0.000000e+00 : bf16
    %177 = vector.broadcast %cst_61 : bf16 to vector<32x128xbf16>
    %c0_62 = arith.constant 0 : index
    %c384 = arith.constant 384 : index
    %178 = vector.load %arg7[%c0_62, %c384] : memref<32x512xbf16, #tpu.memory_space<vmem>>, vector<32x128xbf16>
    tpu.vector_store %arg7[%c0_62, %c384], %177 {strides = array<i32>} : memref<32x512xbf16, #tpu.memory_space<vmem>>, vector<32x128xbf16>,
    %cst_63 = arith.constant 0.000000e+00 : f32
    %179 = vector.broadcast %cst_63 : f32 to vector<32x384xf32>
    %180 = arith.cmpf ogt, %75, %179 : vector<32x384xf32>
    %cst_64 = arith.constant 0.000000e+00 : f32
    %181 = vector.broadcast %cst_64 : f32 to vector<32x384xf32>
    %182 = arith.minimumf %75, %181 : vector<32x384xf32>
    %183 = math.exp %182 : vector<32x384xf32>
    %cst_65 = arith.constant 1.000000e+00 : f32
    %184 = vector.broadcast %cst_65 : f32 to vector<32x384xf32>
    %185 = arith.subf %183, %184 : vector<32x384xf32>
    %186 = arith.select %180, %75, %185 : vector<32x384xi1>, vector<32x384xf32>
    %187 = vector.broadcast %174 : vector<1x384xf32> to vector<32x384xf32>
    %188 = arith.mulf %186, %187 : vector<32x384xf32>
    %189 = arith.truncf %188 : vector<32x384xf32> to vector<32x384xbf16>
    %c0_66 = arith.constant 0 : index
    %c19 = arith.constant 19 : index
    %190 = vector.load %arg7[%c0_66, %c19] : memref<32x512xbf16, #tpu.memory_space<vmem>>, vector<32x384xbf16>
    tpu.vector_store %arg7[%c0_66, %c19], %189 {strides = array<i32>} : memref<32x512xbf16, #tpu.memory_space<vmem>>, vector<32x384xbf16>,
    %c128 = arith.constant 128 : index
    %c0_67 = arith.constant 0 : index
    %191 = vector.load %arg2[%c128, %c0_67] : memref<208x36xbf16, #tpu.memory_space<vmem>>, vector<8x36xbf16>
    %c0_68 = arith.constant 0 : index
    %c0_69 = arith.constant 0 : index
    %192 = vector.load %arg5[%c0_68, %c0_69] : memref<36x384xbf16, #tpu.memory_space<vmem>>, vector<36x384xbf16>
    %cst_70 = arith.constant dense<0.000000e+00> : vector<8x384xf32>
    %193 = tpu.matmul %191, %192, %cst_70 {dimension_numbers = #tpu.dot_dimension_numbers<[1], [0], [0], [1], [0, 0, 1, 1], [], []>} : vector<8x36xbf16>, vector<36x384xbf16>, vector<8x384xf32> -> vector<8x384xf32>
    %c128_71 = arith.constant 128 : index
    %c0_72 = arith.constant 0 : index
    %194 = vector.load %arg3[%c128_71, %c0_72] : memref<136x1xf32, #tpu.memory_space<vmem>>, vector<8x1xf32>
    %195 = vector.broadcast %194 : vector<8x1xf32> to vector<8x384xf32>
    %196 = arith.addf %193, %195 : vector<8x384xf32>
    %c136 = arith.constant 136 : index
    %c0_73 = arith.constant 0 : index
    %197 = vector.load %arg2[%c136, %c0_73] : memref<208x36xbf16, #tpu.memory_space<vmem>>, vector<8x32xbf16>
    %c0_74 = arith.constant 0 : index
    %c0_75 = arith.constant 0 : index
    %198 = vector.load %arg7[%c0_74, %c0_75] : memref<32x512xbf16, #tpu.memory_space<vmem>>, vector<32x384xbf16>
    %cst_76 = arith.constant dense<0.000000e+00> : vector<8x384xf32>
    %199 = tpu.matmul %197, %198, %cst_76 {dimension_numbers = #tpu.dot_dimension_numbers<[1], [0], [0], [1], [0, 0, 1, 1], [], []>} : vector<8x32xbf16>, vector<32x384xbf16>, vector<8x384xf32> -> vector<8x384xf32>
    %200 = arith.addf %196, %199 : vector<8x384xf32>
    %c144 = arith.constant 144 : index
    %c0_77 = arith.constant 0 : index
    %201 = vector.load %arg2[%c144, %c0_77] : memref<208x36xbf16, #tpu.memory_space<vmem>>, vector<8x32xbf16>
    %c0_78 = arith.constant 0 : index
    %c1 = arith.constant 1 : index
    %202 = vector.load %arg7[%c0_78, %c1] : memref<32x512xbf16, #tpu.memory_space<vmem>>, vector<32x384xbf16>
    %cst_79 = arith.constant dense<0.000000e+00> : vector<8x384xf32>
    %203 = tpu.matmul %201, %202, %cst_79 {dimension_numbers = #tpu.dot_dimension_numbers<[1], [0], [0], [1], [0, 0, 1, 1], [], []>} : vector<8x32xbf16>, vector<32x384xbf16>, vector<8x384xf32> -> vector<8x384xf32>
    %204 = arith.addf %200, %203 : vector<8x384xf32>
    %c152 = arith.constant 152 : index
    %c0_80 = arith.constant 0 : index
    %205 = vector.load %arg2[%c152, %c0_80] : memref<208x36xbf16, #tpu.memory_space<vmem>>, vector<8x32xbf16>
    %c0_81 = arith.constant 0 : index
    %c2 = arith.constant 2 : index
    %206 = vector.load %arg7[%c0_81, %c2] : memref<32x512xbf16, #tpu.memory_space<vmem>>, vector<32x384xbf16>
    %cst_82 = arith.constant dense<0.000000e+00> : vector<8x384xf32>
    %207 = tpu.matmul %205, %206, %cst_82 {dimension_numbers = #tpu.dot_dimension_numbers<[1], [0], [0], [1], [0, 0, 1, 1], [], []>} : vector<8x32xbf16>, vector<32x384xbf16>, vector<8x384xf32> -> vector<8x384xf32>
    %208 = arith.addf %204, %207 : vector<8x384xf32>
    %c160 = arith.constant 160 : index
    %c0_83 = arith.constant 0 : index
    %209 = vector.load %arg2[%c160, %c0_83] : memref<208x36xbf16, #tpu.memory_space<vmem>>, vector<8x32xbf16>
    %c0_84 = arith.constant 0 : index
    %c18 = arith.constant 18 : index
    %210 = vector.load %arg7[%c0_84, %c18] : memref<32x512xbf16, #tpu.memory_space<vmem>>, vector<32x384xbf16>
    %cst_85 = arith.constant dense<0.000000e+00> : vector<8x384xf32>
    %211 = tpu.matmul %209, %210, %cst_85 {dimension_numbers = #tpu.dot_dimension_numbers<[1], [0], [0], [1], [0, 0, 1, 1], [], []>} : vector<8x32xbf16>, vector<32x384xbf16>, vector<8x384xf32> -> vector<8x384xf32>
    %212 = arith.addf %208, %211 : vector<8x384xf32>
    %c168 = arith.constant 168 : index
    %c0_86 = arith.constant 0 : index
    %213 = vector.load %arg2[%c168, %c0_86] : memref<208x36xbf16, #tpu.memory_space<vmem>>, vector<8x32xbf16>
    %c0_87 = arith.constant 0 : index
    %c19_88 = arith.constant 19 : index
    %214 = vector.load %arg7[%c0_87, %c19_88] : memref<32x512xbf16, #tpu.memory_space<vmem>>, vector<32x384xbf16>
    %cst_89 = arith.constant dense<0.000000e+00> : vector<8x384xf32>
    %215 = tpu.matmul %213, %214, %cst_89 {dimension_numbers = #tpu.dot_dimension_numbers<[1], [0], [0], [1], [0, 0, 1, 1], [], []>} : vector<8x32xbf16>, vector<32x384xbf16>, vector<8x384xf32> -> vector<8x384xf32>
    %216 = arith.addf %212, %215 : vector<8x384xf32>
    %c176 = arith.constant 176 : index
    %c0_90 = arith.constant 0 : index
    %217 = vector.load %arg2[%c176, %c0_90] : memref<208x36xbf16, #tpu.memory_space<vmem>>, vector<8x32xbf16>
    %c0_91 = arith.constant 0 : index
    %c20_92 = arith.constant 20 : index
    %218 = vector.load %arg7[%c0_91, %c20_92] : memref<32x512xbf16, #tpu.memory_space<vmem>>, vector<32x384xbf16>
    %cst_93 = arith.constant dense<0.000000e+00> : vector<8x384xf32>
    %219 = tpu.matmul %217, %218, %cst_93 {dimension_numbers = #tpu.dot_dimension_numbers<[1], [0], [0], [1], [0, 0, 1, 1], [], []>} : vector<8x32xbf16>, vector<32x384xbf16>, vector<8x384xf32> -> vector<8x384xf32>
    %220 = arith.addf %216, %219 : vector<8x384xf32>
    %c184 = arith.constant 184 : index
    %c0_94 = arith.constant 0 : index
    %221 = vector.load %arg2[%c184, %c0_94] : memref<208x36xbf16, #tpu.memory_space<vmem>>, vector<8x32xbf16>
    %c0_95 = arith.constant 0 : index
    %c36 = arith.constant 36 : index
    %222 = vector.load %arg7[%c0_95, %c36] : memref<32x512xbf16, #tpu.memory_space<vmem>>, vector<32x384xbf16>
    %cst_96 = arith.constant dense<0.000000e+00> : vector<8x384xf32>
    %223 = tpu.matmul %221, %222, %cst_96 {dimension_numbers = #tpu.dot_dimension_numbers<[1], [0], [0], [1], [0, 0, 1, 1], [], []>} : vector<8x32xbf16>, vector<32x384xbf16>, vector<8x384xf32> -> vector<8x384xf32>
    %224 = arith.addf %220, %223 : vector<8x384xf32>
    %c192 = arith.constant 192 : index
    %c0_97 = arith.constant 0 : index
    %225 = vector.load %arg2[%c192, %c0_97] : memref<208x36xbf16, #tpu.memory_space<vmem>>, vector<8x32xbf16>
    %c0_98 = arith.constant 0 : index
    %c37 = arith.constant 37 : index
    %226 = vector.load %arg7[%c0_98, %c37] : memref<32x512xbf16, #tpu.memory_space<vmem>>, vector<32x384xbf16>
    %cst_99 = arith.constant dense<0.000000e+00> : vector<8x384xf32>
    %227 = tpu.matmul %225, %226, %cst_99 {dimension_numbers = #tpu.dot_dimension_numbers<[1], [0], [0], [1], [0, 0, 1, 1], [], []>} : vector<8x32xbf16>, vector<32x384xbf16>, vector<8x384xf32> -> vector<8x384xf32>
    %228 = arith.addf %224, %227 : vector<8x384xf32>
    %c200 = arith.constant 200 : index
    %c0_100 = arith.constant 0 : index
    %229 = vector.load %arg2[%c200, %c0_100] : memref<208x36xbf16, #tpu.memory_space<vmem>>, vector<8x32xbf16>
    %c0_101 = arith.constant 0 : index
    %c38 = arith.constant 38 : index
    %230 = vector.load %arg7[%c0_101, %c38] : memref<32x512xbf16, #tpu.memory_space<vmem>>, vector<32x384xbf16>
    %cst_102 = arith.constant dense<0.000000e+00> : vector<8x384xf32>
    %231 = tpu.matmul %229, %230, %cst_102 {dimension_numbers = #tpu.dot_dimension_numbers<[1], [0], [0], [1], [0, 0, 1, 1], [], []>} : vector<8x32xbf16>, vector<32x384xbf16>, vector<8x384xf32> -> vector<8x384xf32>
    %232 = arith.addf %228, %231 : vector<8x384xf32>
    %c0_103 = arith.constant 0 : index
    %c0_104 = arith.constant 0 : index
    %c0_105 = arith.constant 0 : index
    %233 = vector.load %arg4[%c0_103, %c0_104, %c0_105] : memref<1x8x384xf32, #tpu.memory_space<vmem>>, vector<1x8x384xf32>
    %234 = vector.shape_cast %233 : vector<1x8x384xf32> to vector<8x384xf32>
    %235 = vector.shape_cast %232 : vector<8x384xf32> to vector<1x8x384xf32>
    tpu.vector_store %arg4[%c0_103, %c0_104, %c0_105], %235 {strides = array<i32>} : memref<1x8x384xf32, #tpu.memory_space<vmem>>, vector<1x8x384xf32>,
    return
  }
  func.func @transform_0(%arg0: i32) -> (i32, i32, i32) {
    %c0_i32 = arith.constant 0 : i32
    %c0_i32_0 = arith.constant 0 : i32
    %c0_i32_1 = arith.constant 0 : i32
    return %arg0, %c0_i32, %c0_i32_0 : i32, i32, i32
  }
  func.func @transform_1(%arg0: i32) -> (i32, i32) {
    %c0_i32 = arith.constant 0 : i32
    %c0_i32_0 = arith.constant 0 : i32
    %c0_i32_1 = arith.constant 0 : i32
    return %c0_i32, %c0_i32_0 : i32, i32
  }
  func.func @transform_2(%arg0: i32) -> (i32, i32) {
    %c0_i32 = arith.constant 0 : i32
    %c0_i32_0 = arith.constant 0 : i32
    %c0_i32_1 = arith.constant 0 : i32
    return %c0_i32, %c0_i32_0 : i32, i32
  }
  func.func @transform_3(%arg0: i32) -> (i32, i32, i32) {
    %c0_i32 = arith.constant 0 : i32
    %c0_i32_0 = arith.constant 0 : i32
    %c0_i32_1 = arith.constant 0 : i32
    return %arg0, %c0_i32, %c0_i32_0 : i32, i32, i32
  }
}

</mosaic_0001>

<llo_original>
// kernel: tpu_custom_call.1
$region0: #{tpu_custom_call.1}
  #allocation0 [shape = 'u32[]', space=smem, size = 0x4, offset = 0x4, fixed_abs, tag = 'smem constant byte address 0x4 - core index']
  #allocation1 [shape = 'u32[144,128]{1,0:T(1,128)}', space=vmem, size = 0x12000, scoped, tag = 'internal scratch']
  #allocation2 [shape = 'bf16[36,384]{1,0:T(8,128)(2,1)}', space=vmem, size = 0x7800, scoped, tag = 'scratch operand']
  #allocation3 [shape = 'bf16[36,384]{1,0:T(8,128)(2,1)}', space=vmem, size = 0x7800, scoped, tag = 'scratch operand']
  #allocation4 [shape = 'bf16[32,512]{1,0:T(16,128)(2,1)}', space=vmem, size = 0x8000, scoped, tag = 'scratch operand']
  %s0 = inlined_call_operand.vmem [shape: bf16[2,4,512], index: 0, kind: input, shape index: {}]
  %s1 = inlined_call_operand.vmem [shape: bf16[208,36], index: 1, kind: input, shape index: {}]
  %s2 = inlined_call_operand.vmem [shape: f32[136,1], index: 2, kind: input, shape index: {}]
  %s3 = inlined_call_operand.hbm [shape: f32[2,8,384], index: 3, kind: output, shape index: {}]
  %s4 = sld [smem:[#allocation0]]
  $region45: #{tpu_custom_call.1} parent=0
    _
  %s6 = ssub.s32 1, %s4
  %s7 = scalar_select 0, %s6, %s4
  $region1: #{tpu_custom_call.1} parent=0
    #allocation5 [shape = 'u8[24576]{0}', space=vmem, size = 0x6000, scoped, tag = 'output window, operand 0']
    #allocation6 [shape = 's32[2]{0}', space=sflag, size = 0x8, scoped, tag = 'scoped memory for tpu_custom_call.1']
    %8 = vsyncpa [#allocation6], 0
    %s9 = scalar_lea.sflag [#allocation6], 1
    %10 = vsyncpa %s9, 0
    loop: start=0, step=1, limit=4
    $region2: #{tpu_custom_call.1} parent=1 // loop_pre_header
      _
    $region3: #{tpu_custom_call.1} parent=1 // loop_header
      %s12 = sphi 0, %s16
      %p13 = scmp.ge.s32.totalorder %s12, 4
      %s22 = sphi 0, %s24
      %s25 = sphi 0, %s22
      %s26 = sphi 0, %s25
      %s42 = sphi 0, %s26
      %s46 = sphi 0, %s46
      %s48 = sphi 0, %s46
      %s49 = sphi 0, %s48
      %s63 = sphi 0, %s49
      %s67 = sphi 0, %s67
      %s69 = sphi 0, %s67
      %s70 = sphi 0, %s69
      %s84 = sphi 0, %s70
      %s90 = sphi 0, %s92
      %s93 = sphi 0, %s90
      %s94 = sphi 0, %s93
      %s110 = sphi 0, %s94
    $region4: #{tpu_custom_call.1} parent=1 // loop_header_branch
      %15 = sbr.rel (%p13) target = $region8
    $region5: #{tpu_custom_call.1} parent=1 // loop_body
      %s17 = ssub.s32 %s12, 1
      %s18 = ssub.s32 %s12, 2
      %s19 = sadd.s32 %s12, 1
      %s20 = ssub.s32 %s12, %s19
      %p21 = scmp.eq.s32.totalorder %s20, 0
      %s23 = sadd.s32 %s22, 1
      %s24 = scalar_select %p21, %s22, %s23
      %p27 = pneg %p21
      %p28 = scmp.eq.s32.totalorder %s12, 1
      %p29 = por %p27, %p28
      %p30 = scmp.ne.s32.totalorder %s22, %s25
      %p31 = scmp.eq.s32.totalorder %s12, 0
      %p32 = por %p30, %p31
      %p33 = scmp.ne.s32.totalorder %s22, %s25
      %p34 = scmp.eq.s32.totalorder %s17, 1
      %p35 = por %p33, %p34
      %p36 = scmp.ne.s32.totalorder %s25, %s26
      %p37 = scmp.eq.s32.totalorder %s17, 0
      %p38 = por %p36, %p37
      %p39 = scmp.ne.s32.totalorder %s25, %s26
      %p40 = scmp.eq.s32.totalorder %s18, 1
      %p41 = por %p39, %p40
      %p43 = scmp.ne.s32.totalorder %s26, %s42
      %p44 = scmp.eq.s32.totalorder %s18, 0
      %p45 = por %p43, %p44
      %s47 = sadd.s32 %s46, 1
      %p50 = scmp.eq.s32.totalorder %s12, 1
      %p51 = scmp.ne.s32.totalorder %s46, %s48
      %p52 = scmp.eq.s32.totalorder %s12, 0
      %p53 = por %p51, %p52
      %p54 = scmp.ne.s32.totalorder %s46, %s48
      %p55 = scmp.eq.s32.totalorder %s17, 1
      %p56 = por %p54, %p55
      %p57 = scmp.ne.s32.totalorder %s48, %s49
      %p58 = scmp.eq.s32.totalorder %s17, 0
      %p59 = por %p57, %p58
      %p60 = scmp.ne.s32.totalorder %s48, %s49
      %p61 = scmp.eq.s32.totalorder %s18, 1
      %p62 = por %p60, %p61
      %p64 = scmp.ne.s32.totalorder %s49, %s63
      %p65 = scmp.eq.s32.totalorder %s18, 0
      %p66 = por %p64, %p65
      %s68 = sadd.s32 %s67, 1
      %p71 = scmp.eq.s32.totalorder %s12, 1
      %p72 = scmp.ne.s32.totalorder %s67, %s69
      %p73 = scmp.eq.s32.totalorder %s12, 0
      %p74 = por %p72, %p73
      %p75 = scmp.ne.s32.totalorder %s67, %s69
      %p76 = scmp.eq.s32.totalorder %s17, 1
      %p77 = por %p75, %p76
      %p78 = scmp.ne.s32.totalorder %s69, %s70
      %p79 = scmp.eq.s32.totalorder %s17, 0
      %p80 = por %p78, %p79
      %p81 = scmp.ne.s32.totalorder %s69, %s70
      %p82 = scmp.eq.s32.totalorder %s18, 1
      %p83 = por %p81, %p82
      %p85 = scmp.ne.s32.totalorder %s70, %s84
      %p86 = scmp.eq.s32.totalorder %s18, 0
      %p87 = por %p85, %p86
      %s88 = ssub.s32 %s12, %s19
      %p89 = scmp.eq.s32.totalorder %s88, 0
      %s91 = sadd.s32 %s90, 1
      %s92 = scalar_select %p89, %s90, %s91
      %p95 = pneg %p89
      %p96 = scmp.eq.s32.totalorder %s12, 1
      %p97 = por %p95, %p96
      %p98 = scmp.ne.s32.totalorder %s90, %s93
      %p99 = scmp.eq.s32.totalorder %s12, 0
      %p100 = por %p98, %p99
      %p101 = scmp.ne.s32.totalorder %s90, %s93
      %p102 = scmp.eq.s32.totalorder %s17, 1
      %p103 = por %p101, %p102
      %p104 = scmp.ne.s32.totalorder %s93, %s94
      %p105 = scmp.eq.s32.totalorder %s17, 0
      %p106 = por %p104, %p105
      %p107 = scmp.ne.s32.totalorder %s93, %s94
      %p108 = scmp.eq.s32.totalorder %s18, 1
      %p109 = por %p107, %p108
      %p111 = scmp.ne.s32.totalorder %s94, %s110
      %p112 = scmp.eq.s32.totalorder %s18, 0
      %p113 = por %p111, %p112
      %p114 = scmp.le.s32.totalorder 1, %s12
      %p115 = scmp.lt.s32.totalorder %s12, 3
      %p116 = pnand %p114, %p115
      %p117 = pneg %p116
      // Predicated region
      $region9: #{tpu_custom_call.1} parent=5 // pred_check
        _
      $region10: #{tpu_custom_call.1} parent=5 // pred_check_branch
        %119 = sbr.rel (%p116) target = $region12
      $region11: #{tpu_custom_call.1} parent=5 // pred_region
        %s120 = ssub.s32 %s12, 1
        // Predicated region
        $region13: #{tpu_custom_call.1} parent=11 // pred_check
          %p121 = pneg %p59
        $region14: #{tpu_custom_call.1} parent=11 // pred_check_branch
          %123 = sbr.rel (%p121) target = $region16
        $region15: #{tpu_custom_call.1} parent=11 // pred_region
          _
        $region16: #{tpu_custom_call.1} parent=11 // pred_fallthru
          _
        // Predicated region
        $region17: #{tpu_custom_call.1} parent=11 // pred_check
          %p124 = pneg %p80
        $region18: #{tpu_custom_call.1} parent=11 // pred_check_branch
          %126 = sbr.rel (%p124) target = $region20
        $region19: #{tpu_custom_call.1} parent=11 // pred_region
          _
        $region20: #{tpu_custom_call.1} parent=11 // pred_fallthru
          _
      $region12: #{tpu_custom_call.1} parent=5 // pred_fallthru
        _
      %p127 = scmp.lt.s32.totalorder %s12, 2
      // Predicated region
      $region21: #{tpu_custom_call.1} parent=5 // pred_check
        %p128 = pneg %p127
      $region22: #{tpu_custom_call.1} parent=5 // pred_check_branch
        %130 = sbr.rel (%p128) target = $region24
      $region23: #{tpu_custom_call.1} parent=5 // pred_region
        // Predicated region
        $region25: #{tpu_custom_call.1} parent=23 // pred_check
          %p131 = pneg %p32
        $region26: #{tpu_custom_call.1} parent=23 // pred_check_branch
          %133 = sbr.rel (%p131) target = $region28
        $region27: #{tpu_custom_call.1} parent=23 // pred_region
          %p134 = scmp.lt.s32.totalorder %s12, 1
          %s135 = scalar_select %p134, %s12, 1
          %s136 = smul.addr %s135, 4
          %s137 = smul.addr %s136, 2
          %s138 = scalar_lea.vmem %s0, %s137
        $region28: #{tpu_custom_call.1} parent=23 // pred_fallthru
          _
      $region24: #{tpu_custom_call.1} parent=5 // pred_fallthru
        _
      %p139 = scmp.le.s32.totalorder 1, %s12
      %p140 = scmp.lt.s32.totalorder %s12, 3
      %p141 = pnand %p139, %p140
      %p142 = pneg %p141
      // Predicated region
      $region29: #{tpu_custom_call.1} parent=5 // pred_check
        _
      $region30: #{tpu_custom_call.1} parent=5 // pred_check_branch
        %144 = sbr.rel (%p141) target = $region32
      $region31: #{tpu_custom_call.1} parent=5 // pred_region
        %s145 = ssub.s32 %s12, 1
        %p146 = scmp.lt.s32.totalorder %s17, 1
        %s147 = scalar_select %p146, %s17, 1
        %s148 = smul.addr %s147, 4
        %s149 = smul.addr %s148, 2
        %s150 = scalar_lea.vmem %s0, %s149
        %p151 = pneg %p38
        %p152 = pneg %p35
        %p153 = pneg %p59
        %p154 = pneg %p56
        %p155 = pneg %p80
        %p156 = pneg %p77
        %p157 = pneg %p106
        %p158 = pneg %p103
        %s159 = sand.u32 %s93, 1
        %s160 = scalar_lea.sflag [#allocation6], %s159
        %s161 = sand.u32 %s93, 1
        %s162 = smul.addr %s161, 24
        %s163 = scalar_lea.vmem [#allocation5], %s162
        %p164 = scmp.lt.s32.totalorder %s17, 1
        %s165 = scalar_select %p164, %s17, 1
        %s166 = smul.addr %s165, 4
        %s167 = smul.addr %s166, 2
        %s168 = scalar_lea.vmem %s0, %s167
        %v170 = vld [vmem:[%s168] sm:$0xff]
        %v172 = vcombine.high %v170, %v170
        %v174 = vunpack.c.l.s4 1983009808
        %v175 = vunpack.c.0.s8 %v174
        %v176 = vlaneseq
        %v177 = vshrl.u32 %v176, 7
        %v178 = vsub.s32 %v175, %v177
        %v179 = vrot.slane %v170, %v178
        %v181 = vunpack.c.l.s4 1983009808
        %v182 = vunpack.c.0.s8 %v181
        %v183 = vlaneseq
        %v184 = vshrl.u32 %v183, 7
        %v185 = vsub.s32 %v182, %v184
        %v186 = vrot.slane %v172, %v185
        %189 = vst [vmem:[#allocation2] sm:$0x33] %v179
        %190 = vst [vmem:[#allocation2 + $0x8] sm:$0x3] %v186
        %v191 = vcombine.low %v170, %v170
        %v193 = vunpack.c.l.s4 1983009808
        %v194 = vunpack.c.0.s8 %v193
        %v195 = vlaneseq
        %v196 = vshrl.u32 %v195, 7
        %v197 = vsub.s32 %v194, %v196
        %v198 = vrot.slane %v191, %v197
        %199 = vrot.lane.b32.xlu0 %v198, 127
        %v200 = vpop.permute.xlu0 %199
        %201 = vrot.lane.b32.xlu0 %v179, 127
        %v202 = vpop.permute.xlu0 %201
        %v203 = vrot.slane %v200, 4
        %v204 = vrot.slane %v202, 4
        %vm205 = vcmask 1043456
        %v206 = vsel %vm205, %v203, %v204
        %vm207 = vcmask 1039360
        %v208 = vsel %vm207, %v200, %v206
        %v209 = vsel %vm207, %v202, %v204
        %212 = vst [vmem:[#allocation2] sm:$0xcc] %v208
        %213 = vst [vmem:[#allocation2 + $0x8] sm:$0xc] %v209
        %214 = vrot.lane.b32.xlu0 %v179, 126
        %v215 = vpop.permute.xlu0 %214
        %216 = vrot.lane.b32.xlu0 %v186, 126
        %v217 = vpop.permute.xlu0 %216
        %v218 = vrot.slane %v215, 4
        %v219 = vrot.slane %v217, 4
        %v220 = vsel %vm205, %v218, %v219
        %vm221 = vcmask 1031168
        %v222 = vsel %vm221, %v215, %v220
        %v223 = vsel %vm221, %v217, %v219
        %226 = vst [vmem:[#allocation2 + $0xc] sm:$0x33] %v222
        %227 = vst [vmem:[#allocation2 + $0x14] sm:$0x3] %v223
        %228 = vrot.lane.b32.xlu0 %v198, 110
        %v229 = vpop.permute.xlu0 %228
        %230 = vrot.lane.b32.xlu0 %v179, 110
        %v231 = vpop.permute.xlu0 %230
        %v232 = vrot.slane %v229, 4
        %v233 = vrot.slane %v231, 4
        %v234 = vsel %vm205, %v232, %v233
        %vm235 = vcmask 900096
        %v236 = vsel %vm235, %v229, %v234
        %v237 = vsel %vm235, %v231, %v233
        %240 = vst [vmem:[#allocation2 + $0xc] sm:$0xcc] %v236
        %241 = vst [vmem:[#allocation2 + $0x14] sm:$0xc] %v237
        %242 = vrot.lane.b32.xlu0 %v179, 109
        %v243 = vpop.permute.xlu0 %242
        %244 = vrot.lane.b32.xlu0 %v186, 109
        %v245 = vpop.permute.xlu0 %244
        %v246 = vrot.slane %v243, 4
        %v247 = vrot.slane %v245, 4
        %v248 = vsel %vm205, %v246, %v247
        %vm249 = vcmask 891904
        %v250 = vsel %vm249, %v243, %v248
        %v251 = vsel %vm249, %v245, %v247
        %254 = vst [vmem:[#allocation2 + $0x18] sm:$0x33] %v250
        %255 = vst [vmem:[#allocation2 + $0x20] sm:$0x3] %v251
        %256 = vrot.lane.b32.xlu0 %v198, 108
        %v257 = vpop.permute.xlu0 %256
        %258 = vrot.lane.b32.xlu0 %v179, 108
        %v259 = vpop.permute.xlu0 %258
        %v260 = vrot.slane %v257, 4
        %v261 = vrot.slane %v259, 4
        %v262 = vsel %vm205, %v260, %v261
        %vm263 = vcmask 883712
        %v264 = vsel %vm263, %v257, %v262
        %v265 = vsel %vm263, %v259, %v261
        %268 = vst [vmem:[#allocation2 + $0x18] sm:$0xcc] %v264
        %269 = vst [vmem:[#allocation2 + $0x20] sm:$0xc] %v265
        %270 = vrot.lane.b32.xlu0 %v179, 92
        %v271 = vpop.permute.xlu0 %270
        %272 = vrot.lane.b32.xlu0 %v186, 92
        %v273 = vpop.permute.xlu0 %272
        %v274 = vrot.slane %v271, 4
        %v275 = vrot.slane %v273, 4
        %v276 = vsel %vm205, %v274, %v275
        %vm277 = vcmask 752640
        %v278 = vsel %vm277, %v271, %v276
        %v279 = vsel %vm277, %v273, %v275
        %282 = vst [vmem:[#allocation2 + $0x24] sm:$0x33] %v278
        %283 = vst [vmem:[#allocation2 + $0x2c] sm:$0x3] %v279
        %284 = vrot.lane.b32.xlu0 %v198, 91
        %v285 = vpop.permute.xlu0 %284
        %286 = vrot.lane.b32.xlu0 %v179, 91
        %v287 = vpop.permute.xlu0 %286
        %v288 = vrot.slane %v285, 4
        %v289 = vrot.slane %v287, 4
        %v290 = vsel %vm205, %v288, %v289
        %vm291 = vcmask 744448
        %v292 = vsel %vm291, %v285, %v290
        %v293 = vsel %vm291, %v287, %v289
        %296 = vst [vmem:[#allocation2 + $0x24] sm:$0xcc] %v292
        %297 = vst [vmem:[#allocation2 + $0x2c] sm:$0xc] %v293
        %298 = vrot.lane.b32.xlu0 %v179, 90
        %v299 = vpop.permute.xlu0 %298
        %300 = vrot.lane.b32.xlu0 %v186, 90
        %v301 = vpop.permute.xlu0 %300
        %v302 = vrot.slane %v299, 4
        %v303 = vrot.slane %v301, 4
        %v304 = vsel %vm205, %v302, %v303
        %vm305 = vcmask 736256
        %v306 = vsel %vm305, %v299, %v304
        %v307 = vsel %vm305, %v301, %v303
        %310 = vst [vmem:[#allocation2 + $0x30] sm:$0x33] %v306
        %311 = vst [vmem:[#allocation2 + $0x38] sm:$0x3] %v307
        %v312 = vld [vmem:[%s1] sm:$0xf]
        %v313 = vld [vmem:[%s1 + $0x4] sm:$0xf]
        %v314 = vld [vmem:[%s1 + $0x8] sm:$0xf]
        %v315 = vld [vmem:[%s1 + $0xc] sm:$0xf]
        %v316 = vld [vmem:[#allocation2] sm:$0xff]
        %v317 = vld [vmem:[#allocation2 + $0x8] sm:$0xf]
        %v318 = vld [vmem:[#allocation2 + $0xc] sm:$0xff]
        %v319 = vld [vmem:[#allocation2 + $0x14] sm:$0xf]
        %v320 = vld [vmem:[#allocation2 + $0x18] sm:$0xff]
        %v321 = vld [vmem:[#allocation2 + $0x20] sm:$0xf]
        %v322 = vld [vmem:[#allocation2 + $0x24] sm:$0xff]
        %v323 = vld [vmem:[#allocation2 + $0x2c] sm:$0xf]
        %v324 = vld [vmem:[#allocation2 + $0x30] sm:$0x33]
        %v325 = vld [vmem:[#allocation2 + $0x38] sm:$0x3]
        %v326 = vld [vmem:[%s2] sm:$0xff]
        %v327 = vld [vmem:[%s2 + $0x8] sm:$0xff]
        %v328 = vld [vmem:[%s2 + $0x10] sm:$0xff]
        %v329 = vld [vmem:[%s2 + $0x18] sm:$0xff]
        %331 = vset.pattern.permute.xlu0 0
        %332 = vperm.xlu0 %331, %v326
        %v333 = vpop.permute.xlu0 %332
        %336 = vset.pattern.permute.xlu0 0
        %337 = vperm.xlu0 %336, %v327
        %v338 = vpop.permute.xlu0 %337
        %341 = vset.pattern.permute.xlu0 0
        %342 = vperm.xlu0 %341, %v328
        %v343 = vpop.permute.xlu0 %342
        %346 = vset.pattern.permute.xlu0 0
        %347 = vperm.xlu0 %346, %v329
        %v348 = vpop.permute.xlu0 %347
        %v354 = vunpack.c.l.b16 %v312
        %v355 = vunpack.c.l.b16 %v313
        %v356 = vunpack.c.l.b16 %v314
        %v357 = vunpack.c.l.b16 %v315
        %v358 = vpack.c.b16 %v355, %v354
        %v359 = vpack.c.b16 %v357, %v356
        %v370 = vunpack.c.l.b16 %v316
        %v371 = vunpack.c.h.b16 %v316
        %v372 = vunpack.c.l.b16 %v317
        %v373 = vunpack.c.l.b16 %v318
        %v374 = vunpack.c.h.b16 %v318
        %v375 = vunpack.c.l.b16 %v319
        %v376 = vunpack.c.l.b16 %v320
        %v377 = vunpack.c.h.b16 %v320
        %v378 = vunpack.c.l.b16 %v321
        %v379 = vunpack.c.l.b16 %v322
        %v380 = vunpack.c.h.b16 %v322
        %v381 = vunpack.c.l.b16 %v323
        %v382 = vunpack.c.l.b16 %v324
        %v383 = vunpack.c.h.b16 %v324
        %v384 = vunpack.c.l.b16 %v325
        %v385 = vpack.c.b16 %v373, %v370
        %v386 = vpack.c.b16 %v374, %v371
        %v387 = vpack.c.b16 %v375, %v372
        %v388 = vpack.c.b16 %v379, %v376
        %v389 = vpack.c.b16 %v380, %v377
        %v390 = vpack.c.b16 %v381, %v378
        %v391 = vpack.c.b16 %v382, %v382
        %v392 = vpack.c.b16 %v383, %v383
        %v393 = vpack.c.b16 %v384, %v384
        %vm400 = vcmask 293888
        %v402 = vsel %vm400, %v358, 0
        %v405 = vsel %vm400, %v359, 0
        %vm407 = vcmask 1041408
        %v409 = vsel %vm407, %v391, 0
        %v412 = vsel %vm407, %v392, 0
        %v415 = vsel %vm407, %v393, 0
        %417 = vmatprep.subr.bf16.mxu0 %v386
        %418 = vmatpush1.bf16.msra.mxu0 %v385
        %419 = vmatprep.subr.bf16.mxu0 %v389
        %420 = vmatpush1.bf16.msra.mxu0 %v388
        %421 = vmatprep.subr.bf16.mxu0 %v412
        %422 = vmatpush1.bf16.msra.mxu0 %v409
        %423 = vmatprep.subr.bf16.mxu0 0
        %424 = vmatpush1.bf16.msra.mxu0 0
        %425 = vmatprep.subr.bf16.mxu0 0
        %426 = vmatpush1.bf16.msra.mxu0 0
        %427 = vmatprep.subr.bf16.mxu0 0
        %428 = vmatpush1.bf16.msra.mxu0 0
        %429 = vmatprep.subr.bf16.mxu0 0
        %430 = vmatpush1.bf16.msra.mxu0 0
        %431 = vmatprep.subr.bf16.mxu0 0
        %432 = vmatpush1.bf16.msra.mxu0 0
        %433 = vmatprep.subr.bf16.mxu0 0
        %434 = vmatpush1.bf16.msra.mxu0 0
        %435 = vmatprep.subr.bf16.mxu0 0
        %436 = vmatpush1.bf16.msra.mxu0 0
        %437 = vmatprep.subr.bf16.mxu0 0
        %438 = vmatpush1.bf16.msra.mxu0 0
        %439 = vmatprep.subr.bf16.mxu0 0
        %440 = vmatpush1.bf16.msra.mxu0 0
        %441 = vmatprep.subr.bf16.mxu0 0
        %442 = vmatpush1.bf16.msra.mxu0 0
        %443 = vmatprep.subr.bf16.mxu0 0
        %444 = vmatpush1.bf16.msra.mxu0 0
        %445 = vmatprep.subr.bf16.mxu0 0
        %446 = vmatpush1.bf16.msra.mxu0 0
        %447 = vmatprep.subr.bf16.mxu0 0
        %448 = vmatpush1.bf16.msra.mxu0 0
        %449 = vmatprep.mubr.bf16.mxu0 0
        %450 = vmatmul.mubr.bf16.gmra.mrb[0].mxu0 %v402
        %v451 = vpop.f32.mrb[0].mxu0
        %v452 = vadd.f32 %v333, %v451
        %v453 = vpop.f32.mrb[0].mxu0
        %v454 = vadd.f32 %v333, %v453
        %v455 = vpop.f32.mrb[0].mxu0
        %v456 = vadd.f32 %v338, %v455
        %v457 = vpop.f32.mrb[0].mxu0
        %v458 = vadd.f32 %v338, %v457
        %459 = vmatprep.mubr.bf16.mxu0 0
        %460 = vmatmul.mubr.bf16.gmra.mrb[0].mxu0 %v405
        %v461 = vpop.f32.mrb[0].mxu0
        %v462 = vadd.f32 %v343, %v461
        %v463 = vpop.f32.mrb[0].mxu0
        %v464 = vadd.f32 %v343, %v463
        %v465 = vpop.f32.mrb[0].mxu0
        %v466 = vadd.f32 %v348, %v465
        %v467 = vpop.f32.mrb[0].mxu0
        %v468 = vadd.f32 %v348, %v467
        %469 = vdwg.mxu0
        %470 = vmatprep.subr.bf16.mxu0 0
        %471 = vmatpush1.bf16.msra.mxu0 %v387
        %472 = vmatprep.subr.bf16.mxu0 0
        %473 = vmatpush1.bf16.msra.mxu0 %v390
        %474 = vmatprep.subr.bf16.mxu0 0
        %475 = vmatpush1.bf16.msra.mxu0 %v415
        %476 = vmatprep.subr.bf16.mxu0 0
        %477 = vmatpush1.bf16.msra.mxu0 0
        %478 = vmatprep.subr.bf16.mxu0 0
        %479 = vmatpush1.bf16.msra.mxu0 0
        %480 = vmatprep.subr.bf16.mxu0 0
        %481 = vmatpush1.bf16.msra.mxu0 0
        %482 = vmatprep.subr.bf16.mxu0 0
        %483 = vmatpush1.bf16.msra.mxu0 0
        %484 = vmatprep.subr.bf16.mxu0 0
        %485 = vmatpush1.bf16.msra.mxu0 0
        %486 = vmatprep.subr.bf16.mxu0 0
        %487 = vmatpush1.bf16.msra.mxu0 0
        %488 = vmatprep.subr.bf16.mxu0 0
        %489 = vmatpush1.bf16.msra.mxu0 0
        %490 = vmatprep.subr.bf16.mxu0 0
        %491 = vmatpush1.bf16.msra.mxu0 0
        %492 = vmatprep.subr.bf16.mxu0 0
        %493 = vmatpush1.bf16.msra.mxu0 0
        %494 = vmatprep.subr.bf16.mxu0 0
        %495 = vmatpush1.bf16.msra.mxu0 0
        %496 = vmatprep.subr.bf16.mxu0 0
        %497 = vmatpush1.bf16.msra.mxu0 0
        %498 = vmatprep.subr.bf16.mxu0 0
        %499 = vmatpush1.bf16.msra.mxu0 0
        %500 = vmatprep.subr.bf16.mxu0 0
        %501 = vmatpush1.bf16.msra.mxu0 0
        %502 = vmatprep.mubr.bf16.mxu0 0
        %503 = vmatmul.mubr.bf16.gmra.mrb[0].mxu0 %v402
        %v504 = vpop.f32.mrb[0].mxu0
        %v505 = vadd.f32 %v333, %v504
        %v506 = vpop.f32.mrb[0].mxu0
        %v507 = vpop.f32.mrb[0].mxu0
        %v508 = vadd.f32 %v338, %v507
        %v509 = vpop.f32.mrb[0].mxu0
        %510 = vmatprep.mubr.bf16.mxu0 0
        %511 = vmatmul.mubr.bf16.gmra.mrb[0].mxu0 %v405
        %v512 = vpop.f32.mrb[0].mxu0
        %v513 = vadd.f32 %v343, %v512
        %v514 = vpop.f32.mrb[0].mxu0
        %v515 = vpop.f32.mrb[0].mxu0
        %v516 = vadd.f32 %v348, %v515
        %v517 = vpop.f32.mrb[0].mxu0
        %518 = vdwg.mxu0
        %v519 = vld [vmem:[#allocation2 + $0x18] sm:$0x33]
        %v520 = vld [vmem:[#allocation2 + $0x20] sm:$0x3]
        %521 = vst [vmem:[#allocation3 + $0x30] sm:$0x33] %v519
        %522 = vst [vmem:[#allocation3 + $0x38] sm:$0x3] %v520
        %vm523 = vcmp.gt.f32.partialorder %v452, 0.0
        %vm524 = vcmp.gt.f32.partialorder %v454, 0.0
        %vm525 = vcmp.gt.f32.partialorder %v505, 0.0
        %vm526 = vcmp.gt.f32.partialorder %v456, 0.0
        %vm527 = vcmp.gt.f32.partialorder %v458, 0.0
        %vm528 = vcmp.gt.f32.partialorder %v508, 0.0
        %vm529 = vcmp.gt.f32.partialorder %v462, 0.0
        %vm530 = vcmp.gt.f32.partialorder %v464, 0.0
        %vm531 = vcmp.gt.f32.partialorder %v513, 0.0
        %vm532 = vcmp.gt.f32.partialorder %v466, 0.0
        %vm533 = vcmp.gt.f32.partialorder %v468, 0.0
        %vm534 = vcmp.gt.f32.partialorder %v516, 0.0
        %v535 = vmin.f32 %v452, 0.0
        %v536 = vmin.f32 %v454, 0.0
        %v537 = vmin.f32 %v505, 0.0
        %v538 = vmin.f32 %v456, 0.0
        %v539 = vmin.f32 %v458, 0.0
        %v540 = vmin.f32 %v508, 0.0
        %v541 = vmin.f32 %v462, 0.0
        %v542 = vmin.f32 %v464, 0.0
        %v543 = vmin.f32 %v513, 0.0
        %v544 = vmin.f32 %v466, 0.0
        %v545 = vmin.f32 %v468, 0.0
        %v546 = vmin.f32 %v516, 0.0
        %v547 = vmul.f32 %v535, 1.442695
        %v548 = vpow.pop %v547
        %v549 = vmul.f32 %v536, 1.442695
        %v550 = vpow.pop %v549
        %v551 = vmul.f32 %v537, 1.442695
        %v552 = vpow.pop %v551
        %v553 = vmul.f32 %v538, 1.442695
        %v554 = vpow.pop %v553
        %v555 = vmul.f32 %v539, 1.442695
        %v556 = vpow.pop %v555
        %v557 = vmul.f32 %v540, 1.442695
        %v558 = vpow.pop %v557
        %v559 = vmul.f32 %v541, 1.442695
        %v560 = vpow.pop %v559
        %v561 = vmul.f32 %v542, 1.442695
        %v562 = vpow.pop %v561
        %v563 = vmul.f32 %v543, 1.442695
        %v564 = vpow.pop %v563
        %v565 = vmul.f32 %v544, 1.442695
        %v566 = vpow.pop %v565
        %v567 = vmul.f32 %v545, 1.442695
        %v568 = vpow.pop %v567
        %v569 = vmul.f32 %v546, 1.442695
        %v570 = vpow.pop %v569
        %v571 = vsub.f32 %v548, 1.0
        %v572 = vsub.f32 %v550, 1.0
        %v573 = vsub.f32 %v552, 1.0
        %v574 = vsub.f32 %v554, 1.0
        %v575 = vsub.f32 %v556, 1.0
        %v576 = vsub.f32 %v558, 1.0
        %v577 = vsub.f32 %v560, 1.0
        %v578 = vsub.f32 %v562, 1.0
        %v579 = vsub.f32 %v564, 1.0
        %v580 = vsub.f32 %v566, 1.0
        %v581 = vsub.f32 %v568, 1.0
        %v582 = vsub.f32 %v570, 1.0
        %v583 = vsel %vm523, %v452, %v571
        %v584 = vsel %vm524, %v454, %v572
        %v585 = vsel %vm525, %v505, %v573
        %v586 = vsel %vm526, %v456, %v574
        %v587 = vsel %vm527, %v458, %v575
        %v588 = vsel %vm528, %v508, %v576
        %v589 = vsel %vm529, %v462, %v577
        %v590 = vsel %vm530, %v464, %v578
        %v591 = vsel %vm531, %v513, %v579
        %v592 = vsel %vm532, %v466, %v580
        %v593 = vsel %vm533, %v468, %v581
        %v594 = vsel %vm534, %v516, %v582
        %v595 = vpack.c.bf16 %v586, %v583
        %v596 = vpack.c.bf16 %v587, %v584
        %v597 = vpack.c.bf16 %v588, %v585
        %v598 = vpack.c.bf16 %v592, %v589
        %v599 = vpack.c.bf16 %v593, %v590
        %v600 = vpack.c.bf16 %v594, %v591
        %v607 = vunpack.c.l.b16 %v595
        %v608 = vunpack.c.l.b16 %v596
        %v609 = vunpack.c.l.b16 %v597
        %v610 = vunpack.c.h.b16 %v595
        %v611 = vunpack.c.h.b16 %v596
        %v612 = vunpack.c.h.b16 %v597
        %v613 = vunpack.c.l.b16 %v598
        %v614 = vunpack.c.l.b16 %v599
        %v615 = vunpack.c.l.b16 %v600
        %v616 = vunpack.c.h.b16 %v598
        %v617 = vunpack.c.h.b16 %v599
        %v618 = vunpack.c.h.b16 %v600
        %v619 = vpack.c.b16 %v608, %v607
        %v620 = vpack.c.b16 %v609, %v609
        %v621 = vpack.c.b16 %v611, %v610
        %v622 = vpack.c.b16 %v612, %v612
        %v623 = vpack.c.b16 %v614, %v613
        %v624 = vpack.c.b16 %v615, %v615
        %v625 = vpack.c.b16 %v617, %v616
        %v626 = vpack.c.b16 %v618, %v618
        %635 = vst [vmem:[#allocation3] sm:$0xff] %v619
        %636 = vst [vmem:[#allocation3 + $0x8] sm:$0xf] %v620
        %637 = vst [vmem:[#allocation3 + $0xc] sm:$0xff] %v621
        %638 = vst [vmem:[#allocation3 + $0x14] sm:$0xf] %v622
        %639 = vst [vmem:[#allocation3 + $0x18] sm:$0xff] %v623
        %640 = vst [vmem:[#allocation3 + $0x20] sm:$0xf] %v624
        %641 = vst [vmem:[#allocation3 + $0x24] sm:$0xff] %v625
        %642 = vst [vmem:[#allocation3 + $0x2c] sm:$0xf] %v626
        %v643 = vld [vmem:[%s1 + $0x10] sm:$0xf]
        %v644 = vld [vmem:[%s1 + $0x14] sm:$0xf]
        %v645 = vld [vmem:[%s1 + $0x18] sm:$0xf]
        %v646 = vld [vmem:[%s1 + $0x1c] sm:$0xf]
        %v647 = vld [vmem:[#allocation3] sm:$0xff]
        %v648 = vld [vmem:[#allocation3 + $0x8] sm:$0xf]
        %v649 = vld [vmem:[#allocation3 + $0xc] sm:$0xff]
        %v650 = vld [vmem:[#allocation3 + $0x14] sm:$0xf]
        %v651 = vld [vmem:[#allocation3 + $0x18] sm:$0xff]
        %v652 = vld [vmem:[#allocation3 + $0x20] sm:$0xf]
        %v653 = vld [vmem:[#allocation3 + $0x24] sm:$0xff]
        %v654 = vld [vmem:[#allocation3 + $0x2c] sm:$0xf]
        %v655 = vld [vmem:[#allocation3 + $0x30] sm:$0x33]
        %v656 = vld [vmem:[#allocation3 + $0x38] sm:$0x3]
        %v657 = vld [vmem:[%s2 + $0x20] sm:$0xff]
        %v658 = vld [vmem:[%s2 + $0x28] sm:$0xff]
        %v659 = vld [vmem:[%s2 + $0x30] sm:$0xff]
        %v660 = vld [vmem:[%s2 + $0x38] sm:$0xff]
        %662 = vset.pattern.permute.xlu0 0
        %663 = vperm.xlu0 %662, %v657
        %v664 = vpop.permute.xlu0 %663
        %667 = vset.pattern.permute.xlu0 0
        %668 = vperm.xlu0 %667, %v658
        %v669 = vpop.permute.xlu0 %668
        %672 = vset.pattern.permute.xlu0 0
        %673 = vperm.xlu0 %672, %v659
        %v674 = vpop.permute.xlu0 %673
        %677 = vset.pattern.permute.xlu0 0
        %678 = vperm.xlu0 %677, %v660
        %v679 = vpop.permute.xlu0 %678
        %v685 = vunpack.c.l.b16 %v643
        %v686 = vunpack.c.l.b16 %v644
        %v687 = vunpack.c.l.b16 %v645
        %v688 = vunpack.c.l.b16 %v646
        %v689 = vpack.c.b16 %v686, %v685
        %v690 = vpack.c.b16 %v688, %v687
        %v701 = vunpack.c.l.b16 %v647
        %v702 = vunpack.c.h.b16 %v647
        %v703 = vunpack.c.l.b16 %v648
        %v704 = vunpack.c.l.b16 %v649
        %v705 = vunpack.c.h.b16 %v649
        %v706 = vunpack.c.l.b16 %v650
        %v707 = vunpack.c.l.b16 %v651
        %v708 = vunpack.c.h.b16 %v651
        %v709 = vunpack.c.l.b16 %v652
        %v710 = vunpack.c.l.b16 %v653
        %v711 = vunpack.c.h.b16 %v653
        %v712 = vunpack.c.l.b16 %v654
        %v713 = vunpack.c.l.b16 %v655
        %v714 = vunpack.c.h.b16 %v655
        %v715 = vunpack.c.l.b16 %v656
        %v716 = vpack.c.b16 %v704, %v701
        %v717 = vpack.c.b16 %v705, %v702
        %v718 = vpack.c.b16 %v706, %v703
        %v719 = vpack.c.b16 %v710, %v707
        %v720 = vpack.c.b16 %v711, %v708
        %v721 = vpack.c.b16 %v712, %v709
        %v722 = vpack.c.b16 %v713, %v713
        %v723 = vpack.c.b16 %v714, %v714
        %v724 = vpack.c.b16 %v715, %v715
        %v732 = vsel %vm400, %v689, 0
        %v735 = vsel %vm400, %v690, 0
        %v738 = vsel %vm407, %v722, 0
        %v741 = vsel %vm407, %v723, 0
        %v744 = vsel %vm407, %v724, 0
        %746 = vmatprep.subr.bf16.mxu0 %v717
        %747 = vmatpush1.bf16.msra.mxu0 %v716
        %748 = vmatprep.subr.bf16.mxu0 %v720
        %749 = vmatpush1.bf16.msra.mxu0 %v719
        %750 = vmatprep.subr.bf16.mxu0 %v741
        %751 = vmatpush1.bf16.msra.mxu0 %v738
        %752 = vmatprep.subr.bf16.mxu0 0
        %753 = vmatpush1.bf16.msra.mxu0 0
        %754 = vmatprep.subr.bf16.mxu0 0
        %755 = vmatpush1.bf16.msra.mxu0 0
        %756 = vmatprep.subr.bf16.mxu0 0
        %757 = vmatpush1.bf16.msra.mxu0 0
        %758 = vmatprep.subr.bf16.mxu0 0
        %759 = vmatpush1.bf16.msra.mxu0 0
        %760 = vmatprep.subr.bf16.mxu0 0
        %761 = vmatpush1.bf16.msra.mxu0 0
        %762 = vmatprep.subr.bf16.mxu0 0
        %763 = vmatpush1.bf16.msra.mxu0 0
        %764 = vmatprep.subr.bf16.mxu0 0
        %765 = vmatpush1.bf16.msra.mxu0 0
        %766 = vmatprep.subr.bf16.mxu0 0
        %767 = vmatpush1.bf16.msra.mxu0 0
        %768 = vmatprep.subr.bf16.mxu0 0
        %769 = vmatpush1.bf16.msra.mxu0 0
        %770 = vmatprep.subr.bf16.mxu0 0
        %771 = vmatpush1.bf16.msra.mxu0 0
        %772 = vmatprep.subr.bf16.mxu0 0
        %773 = vmatpush1.bf16.msra.mxu0 0
        %774 = vmatprep.subr.bf16.mxu0 0
        %775 = vmatpush1.bf16.msra.mxu0 0
        %776 = vmatprep.subr.bf16.mxu0 0
        %777 = vmatpush1.bf16.msra.mxu0 0
        %778 = vmatprep.mubr.bf16.mxu0 0
        %779 = vmatmul.mubr.bf16.gmra.mrb[0].mxu0 %v732
        %v780 = vpop.f32.mrb[0].mxu0
        %v781 = vadd.f32 %v664, %v780
        %v782 = vpop.f32.mrb[0].mxu0
        %v783 = vadd.f32 %v664, %v782
        %v784 = vpop.f32.mrb[0].mxu0
        %v785 = vadd.f32 %v669, %v784
        %v786 = vpop.f32.mrb[0].mxu0
        %v787 = vadd.f32 %v669, %v786
        %788 = vmatprep.mubr.bf16.mxu0 0
        %789 = vmatmul.mubr.bf16.gmra.mrb[0].mxu0 %v735
        %v790 = vpop.f32.mrb[0].mxu0
        %v791 = vadd.f32 %v674, %v790
        %v792 = vpop.f32.mrb[0].mxu0
        %v793 = vadd.f32 %v674, %v792
        %v794 = vpop.f32.mrb[0].mxu0
        %v795 = vadd.f32 %v679, %v794
        %v796 = vpop.f32.mrb[0].mxu0
        %v797 = vadd.f32 %v679, %v796
        %798 = vdwg.mxu0
        %799 = vmatprep.subr.bf16.mxu0 0
        %800 = vmatpush1.bf16.msra.mxu0 %v718
        %801 = vmatprep.subr.bf16.mxu0 0
        %802 = vmatpush1.bf16.msra.mxu0 %v721
        %803 = vmatprep.subr.bf16.mxu0 0
        %804 = vmatpush1.bf16.msra.mxu0 %v744
        %805 = vmatprep.subr.bf16.mxu0 0
        %806 = vmatpush1.bf16.msra.mxu0 0
        %807 = vmatprep.subr.bf16.mxu0 0
        %808 = vmatpush1.bf16.msra.mxu0 0
        %809 = vmatprep.subr.bf16.mxu0 0
        %810 = vmatpush1.bf16.msra.mxu0 0
        %811 = vmatprep.subr.bf16.mxu0 0
        %812 = vmatpush1.bf16.msra.mxu0 0
        %813 = vmatprep.subr.bf16.mxu0 0
        %814 = vmatpush1.bf16.msra.mxu0 0
        %815 = vmatprep.subr.bf16.mxu0 0
        %816 = vmatpush1.bf16.msra.mxu0 0
        %817 = vmatprep.subr.bf16.mxu0 0
        %818 = vmatpush1.bf16.msra.mxu0 0
        %819 = vmatprep.subr.bf16.mxu0 0
        %820 = vmatpush1.bf16.msra.mxu0 0
        %821 = vmatprep.subr.bf16.mxu0 0
        %822 = vmatpush1.bf16.msra.mxu0 0
        %823 = vmatprep.subr.bf16.mxu0 0
        %824 = vmatpush1.bf16.msra.mxu0 0
        %825 = vmatprep.subr.bf16.mxu0 0
        %826 = vmatpush1.bf16.msra.mxu0 0
        %827 = vmatprep.subr.bf16.mxu0 0
        %828 = vmatpush1.bf16.msra.mxu0 0
        %829 = vmatprep.subr.bf16.mxu0 0
        %830 = vmatpush1.bf16.msra.mxu0 0
        %831 = vmatprep.mubr.bf16.mxu0 0
        %832 = vmatmul.mubr.bf16.gmra.mrb[0].mxu0 %v732
        %v833 = vpop.f32.mrb[0].mxu0
        %v834 = vadd.f32 %v664, %v833
        %v835 = vpop.f32.mrb[0].mxu0
        %v836 = vpop.f32.mrb[0].mxu0
        %v837 = vadd.f32 %v669, %v836
        %v838 = vpop.f32.mrb[0].mxu0
        %839 = vmatprep.mubr.bf16.mxu0 0
        %840 = vmatmul.mubr.bf16.gmra.mrb[0].mxu0 %v735
        %v841 = vpop.f32.mrb[0].mxu0
        %v842 = vadd.f32 %v674, %v841
        %v843 = vpop.f32.mrb[0].mxu0
        %v844 = vpop.f32.mrb[0].mxu0
        %v845 = vadd.f32 %v679, %v844
        %v846 = vpop.f32.mrb[0].mxu0
        %847 = vdwg.mxu0
        %vm848 = vcmp.gt.f32.partialorder %v781, 0.0
        %vm849 = vcmp.gt.f32.partialorder %v783, 0.0
        %vm850 = vcmp.gt.f32.partialorder %v834, 0.0
        %vm851 = vcmp.gt.f32.partialorder %v785, 0.0
        %vm852 = vcmp.gt.f32.partialorder %v787, 0.0
        %vm853 = vcmp.gt.f32.partialorder %v837, 0.0
        %vm854 = vcmp.gt.f32.partialorder %v791, 0.0
        %vm855 = vcmp.gt.f32.partialorder %v793, 0.0
        %vm856 = vcmp.gt.f32.partialorder %v842, 0.0
        %vm857 = vcmp.gt.f32.partialorder %v795, 0.0
        %vm858 = vcmp.gt.f32.partialorder %v797, 0.0
        %vm859 = vcmp.gt.f32.partialorder %v845, 0.0
        %v860 = vmin.f32 %v781, 0.0
        %v861 = vmin.f32 %v783, 0.0
        %v862 = vmin.f32 %v834, 0.0
        %v863 = vmin.f32 %v785, 0.0
        %v864 = vmin.f32 %v787, 0.0
        %v865 = vmin.f32 %v837, 0.0
        %v866 = vmin.f32 %v791, 0.0
        %v867 = vmin.f32 %v793, 0.0
        %v868 = vmin.f32 %v842, 0.0
        %v869 = vmin.f32 %v795, 0.0
        %v870 = vmin.f32 %v797, 0.0
        %v871 = vmin.f32 %v845, 0.0
        %v872 = vmul.f32 %v860, 1.442695
        %v873 = vpow.pop %v872
        %v874 = vmul.f32 %v861, 1.442695
        %v875 = vpow.pop %v874
        %v876 = vmul.f32 %v862, 1.442695
        %v877 = vpow.pop %v876
        %v878 = vmul.f32 %v863, 1.442695
        %v879 = vpow.pop %v878
        %v880 = vmul.f32 %v864, 1.442695
        %v881 = vpow.pop %v880
        %v882 = vmul.f32 %v865, 1.442695
        %v883 = vpow.pop %v882
        %v884 = vmul.f32 %v866, 1.442695
        %v885 = vpow.pop %v884
        %v886 = vmul.f32 %v867, 1.442695
        %v887 = vpow.pop %v886
        %v888 = vmul.f32 %v868, 1.442695
        %v889 = vpow.pop %v888
        %v890 = vmul.f32 %v869, 1.442695
        %v891 = vpow.pop %v890
        %v892 = vmul.f32 %v870, 1.442695
        %v893 = vpow.pop %v892
        %v894 = vmul.f32 %v871, 1.442695
        %v895 = vpow.pop %v894
        %v896 = vsub.f32 %v873, 1.0
        %v897 = vsub.f32 %v875, 1.0
        %v898 = vsub.f32 %v877, 1.0
        %v899 = vsub.f32 %v879, 1.0
        %v900 = vsub.f32 %v881, 1.0
        %v901 = vsub.f32 %v883, 1.0
        %v902 = vsub.f32 %v885, 1.0
        %v903 = vsub.f32 %v887, 1.0
        %v904 = vsub.f32 %v889, 1.0
        %v905 = vsub.f32 %v891, 1.0
        %v906 = vsub.f32 %v893, 1.0
        %v907 = vsub.f32 %v895, 1.0
        %v908 = vsel %vm848, %v781, %v896
        %v909 = vsel %vm849, %v783, %v897
        %v910 = vsel %vm850, %v834, %v898
        %v911 = vsel %vm851, %v785, %v899
        %v912 = vsel %vm852, %v787, %v900
        %v913 = vsel %vm853, %v837, %v901
        %v914 = vsel %vm854, %v791, %v902
        %v915 = vsel %vm855, %v793, %v903
        %v916 = vsel %vm856, %v842, %v904
        %v917 = vsel %vm857, %v795, %v905
        %v918 = vsel %vm858, %v797, %v906
        %v919 = vsel %vm859, %v845, %v907
        %v920 = vpack.c.bf16 %v911, %v908
        %v921 = vpack.c.bf16 %v912, %v909
        %v922 = vpack.c.bf16 %v913, %v910
        %v923 = vpack.c.bf16 %v917, %v914
        %v924 = vpack.c.bf16 %v918, %v915
        %v925 = vpack.c.bf16 %v919, %v916
        %v932 = vunpack.c.l.b16 %v920
        %v933 = vunpack.c.l.b16 %v921
        %v934 = vunpack.c.l.b16 %v922
        %v935 = vunpack.c.h.b16 %v920
        %v936 = vunpack.c.h.b16 %v921
        %v937 = vunpack.c.h.b16 %v922
        %v938 = vunpack.c.l.b16 %v923
        %v939 = vunpack.c.l.b16 %v924
        %v940 = vunpack.c.l.b16 %v925
        %v941 = vunpack.c.h.b16 %v923
        %v942 = vunpack.c.h.b16 %v924
        %v943 = vunpack.c.h.b16 %v925
        %v944 = vpack.c.b16 %v933, %v932
        %v945 = vpack.c.b16 %v934, %v934
        %v946 = vpack.c.b16 %v936, %v935
        %v947 = vpack.c.b16 %v937, %v937
        %v948 = vpack.c.b16 %v939, %v938
        %v949 = vpack.c.b16 %v940, %v940
        %v950 = vpack.c.b16 %v942, %v941
        %v951 = vpack.c.b16 %v943, %v943
        %960 = vst [vmem:[#allocation3] sm:$0xff] %v944
        %961 = vst [vmem:[#allocation3 + $0x8] sm:$0xf] %v945
        %962 = vst [vmem:[#allocation3 + $0xc] sm:$0xff] %v946
        %963 = vst [vmem:[#allocation3 + $0x14] sm:$0xf] %v947
        %964 = vst [vmem:[#allocation3 + $0x18] sm:$0xff] %v948
        %965 = vst [vmem:[#allocation3 + $0x20] sm:$0xf] %v949
        %966 = vst [vmem:[#allocation3 + $0x24] sm:$0xff] %v950
        %967 = vst [vmem:[#allocation3 + $0x2c] sm:$0xf] %v951
        %v968 = vld [vmem:[%s1 + $0x20] sm:$0xf]
        %v969 = vld [vmem:[%s1 + $0x24] sm:$0xf]
        %v970 = vld [vmem:[%s1 + $0x28] sm:$0xf]
        %v971 = vld [vmem:[%s1 + $0x2c] sm:$0xf]
        %v972 = vld [vmem:[#allocation3] sm:$0xff]
        %v973 = vld [vmem:[#allocation3 + $0x8] sm:$0xf]
        %v974 = vld [vmem:[#allocation3 + $0xc] sm:$0xff]
        %v975 = vld [vmem:[#allocation3 + $0x14] sm:$0xf]
        %v976 = vld [vmem:[#allocation3 + $0x18] sm:$0xff]
        %v977 = vld [vmem:[#allocation3 + $0x20] sm:$0xf]
        %v978 = vld [vmem:[#allocation3 + $0x24] sm:$0xff]
        %v979 = vld [vmem:[#allocation3 + $0x2c] sm:$0xf]
        %v980 = vld [vmem:[#allocation3 + $0x30] sm:$0x33]
        %v981 = vld [vmem:[#allocation3 + $0x38] sm:$0x3]
        %v982 = vld [vmem:[%s2 + $0x40] sm:$0xff]
        %v983 = vld [vmem:[%s2 + $0x48] sm:$0xff]
        %v984 = vld [vmem:[%s2 + $0x50] sm:$0xff]
        %v985 = vld [vmem:[%s2 + $0x58] sm:$0xff]
        %987 = vset.pattern.permute.xlu0 0
        %988 = vperm.xlu0 %987, %v982
        %v989 = vpop.permute.xlu0 %988
        %992 = vset.pattern.permute.xlu0 0
        %993 = vperm.xlu0 %992, %v983
        %v994 = vpop.permute.xlu0 %993
        %997 = vset.pattern.permute.xlu0 0
        %998 = vperm.xlu0 %997, %v984
        %v999 = vpop.permute.xlu0 %998
        %1002 = vset.pattern.permute.xlu0 0
        %1003 = vperm.xlu0 %1002, %v985
        %v1004 = vpop.permute.xlu0 %1003
        %v1010 = vunpack.c.l.b16 %v968
        %v1011 = vunpack.c.l.b16 %v969
        %v1012 = vunpack.c.l.b16 %v970
        %v1013 = vunpack.c.l.b16 %v971
        %v1014 = vpack.c.b16 %v1011, %v1010
        %v1015 = vpack.c.b16 %v1013, %v1012
        %v1026 = vunpack.c.l.b16 %v972
        %v1027 = vunpack.c.h.b16 %v972
        %v1028 = vunpack.c.l.b16 %v973
        %v1029 = vunpack.c.l.b16 %v974
        %v1030 = vunpack.c.h.b16 %v974
        %v1031 = vunpack.c.l.b16 %v975
        %v1032 = vunpack.c.l.b16 %v976
        %v1033 = vunpack.c.h.b16 %v976
        %v1034 = vunpack.c.l.b16 %v977
        %v1035 = vunpack.c.l.b16 %v978
        %v1036 = vunpack.c.h.b16 %v978
        %v1037 = vunpack.c.l.b16 %v979
        %v1038 = vunpack.c.l.b16 %v980
        %v1039 = vunpack.c.h.b16 %v980
        %v1040 = vunpack.c.l.b16 %v981
        %v1041 = vpack.c.b16 %v1029, %v1026
        %v1042 = vpack.c.b16 %v1030, %v1027
        %v1043 = vpack.c.b16 %v1031, %v1028
        %v1044 = vpack.c.b16 %v1035, %v1032
        %v1045 = vpack.c.b16 %v1036, %v1033
        %v1046 = vpack.c.b16 %v1037, %v1034
        %v1047 = vpack.c.b16 %v1038, %v1038
        %v1048 = vpack.c.b16 %v1039, %v1039
        %v1049 = vpack.c.b16 %v1040, %v1040
        %v1057 = vsel %vm400, %v1014, 0
        %v1060 = vsel %vm400, %v1015, 0
        %v1063 = vsel %vm407, %v1047, 0
        %v1066 = vsel %vm407, %v1048, 0
        %v1069 = vsel %vm407, %v1049, 0
        %1071 = vmatprep.subr.bf16.mxu0 %v1042
        %1072 = vmatpush1.bf16.msra.mxu0 %v1041
        %1073 = vmatprep.subr.bf16.mxu0 %v1045
        %1074 = vmatpush1.bf16.msra.mxu0 %v1044
        %1075 = vmatprep.subr.bf16.mxu0 %v1066
        %1076 = vmatpush1.bf16.msra.mxu0 %v1063
        %1077 = vmatprep.subr.bf16.mxu0 0
        %1078 = vmatpush1.bf16.msra.mxu0 0
        %1079 = vmatprep.subr.bf16.mxu0 0
        %1080 = vmatpush1.bf16.msra.mxu0 0
        %1081 = vmatprep.subr.bf16.mxu0 0
        %1082 = vmatpush1.bf16.msra.mxu0 0
        %1083 = vmatprep.subr.bf16.mxu0 0
        %1084 = vmatpush1.bf16.msra.mxu0 0
        %1085 = vmatprep.subr.bf16.mxu0 0
        %1086 = vmatpush1.bf16.msra.mxu0 0
        %1087 = vmatprep.subr.bf16.mxu0 0
        %1088 = vmatpush1.bf16.msra.mxu0 0
        %1089 = vmatprep.subr.bf16.mxu0 0
        %1090 = vmatpush1.bf16.msra.mxu0 0
        %1091 = vmatprep.subr.bf16.mxu0 0
        %1092 = vmatpush1.bf16.msra.mxu0 0
        %1093 = vmatprep.subr.bf16.mxu0 0
        %1094 = vmatpush1.bf16.msra.mxu0 0
        %1095 = vmatprep.subr.bf16.mxu0 0
        %1096 = vmatpush1.bf16.msra.mxu0 0
        %1097 = vmatprep.subr.bf16.mxu0 0
        %1098 = vmatpush1.bf16.msra.mxu0 0
        %1099 = vmatprep.subr.bf16.mxu0 0
        %1100 = vmatpush1.bf16.msra.mxu0 0
        %1101 = vmatprep.subr.bf16.mxu0 0
        %1102 = vmatpush1.bf16.msra.mxu0 0
        %1103 = vmatprep.mubr.bf16.mxu0 0
        %1104 = vmatmul.mubr.bf16.gmra.mrb[0].mxu0 %v1057
        %v1105 = vpop.f32.mrb[0].mxu0
        %v1106 = vadd.f32 %v989, %v1105
        %v1107 = vpop.f32.mrb[0].mxu0
        %v1108 = vadd.f32 %v989, %v1107
        %v1109 = vpop.f32.mrb[0].mxu0
        %v1110 = vadd.f32 %v994, %v1109
        %v1111 = vpop.f32.mrb[0].mxu0
        %v1112 = vadd.f32 %v994, %v1111
        %1113 = vmatprep.mubr.bf16.mxu0 0
        %1114 = vmatmul.mubr.bf16.gmra.mrb[0].mxu0 %v1060
        %v1115 = vpop.f32.mrb[0].mxu0
        %v1116 = vadd.f32 %v999, %v1115
        %v1117 = vpop.f32.mrb[0].mxu0
        %v1118 = vadd.f32 %v999, %v1117
        %v1119 = vpop.f32.mrb[0].mxu0
        %v1120 = vadd.f32 %v1004, %v1119
        %v1121 = vpop.f32.mrb[0].mxu0
        %v1122 = vadd.f32 %v1004, %v1121
        %1123 = vdwg.mxu0
        %1124 = vmatprep.subr.bf16.mxu0 0
        %1125 = vmatpush1.bf16.msra.mxu0 %v1043
        %1126 = vmatprep.subr.bf16.mxu0 0
        %1127 = vmatpush1.bf16.msra.mxu0 %v1046
        %1128 = vmatprep.subr.bf16.mxu0 0
        %1129 = vmatpush1.bf16.msra.mxu0 %v1069
        %1130 = vmatprep.subr.bf16.mxu0 0
        %1131 = vmatpush1.bf16.msra.mxu0 0
        %1132 = vmatprep.subr.bf16.mxu0 0
        %1133 = vmatpush1.bf16.msra.mxu0 0
        %1134 = vmatprep.subr.bf16.mxu0 0
        %1135 = vmatpush1.bf16.msra.mxu0 0
        %1136 = vmatprep.subr.bf16.mxu0 0
        %1137 = vmatpush1.bf16.msra.mxu0 0
        %1138 = vmatprep.subr.bf16.mxu0 0
        %1139 = vmatpush1.bf16.msra.mxu0 0
        %1140 = vmatprep.subr.bf16.mxu0 0
        %1141 = vmatpush1.bf16.msra.mxu0 0
        %1142 = vmatprep.subr.bf16.mxu0 0
        %1143 = vmatpush1.bf16.msra.mxu0 0
        %1144 = vmatprep.subr.bf16.mxu0 0
        %1145 = vmatpush1.bf16.msra.mxu0 0
        %1146 = vmatprep.subr.bf16.mxu0 0
        %1147 = vmatpush1.bf16.msra.mxu0 0
        %1148 = vmatprep.subr.bf16.mxu0 0
        %1149 = vmatpush1.bf16.msra.mxu0 0
        %1150 = vmatprep.subr.bf16.mxu0 0
        %1151 = vmatpush1.bf16.msra.mxu0 0
        %1152 = vmatprep.subr.bf16.mxu0 0
        %1153 = vmatpush1.bf16.msra.mxu0 0
        %1154 = vmatprep.subr.bf16.mxu0 0
        %1155 = vmatpush1.bf16.msra.mxu0 0
        %1156 = vmatprep.mubr.bf16.mxu0 0
        %1157 = vmatmul.mubr.bf16.gmra.mrb[0].mxu0 %v1057
        %v1158 = vpop.f32.mrb[0].mxu0
        %v1159 = vadd.f32 %v989, %v1158
        %v1160 = vpop.f32.mrb[0].mxu0
        %v1161 = vpop.f32.mrb[0].mxu0
        %v1162 = vadd.f32 %v994, %v1161
        %v1163 = vpop.f32.mrb[0].mxu0
        %1164 = vmatprep.mubr.bf16.mxu0 0
        %1165 = vmatmul.mubr.bf16.gmra.mrb[0].mxu0 %v1060
        %v1166 = vpop.f32.mrb[0].mxu0
        %v1167 = vadd.f32 %v999, %v1166
        %v1168 = vpop.f32.mrb[0].mxu0
        %v1169 = vpop.f32.mrb[0].mxu0
        %v1170 = vadd.f32 %v1004, %v1169
        %v1171 = vpop.f32.mrb[0].mxu0
        %1172 = vdwg.mxu0
        %vm1173 = vcmp.gt.f32.partialorder %v1106, 0.0
        %vm1174 = vcmp.gt.f32.partialorder %v1108, 0.0
        %vm1175 = vcmp.gt.f32.partialorder %v1159, 0.0
        %vm1176 = vcmp.gt.f32.partialorder %v1110, 0.0
        %vm1177 = vcmp.gt.f32.partialorder %v1112, 0.0
        %vm1178 = vcmp.gt.f32.partialorder %v1162, 0.0
        %vm1179 = vcmp.gt.f32.partialorder %v1116, 0.0
        %vm1180 = vcmp.gt.f32.partialorder %v1118, 0.0
        %vm1181 = vcmp.gt.f32.partialorder %v1167, 0.0
        %vm1182 = vcmp.gt.f32.partialorder %v1120, 0.0
        %vm1183 = vcmp.gt.f32.partialorder %v1122, 0.0
        %vm1184 = vcmp.gt.f32.partialorder %v1170, 0.0
        %v1185 = vmin.f32 %v1106, 0.0
        %v1186 = vmin.f32 %v1108, 0.0
        %v1187 = vmin.f32 %v1159, 0.0
        %v1188 = vmin.f32 %v1110, 0.0
        %v1189 = vmin.f32 %v1112, 0.0
        %v1190 = vmin.f32 %v1162, 0.0
        %v1191 = vmin.f32 %v1116, 0.0
        %v1192 = vmin.f32 %v1118, 0.0
        %v1193 = vmin.f32 %v1167, 0.0
        %v1194 = vmin.f32 %v1120, 0.0
        %v1195 = vmin.f32 %v1122, 0.0
        %v1196 = vmin.f32 %v1170, 0.0
        %v1197 = vmul.f32 %v1185, 1.442695
        %v1198 = vpow.pop %v1197
        %v1199 = vmul.f32 %v1186, 1.442695
        %v1200 = vpow.pop %v1199
        %v1201 = vmul.f32 %v1187, 1.442695
        %v1202 = vpow.pop %v1201
        %v1203 = vmul.f32 %v1188, 1.442695
        %v1204 = vpow.pop %v1203
        %v1205 = vmul.f32 %v1189, 1.442695
        %v1206 = vpow.pop %v1205
        %v1207 = vmul.f32 %v1190, 1.442695
        %v1208 = vpow.pop %v1207
        %v1209 = vmul.f32 %v1191, 1.442695
        %v1210 = vpow.pop %v1209
        %v1211 = vmul.f32 %v1192, 1.442695
        %v1212 = vpow.pop %v1211
        %v1213 = vmul.f32 %v1193, 1.442695
        %v1214 = vpow.pop %v1213
        %v1215 = vmul.f32 %v1194, 1.442695
        %v1216 = vpow.pop %v1215
        %v1217 = vmul.f32 %v1195, 1.442695
        %v1218 = vpow.pop %v1217
        %v1219 = vmul.f32 %v1196, 1.442695
        %v1220 = vpow.pop %v1219
        %v1221 = vsub.f32 %v1198, 1.0
        %v1222 = vsub.f32 %v1200, 1.0
        %v1223 = vsub.f32 %v1202, 1.0
        %v1224 = vsub.f32 %v1204, 1.0
        %v1225 = vsub.f32 %v1206, 1.0
        %v1226 = vsub.f32 %v1208, 1.0
        %v1227 = vsub.f32 %v1210, 1.0
        %v1228 = vsub.f32 %v1212, 1.0
        %v1229 = vsub.f32 %v1214, 1.0
        %v1230 = vsub.f32 %v1216, 1.0
        %v1231 = vsub.f32 %v1218, 1.0
        %v1232 = vsub.f32 %v1220, 1.0
        %v1233 = vsel %vm1173, %v1106, %v1221
        %v1234 = vsel %vm1174, %v1108, %v1222
        %v1235 = vsel %vm1175, %v1159, %v1223
        %v1236 = vsel %vm1176, %v1110, %v1224
        %v1237 = vsel %vm1177, %v1112, %v1225
        %v1238 = vsel %vm1178, %v1162, %v1226
        %v1239 = vsel %vm1179, %v1116, %v1227
        %v1240 = vsel %vm1180, %v1118, %v1228
        %v1241 = vsel %vm1181, %v1167, %v1229
        %v1242 = vsel %vm1182, %v1120, %v1230
        %v1243 = vsel %vm1183, %v1122, %v1231
        %v1244 = vsel %vm1184, %v1170, %v1232
        %v1245 = vpack.c.bf16 %v1236, %v1233
        %v1246 = vpack.c.bf16 %v1237, %v1234
        %v1247 = vpack.c.bf16 %v1238, %v1235
        %v1248 = vpack.c.bf16 %v1242, %v1239
        %v1249 = vpack.c.bf16 %v1243, %v1240
        %v1250 = vpack.c.bf16 %v1244, %v1241
        %v1257 = vunpack.c.l.b16 %v1245
        %v1258 = vunpack.c.l.b16 %v1246
        %v1259 = vunpack.c.l.b16 %v1247
        %v1260 = vunpack.c.h.b16 %v1245
        %v1261 = vunpack.c.h.b16 %v1246
        %v1262 = vunpack.c.h.b16 %v1247
        %v1263 = vunpack.c.l.b16 %v1248
        %v1264 = vunpack.c.l.b16 %v1249
        %v1265 = vunpack.c.l.b16 %v1250
        %v1266 = vunpack.c.h.b16 %v1248
        %v1267 = vunpack.c.h.b16 %v1249
        %v1268 = vunpack.c.h.b16 %v1250
        %v1269 = vpack.c.b16 %v1258, %v1257
        %v1270 = vpack.c.b16 %v1259, %v1259
        %v1271 = vpack.c.b16 %v1261, %v1260
        %v1272 = vpack.c.b16 %v1262, %v1262
        %v1273 = vpack.c.b16 %v1264, %v1263
        %v1274 = vpack.c.b16 %v1265, %v1265
        %v1275 = vpack.c.b16 %v1267, %v1266
        %v1276 = vpack.c.b16 %v1268, %v1268
        %1285 = vst [vmem:[#allocation3] sm:$0xff] %v1269
        %1286 = vst [vmem:[#allocation3 + $0x8] sm:$0xf] %v1270
        %1287 = vst [vmem:[#allocation3 + $0xc] sm:$0xff] %v1271
        %1288 = vst [vmem:[#allocation3 + $0x14] sm:$0xf] %v1272
        %1289 = vst [vmem:[#allocation3 + $0x18] sm:$0xff] %v1273
        %1290 = vst [vmem:[#allocation3 + $0x20] sm:$0xf] %v1274
        %1291 = vst [vmem:[#allocation3 + $0x24] sm:$0xff] %v1275
        %1292 = vst [vmem:[#allocation3 + $0x2c] sm:$0xf] %v1276
        %v1293 = vld [vmem:[%s1 + $0x30] sm:$0xf]
        %v1294 = vld [vmem:[%s1 + $0x34] sm:$0xf]
        %v1295 = vld [vmem:[%s1 + $0x38] sm:$0xf]
        %v1296 = vld [vmem:[%s1 + $0x3c] sm:$0xf]
        %v1297 = vld [vmem:[#allocation3] sm:$0xff]
        %v1298 = vld [vmem:[#allocation3 + $0x8] sm:$0xf]
        %v1299 = vld [vmem:[#allocation3 + $0xc] sm:$0xff]
        %v1300 = vld [vmem:[#allocation3 + $0x14] sm:$0xf]
        %v1301 = vld [vmem:[#allocation3 + $0x18] sm:$0xff]
        %v1302 = vld [vmem:[#allocation3 + $0x20] sm:$0xf]
        %v1303 = vld [vmem:[#allocation3 + $0x24] sm:$0xff]
        %v1304 = vld [vmem:[#allocation3 + $0x2c] sm:$0xf]
        %v1305 = vld [vmem:[#allocation3 + $0x30] sm:$0x33]
        %v1306 = vld [vmem:[#allocation3 + $0x38] sm:$0x3]
        %v1307 = vld [vmem:[%s2 + $0x60] sm:$0xff]
        %v1308 = vld [vmem:[%s2 + $0x68] sm:$0xff]
        %v1309 = vld [vmem:[%s2 + $0x70] sm:$0xff]
        %v1310 = vld [vmem:[%s2 + $0x78] sm:$0xff]
        %1312 = vset.pattern.permute.xlu0 0
        %1313 = vperm.xlu0 %1312, %v1307
        %v1314 = vpop.permute.xlu0 %1313
        %1317 = vset.pattern.permute.xlu0 0
        %1318 = vperm.xlu0 %1317, %v1308
        %v1319 = vpop.permute.xlu0 %1318
        %1322 = vset.pattern.permute.xlu0 0
        %1323 = vperm.xlu0 %1322, %v1309
        %v1324 = vpop.permute.xlu0 %1323
        %1327 = vset.pattern.permute.xlu0 0
        %1328 = vperm.xlu0 %1327, %v1310
        %v1329 = vpop.permute.xlu0 %1328
        %v1335 = vunpack.c.l.b16 %v1293
        %v1336 = vunpack.c.l.b16 %v1294
        %v1337 = vunpack.c.l.b16 %v1295
        %v1338 = vunpack.c.l.b16 %v1296
        %v1339 = vpack.c.b16 %v1336, %v1335
        %v1340 = vpack.c.b16 %v1338, %v1337
        %v1351 = vunpack.c.l.b16 %v1297
        %v1352 = vunpack.c.h.b16 %v1297
        %v1353 = vunpack.c.l.b16 %v1298
        %v1354 = vunpack.c.l.b16 %v1299
        %v1355 = vunpack.c.h.b16 %v1299
        %v1356 = vunpack.c.l.b16 %v1300
        %v1357 = vunpack.c.l.b16 %v1301
        %v1358 = vunpack.c.h.b16 %v1301
        %v1359 = vunpack.c.l.b16 %v1302
        %v1360 = vunpack.c.l.b16 %v1303
        %v1361 = vunpack.c.h.b16 %v1303
        %v1362 = vunpack.c.l.b16 %v1304
        %v1363 = vunpack.c.l.b16 %v1305
        %v1364 = vunpack.c.h.b16 %v1305
        %v1365 = vunpack.c.l.b16 %v1306
        %v1366 = vpack.c.b16 %v1354, %v1351
        %v1367 = vpack.c.b16 %v1355, %v1352
        %v1368 = vpack.c.b16 %v1356, %v1353
        %v1369 = vpack.c.b16 %v1360, %v1357
        %v1370 = vpack.c.b16 %v1361, %v1358
        %v1371 = vpack.c.b16 %v1362, %v1359
        %v1372 = vpack.c.b16 %v1363, %v1363
        %v1373 = vpack.c.b16 %v1364, %v1364
        %v1374 = vpack.c.b16 %v1365, %v1365
        %v1382 = vsel %vm400, %v1339, 0
        %v1385 = vsel %vm400, %v1340, 0
        %v1388 = vsel %vm407, %v1372, 0
        %v1391 = vsel %vm407, %v1373, 0
        %v1394 = vsel %vm407, %v1374, 0
        %1396 = vmatprep.subr.bf16.mxu0 %v1367
        %1397 = vmatpush1.bf16.msra.mxu0 %v1366
        %1398 = vmatprep.subr.bf16.mxu0 %v1370
        %1399 = vmatpush1.bf16.msra.mxu0 %v1369
        %1400 = vmatprep.subr.bf16.mxu0 %v1391
        %1401 = vmatpush1.bf16.msra.mxu0 %v1388
        %1402 = vmatprep.subr.bf16.mxu0 0
        %1403 = vmatpush1.bf16.msra.mxu0 0
        %1404 = vmatprep.subr.bf16.mxu0 0
        %1405 = vmatpush1.bf16.msra.mxu0 0
        %1406 = vmatprep.subr.bf16.mxu0 0
        %1407 = vmatpush1.bf16.msra.mxu0 0
        %1408 = vmatprep.subr.bf16.mxu0 0
        %1409 = vmatpush1.bf16.msra.mxu0 0
        %1410 = vmatprep.subr.bf16.mxu0 0
        %1411 = vmatpush1.bf16.msra.mxu0 0
        %1412 = vmatprep.subr.bf16.mxu0 0
        %1413 = vmatpush1.bf16.msra.mxu0 0
        %1414 = vmatprep.subr.bf16.mxu0 0
        %1415 = vmatpush1.bf16.msra.mxu0 0
        %1416 = vmatprep.subr.bf16.mxu0 0
        %1417 = vmatpush1.bf16.msra.mxu0 0
        %1418 = vmatprep.subr.bf16.mxu0 0
        %1419 = vmatpush1.bf16.msra.mxu0 0
        %1420 = vmatprep.subr.bf16.mxu0 0
        %1421 = vmatpush1.bf16.msra.mxu0 0
        %1422 = vmatprep.subr.bf16.mxu0 0
        %1423 = vmatpush1.bf16.msra.mxu0 0
        %1424 = vmatprep.subr.bf16.mxu0 0
        %1425 = vmatpush1.bf16.msra.mxu0 0
        %1426 = vmatprep.subr.bf16.mxu0 0
        %1427 = vmatpush1.bf16.msra.mxu0 0
        %1428 = vmatprep.mubr.bf16.mxu0 0
        %1429 = vmatmul.mubr.bf16.gmra.mrb[0].mxu0 %v1382
        %v1430 = vpop.f32.mrb[0].mxu0
        %v1431 = vadd.f32 %v1314, %v1430
        %v1432 = vpop.f32.mrb[0].mxu0
        %v1433 = vadd.f32 %v1314, %v1432
        %v1434 = vpop.f32.mrb[0].mxu0
        %v1435 = vadd.f32 %v1319, %v1434
        %v1436 = vpop.f32.mrb[0].mxu0
        %v1437 = vadd.f32 %v1319, %v1436
        %1438 = vmatprep.mubr.bf16.mxu0 0
        %1439 = vmatmul.mubr.bf16.gmra.mrb[0].mxu0 %v1385
        %v1440 = vpop.f32.mrb[0].mxu0
        %v1441 = vadd.f32 %v1324, %v1440
        %v1442 = vpop.f32.mrb[0].mxu0
        %v1443 = vadd.f32 %v1324, %v1442
        %v1444 = vpop.f32.mrb[0].mxu0
        %v1445 = vadd.f32 %v1329, %v1444
        %v1446 = vpop.f32.mrb[0].mxu0
        %v1447 = vadd.f32 %v1329, %v1446
        %1448 = vdwg.mxu0
        %1449 = vmatprep.subr.bf16.mxu0 0
        %1450 = vmatpush1.bf16.msra.mxu0 %v1368
        %1451 = vmatprep.subr.bf16.mxu0 0
        %1452 = vmatpush1.bf16.msra.mxu0 %v1371
        %1453 = vmatprep.subr.bf16.mxu0 0
        %1454 = vmatpush1.bf16.msra.mxu0 %v1394
        %1455 = vmatprep.subr.bf16.mxu0 0
        %1456 = vmatpush1.bf16.msra.mxu0 0
        %1457 = vmatprep.subr.bf16.mxu0 0
        %1458 = vmatpush1.bf16.msra.mxu0 0
        %1459 = vmatprep.subr.bf16.mxu0 0
        %1460 = vmatpush1.bf16.msra.mxu0 0
        %1461 = vmatprep.subr.bf16.mxu0 0
        %1462 = vmatpush1.bf16.msra.mxu0 0
        %1463 = vmatprep.subr.bf16.mxu0 0
        %1464 = vmatpush1.bf16.msra.mxu0 0
        %1465 = vmatprep.subr.bf16.mxu0 0
        %1466 = vmatpush1.bf16.msra.mxu0 0
        %1467 = vmatprep.subr.bf16.mxu0 0
        %1468 = vmatpush1.bf16.msra.mxu0 0
        %1469 = vmatprep.subr.bf16.mxu0 0
        %1470 = vmatpush1.bf16.msra.mxu0 0
        %1471 = vmatprep.subr.bf16.mxu0 0
        %1472 = vmatpush1.bf16.msra.mxu0 0
        %1473 = vmatprep.subr.bf16.mxu0 0
        %1474 = vmatpush1.bf16.msra.mxu0 0
        %1475 = vmatprep.subr.bf16.mxu0 0
        %1476 = vmatpush1.bf16.msra.mxu0 0
        %1477 = vmatprep.subr.bf16.mxu0 0
        %1478 = vmatpush1.bf16.msra.mxu0 0
        %1479 = vmatprep.subr.bf16.mxu0 0
        %1480 = vmatpush1.bf16.msra.mxu0 0
        %1481 = vmatprep.mubr.bf16.mxu0 0
        %1482 = vmatmul.mubr.bf16.gmra.mrb[0].mxu0 %v1382
        %v1483 = vpop.f32.mrb[0].mxu0
        %v1484 = vadd.f32 %v1314, %v1483
        %v1485 = vpop.f32.mrb[0].mxu0
        %v1486 = vpop.f32.mrb[0].mxu0
        %v1487 = vadd.f32 %v1319, %v1486
        %v1488 = vpop.f32.mrb[0].mxu0
        %1489 = vmatprep.mubr.bf16.mxu0 0
        %1490 = vmatmul.mubr.bf16.gmra.mrb[0].mxu0 %v1385
        %v1491 = vpop.f32.mrb[0].mxu0
        %v1492 = vadd.f32 %v1324, %v1491
        %v1493 = vpop.f32.mrb[0].mxu0
        %v1494 = vpop.f32.mrb[0].mxu0
        %v1495 = vadd.f32 %v1329, %v1494
        %v1496 = vpop.f32.mrb[0].mxu0
        %1497 = vdwg.mxu0
        %v1498 = vlaneseq
        %v1499 = vand.u32 %v1498, 127
        %v1500 = vadd.s32 %v1499, 128
        %v1501 = vadd.s32 %v1499, 256
        %vm1502 = vcmp.ge.s32.totalorder %v1499, 0
        %vm1503 = vcmp.ge.s32.totalorder %v1500, 0
        %vm1504 = vcmp.ge.s32.totalorder %v1501, 0
        %vm1505 = vcmp.lt.s32.totalorder %v1499, 16
        %vm1506 = vcmp.lt.s32.totalorder %v1500, 16
        %vm1507 = vcmp.lt.s32.totalorder %v1501, 16
        %vm1508 = vmand %vm1502, %vm1505
        %vm1509 = vmand %vm1503, %vm1506
        %vm1510 = vmand %vm1504, %vm1507
        %vm1511 = vcmp.ge.s32.totalorder %v1499, 18
        %vm1512 = vcmp.ge.s32.totalorder %v1500, 18
        %vm1513 = vcmp.ge.s32.totalorder %v1501, 18
        %vm1514 = vcmp.lt.s32.totalorder %v1499, 34
        %vm1515 = vcmp.lt.s32.totalorder %v1500, 34
        %vm1516 = vcmp.lt.s32.totalorder %v1501, 34
        %vm1517 = vmand %vm1511, %vm1514
        %vm1518 = vmand %vm1512, %vm1515
        %vm1519 = vmand %vm1513, %vm1516
        %vm1520 = vmor %vm1508, %vm1517
        %vm1521 = vmor %vm1509, %vm1518
        %vm1522 = vmor %vm1510, %vm1519
        %vm1523 = vcmp.ge.s32.totalorder %v1499, 36
        %vm1524 = vcmp.ge.s32.totalorder %v1500, 36
        %vm1525 = vcmp.ge.s32.totalorder %v1501, 36
        %vm1526 = vcmp.lt.s32.totalorder %v1499, 52
        %vm1527 = vcmp.lt.s32.totalorder %v1500, 52
        %vm1528 = vcmp.lt.s32.totalorder %v1501, 52
        %vm1529 = vmand %vm1523, %vm1526
        %vm1530 = vmand %vm1524, %vm1527
        %vm1531 = vmand %vm1525, %vm1528
        %vm1532 = vmor %vm1520, %vm1529
        %vm1533 = vmor %vm1521, %vm1530
        %vm1534 = vmor %vm1522, %vm1531
        %vm1535 = vcmp.ge.s32.totalorder %v1499, 54
        %vm1536 = vcmp.ge.s32.totalorder %v1500, 54
        %vm1537 = vcmp.ge.s32.totalorder %v1501, 54
        %vm1538 = vcmp.lt.s32.totalorder %v1499, 70
        %vm1539 = vcmp.lt.s32.totalorder %v1500, 70
        %vm1540 = vcmp.lt.s32.totalorder %v1501, 70
        %vm1541 = vmand %vm1535, %vm1538
        %vm1542 = vmand %vm1536, %vm1539
        %vm1543 = vmand %vm1537, %vm1540
        %vm1544 = vmor %vm1532, %vm1541
        %vm1545 = vmor %vm1533, %vm1542
        %vm1546 = vmor %vm1534, %vm1543
        %vm1547 = vcmp.ge.s32.totalorder %v1499, 72
        %vm1548 = vcmp.ge.s32.totalorder %v1500, 72
        %vm1549 = vcmp.ge.s32.totalorder %v1501, 72
        %vm1550 = vcmp.lt.s32.totalorder %v1499, 88
        %vm1551 = vcmp.lt.s32.totalorder %v1500, 88
        %vm1552 = vcmp.lt.s32.totalorder %v1501, 88
        %vm1553 = vmand %vm1547, %vm1550
        %vm1554 = vmand %vm1548, %vm1551
        %vm1555 = vmand %vm1549, %vm1552
        %vm1556 = vmor %vm1544, %vm1553
        %vm1557 = vmor %vm1545, %vm1554
        %vm1558 = vmor %vm1546, %vm1555
        %vm1559 = vcmp.ge.s32.totalorder %v1499, 90
        %vm1560 = vcmp.ge.s32.totalorder %v1500, 90
        %vm1561 = vcmp.ge.s32.totalorder %v1501, 90
        %vm1562 = vcmp.lt.s32.totalorder %v1499, 106
        %vm1563 = vcmp.lt.s32.totalorder %v1500, 106
        %vm1564 = vcmp.lt.s32.totalorder %v1501, 106
        %vm1565 = vmand %vm1559, %vm1562
        %vm1566 = vmand %vm1560, %vm1563
        %vm1567 = vmand %vm1561, %vm1564
        %vm1568 = vmor %vm1556, %vm1565
        %vm1569 = vmor %vm1557, %vm1566
        %vm1570 = vmor %vm1558, %vm1567
        %vm1571 = vcmp.ge.s32.totalorder %v1499, 108
        %vm1572 = vcmp.ge.s32.totalorder %v1500, 108
        %vm1573 = vcmp.ge.s32.totalorder %v1501, 108
        %vm1574 = vcmp.lt.s32.totalorder %v1499, 124
        %vm1575 = vcmp.lt.s32.totalorder %v1500, 124
        %vm1576 = vcmp.lt.s32.totalorder %v1501, 124
        %vm1577 = vmand %vm1571, %vm1574
        %vm1578 = vmand %vm1572, %vm1575
        %vm1579 = vmand %vm1573, %vm1576
        %vm1580 = vmor %vm1568, %vm1577
        %vm1581 = vmor %vm1569, %vm1578
        %vm1582 = vmor %vm1570, %vm1579
        %vm1583 = vcmp.ge.s32.totalorder %v1499, 126
        %vm1584 = vcmp.ge.s32.totalorder %v1500, 126
        %vm1585 = vcmp.ge.s32.totalorder %v1501, 126
        %vm1586 = vcmp.lt.s32.totalorder %v1499, 142
        %vm1587 = vcmp.lt.s32.totalorder %v1500, 142
        %vm1588 = vcmp.lt.s32.totalorder %v1501, 142
        %vm1589 = vmand %vm1583, %vm1586
        %vm1590 = vmand %vm1584, %vm1587
        %vm1591 = vmand %vm1585, %vm1588
        %vm1592 = vmor %vm1580, %vm1589
        %vm1593 = vmor %vm1581, %vm1590
        %vm1594 = vmor %vm1582, %vm1591
        %vm1595 = vcmp.ge.s32.totalorder %v1499, 144
        %vm1596 = vcmp.ge.s32.totalorder %v1500, 144
        %vm1597 = vcmp.ge.s32.totalorder %v1501, 144
        %vm1598 = vcmp.lt.s32.totalorder %v1499, 160
        %vm1599 = vcmp.lt.s32.totalorder %v1500, 160
        %vm1600 = vcmp.lt.s32.totalorder %v1501, 160
        %vm1601 = vmand %vm1595, %vm1598
        %vm1602 = vmand %vm1596, %vm1599
        %vm1603 = vmand %vm1597, %vm1600
        %vm1604 = vmor %vm1592, %vm1601
        %vm1605 = vmor %vm1593, %vm1602
        %vm1606 = vmor %vm1594, %vm1603
        %vm1607 = vcmp.ge.s32.totalorder %v1499, 162
        %vm1608 = vcmp.ge.s32.totalorder %v1500, 162
        %vm1609 = vcmp.ge.s32.totalorder %v1501, 162
        %vm1610 = vcmp.lt.s32.totalorder %v1499, 178
        %vm1611 = vcmp.lt.s32.totalorder %v1500, 178
        %vm1612 = vcmp.lt.s32.totalorder %v1501, 178
        %vm1613 = vmand %vm1607, %vm1610
        %vm1614 = vmand %vm1608, %vm1611
        %vm1615 = vmand %vm1609, %vm1612
        %vm1616 = vmor %vm1604, %vm1613
        %vm1617 = vmor %vm1605, %vm1614
        %vm1618 = vmor %vm1606, %vm1615
        %vm1619 = vcmp.ge.s32.totalorder %v1499, 180
        %vm1620 = vcmp.ge.s32.totalorder %v1500, 180
        %vm1621 = vcmp.ge.s32.totalorder %v1501, 180
        %vm1622 = vcmp.lt.s32.totalorder %v1499, 196
        %vm1623 = vcmp.lt.s32.totalorder %v1500, 196
        %vm1624 = vcmp.lt.s32.totalorder %v1501, 196
        %vm1625 = vmand %vm1619, %vm1622
        %vm1626 = vmand %vm1620, %vm1623
        %vm1627 = vmand %vm1621, %vm1624
        %vm1628 = vmor %vm1616, %vm1625
        %vm1629 = vmor %vm1617, %vm1626
        %vm1630 = vmor %vm1618, %vm1627
        %vm1631 = vcmp.ge.s32.totalorder %v1499, 198
        %vm1632 = vcmp.ge.s32.totalorder %v1500, 198
        %vm1633 = vcmp.ge.s32.totalorder %v1501, 198
        %vm1634 = vcmp.lt.s32.totalorder %v1499, 214
        %vm1635 = vcmp.lt.s32.totalorder %v1500, 214
        %vm1636 = vcmp.lt.s32.totalorder %v1501, 214
        %vm1637 = vmand %vm1631, %vm1634
        %vm1638 = vmand %vm1632, %vm1635
        %vm1639 = vmand %vm1633, %vm1636
        %vm1640 = vmor %vm1628, %vm1637
        %vm1641 = vmor %vm1629, %vm1638
        %vm1642 = vmor %vm1630, %vm1639
        %vm1643 = vcmp.ge.s32.totalorder %v1499, 216
        %vm1644 = vcmp.ge.s32.totalorder %v1500, 216
        %vm1645 = vcmp.ge.s32.totalorder %v1501, 216
        %vm1646 = vcmp.lt.s32.totalorder %v1499, 232
        %vm1647 = vcmp.lt.s32.totalorder %v1500, 232
        %vm1648 = vcmp.lt.s32.totalorder %v1501, 232
        %vm1649 = vmand %vm1643, %vm1646
        %vm1650 = vmand %vm1644, %vm1647
        %vm1651 = vmand %vm1645, %vm1648
        %vm1652 = vmor %vm1640, %vm1649
        %vm1653 = vmor %vm1641, %vm1650
        %vm1654 = vmor %vm1642, %vm1651
        %vm1655 = vcmp.ge.s32.totalorder %v1499, 234
        %vm1656 = vcmp.ge.s32.totalorder %v1500, 234
        %vm1657 = vcmp.ge.s32.totalorder %v1501, 234
        %vm1658 = vcmp.lt.s32.totalorder %v1499, 250
        %vm1659 = vcmp.lt.s32.totalorder %v1500, 250
        %vm1660 = vcmp.lt.s32.totalorder %v1501, 250
        %vm1661 = vmand %vm1655, %vm1658
        %vm1662 = vmand %vm1656, %vm1659
        %vm1663 = vmand %vm1657, %vm1660
        %vm1664 = vmor %vm1652, %vm1661
        %vm1665 = vmor %vm1653, %vm1662
        %vm1666 = vmor %vm1654, %vm1663
        %vm1667 = vcmp.ge.s32.totalorder %v1499, 252
        %vm1668 = vcmp.ge.s32.totalorder %v1500, 252
        %vm1669 = vcmp.ge.s32.totalorder %v1501, 252
        %vm1670 = vcmp.lt.s32.totalorder %v1499, 268
        %vm1671 = vcmp.lt.s32.totalorder %v1500, 268
        %vm1672 = vcmp.lt.s32.totalorder %v1501, 268
        %vm1673 = vmand %vm1667, %vm1670
        %vm1674 = vmand %vm1668, %vm1671
        %vm1675 = vmand %vm1669, %vm1672
        %vm1676 = vmor %vm1664, %vm1673
        %vm1677 = vmor %vm1665, %vm1674
        %vm1678 = vmor %vm1666, %vm1675
        %vm1679 = vcmp.ge.s32.totalorder %v1499, 270
        %vm1680 = vcmp.ge.s32.totalorder %v1500, 270
        %vm1681 = vcmp.ge.s32.totalorder %v1501, 270
        %vm1682 = vcmp.lt.s32.totalorder %v1499, 286
        %vm1683 = vcmp.lt.s32.totalorder %v1500, 286
        %vm1684 = vcmp.lt.s32.totalorder %v1501, 286
        %vm1685 = vmand %vm1679, %vm1682
        %vm1686 = vmand %vm1680, %vm1683
        %vm1687 = vmand %vm1681, %vm1684
        %vm1688 = vmor %vm1676, %vm1685
        %vm1689 = vmor %vm1677, %vm1686
        %vm1690 = vmor %vm1678, %vm1687
        %v1691 = vsel %vm1688, 1.0, 0.0
        %v1692 = vsel %vm1689, 1.0, 0.0
        %v1693 = vsel %vm1690, 1.0, 0.0
        %1694 = vst [vmem:[#allocation4] sm:$0xff] 0
        %1695 = vst [vmem:[#allocation4 + $0x20] sm:$0xff] 0
        %1696 = vst [vmem:[#allocation4 + $0x18] sm:$0xff] 0
        %1697 = vst [vmem:[#allocation4 + $0x38] sm:$0xff] 0
        %vm1698 = vcmp.gt.f32.partialorder %v1431, 0.0
        %vm1699 = vcmp.gt.f32.partialorder %v1433, 0.0
        %vm1700 = vcmp.gt.f32.partialorder %v1484, 0.0
        %vm1701 = vcmp.gt.f32.partialorder %v1435, 0.0
        %vm1702 = vcmp.gt.f32.partialorder %v1437, 0.0
        %vm1703 = vcmp.gt.f32.partialorder %v1487, 0.0
        %vm1704 = vcmp.gt.f32.partialorder %v1441, 0.0
        %vm1705 = vcmp.gt.f32.partialorder %v1443, 0.0
        %vm1706 = vcmp.gt.f32.partialorder %v1492, 0.0
        %vm1707 = vcmp.gt.f32.partialorder %v1445, 0.0
        %vm1708 = vcmp.gt.f32.partialorder %v1447, 0.0
        %vm1709 = vcmp.gt.f32.partialorder %v1495, 0.0
        %v1710 = vmin.f32 %v1431, 0.0
        %v1711 = vmin.f32 %v1433, 0.0
        %v1712 = vmin.f32 %v1484, 0.0
        %v1713 = vmin.f32 %v1435, 0.0
        %v1714 = vmin.f32 %v1437, 0.0
        %v1715 = vmin.f32 %v1487, 0.0
        %v1716 = vmin.f32 %v1441, 0.0
        %v1717 = vmin.f32 %v1443, 0.0
        %v1718 = vmin.f32 %v1492, 0.0
        %v1719 = vmin.f32 %v1445, 0.0
        %v1720 = vmin.f32 %v1447, 0.0
        %v1721 = vmin.f32 %v1495, 0.0
        %v1722 = vmul.f32 %v1710, 1.442695
        %v1723 = vpow.pop %v1722
        %v1724 = vmul.f32 %v1711, 1.442695
        %v1725 = vpow.pop %v1724
        %v1726 = vmul.f32 %v1712, 1.442695
        %v1727 = vpow.pop %v1726
        %v1728 = vmul.f32 %v1713, 1.442695
        %v1729 = vpow.pop %v1728
        %v1730 = vmul.f32 %v1714, 1.442695
        %v1731 = vpow.pop %v1730
        %v1732 = vmul.f32 %v1715, 1.442695
        %v1733 = vpow.pop %v1732
        %v1734 = vmul.f32 %v1716, 1.442695
        %v1735 = vpow.pop %v1734
        %v1736 = vmul.f32 %v1717, 1.442695
        %v1737 = vpow.pop %v1736
        %v1738 = vmul.f32 %v1718, 1.442695
        %v1739 = vpow.pop %v1738
        %v1740 = vmul.f32 %v1719, 1.442695
        %v1741 = vpow.pop %v1740
        %v1742 = vmul.f32 %v1720, 1.442695
        %v1743 = vpow.pop %v1742
        %v1744 = vmul.f32 %v1721, 1.442695
        %v1745 = vpow.pop %v1744
        %v1746 = vsub.f32 %v1723, 1.0
        %v1747 = vsub.f32 %v1725, 1.0
        %v1748 = vsub.f32 %v1727, 1.0
        %v1749 = vsub.f32 %v1729, 1.0
        %v1750 = vsub.f32 %v1731, 1.0
        %v1751 = vsub.f32 %v1733, 1.0
        %v1752 = vsub.f32 %v1735, 1.0
        %v1753 = vsub.f32 %v1737, 1.0
        %v1754 = vsub.f32 %v1739, 1.0
        %v1755 = vsub.f32 %v1741, 1.0
        %v1756 = vsub.f32 %v1743, 1.0
        %v1757 = vsub.f32 %v1745, 1.0
        %v1758 = vsel %vm1698, %v1431, %v1746
        %v1759 = vsel %vm1699, %v1433, %v1747
        %v1760 = vsel %vm1700, %v1484, %v1748
        %v1761 = vsel %vm1701, %v1435, %v1749
        %v1762 = vsel %vm1702, %v1437, %v1750
        %v1763 = vsel %vm1703, %v1487, %v1751
        %v1764 = vsel %vm1704, %v1441, %v1752
        %v1765 = vsel %vm1705, %v1443, %v1753
        %v1766 = vsel %vm1706, %v1492, %v1754
        %v1767 = vsel %vm1707, %v1445, %v1755
        %v1768 = vsel %vm1708, %v1447, %v1756
        %v1769 = vsel %vm1709, %v1495, %v1757
        %v1770 = vmul.f32 %v1758, %v1691
        %v1771 = vmul.f32 %v1759, %v1692
        %v1772 = vmul.f32 %v1760, %v1693
        %v1773 = vmul.f32 %v1761, %v1691
        %v1774 = vmul.f32 %v1762, %v1692
        %v1775 = vmul.f32 %v1763, %v1693
        %v1776 = vmul.f32 %v1764, %v1691
        %v1777 = vmul.f32 %v1765, %v1692
        %v1778 = vmul.f32 %v1766, %v1693
        %v1779 = vmul.f32 %v1767, %v1691
        %v1780 = vmul.f32 %v1768, %v1692
        %v1781 = vmul.f32 %v1769, %v1693
        %v1782 = vpack.c.bf16 %v1773, %v1770
        %v1783 = vpack.c.bf16 %v1774, %v1771
        %v1784 = vpack.c.bf16 %v1775, %v1772
        %v1785 = vpack.c.bf16 %v1779, %v1776
        %v1786 = vpack.c.bf16 %v1780, %v1777
        %v1787 = vpack.c.bf16 %v1781, %v1778
        %1794 = vrot.lane.b32.xlu0 %v1782, 19
        %v1795 = vpop.permute.xlu0 %1794
        %1796 = vrot.lane.b32.xlu0 %v1783, 19
        %v1797 = vpop.permute.xlu0 %1796
        %1798 = vrot.lane.b32.xlu0 %v1784, 19
        %v1799 = vpop.permute.xlu0 %1798
        %1800 = vrot.lane.b32.xlu0 %v1785, 19
        %v1801 = vpop.permute.xlu0 %1800
        %1802 = vrot.lane.b32.xlu0 %v1786, 19
        %v1803 = vpop.permute.xlu0 %1802
        %1804 = vrot.lane.b32.xlu0 %v1787, 19
        %v1805 = vpop.permute.xlu0 %1804
        %vm1806 = vcmask 154624
        %v1807 = vsel %vm1806, %v1795, %v1797
        %v1808 = vsel %vm1806, %v1797, %v1799
        %v1809 = vsel %vm1806, %v1801, %v1803
        %v1810 = vsel %vm1806, %v1803, %v1805
        %vm1819 = vcmask 1047704
        %1820 = vst.msk [vmem:[#allocation4] sm:$0xff] %vm1819, %v1795
        %1821 = vst [vmem:[#allocation4 + $0x8] sm:$0xff] %v1807
        %1822 = vst [vmem:[#allocation4 + $0x10] sm:$0xff] %v1808
        %vm1823 = vcmask 154624
        %1824 = vst.msk [vmem:[#allocation4 + $0x18] sm:$0xff] %vm1823, %v1799
        %1825 = vst.msk [vmem:[#allocation4 + $0x20] sm:$0xff] %vm1819, %v1801
        %1826 = vst [vmem:[#allocation4 + $0x28] sm:$0xff] %v1809
        %1827 = vst [vmem:[#allocation4 + $0x30] sm:$0xff] %v1810
        %1828 = vst.msk [vmem:[#allocation4 + $0x38] sm:$0xff] %vm1823, %v1805
        %v1829 = vld [vmem:[%s1 + $0x40] sm:$0xf]
        %v1830 = vld [vmem:[#allocation2] sm:$0xff]
        %v1831 = vld [vmem:[#allocation2 + $0x8] sm:$0xf]
        %v1832 = vld [vmem:[#allocation2 + $0xc] sm:$0xff]
        %v1833 = vld [vmem:[#allocation2 + $0x14] sm:$0xf]
        %v1834 = vld [vmem:[#allocation2 + $0x18] sm:$0xff]
        %v1835 = vld [vmem:[#allocation2 + $0x20] sm:$0xf]
        %v1836 = vld [vmem:[#allocation2 + $0x24] sm:$0xff]
        %v1837 = vld [vmem:[#allocation2 + $0x2c] sm:$0xf]
        %v1838 = vld [vmem:[#allocation2 + $0x30] sm:$0x33]
        %v1839 = vld [vmem:[#allocation2 + $0x38] sm:$0x3]
        %v1840 = vld [vmem:[%s2 + $0x80] sm:$0xff]
        %1842 = vset.pattern.permute.xlu0 0
        %1843 = vperm.xlu0 %1842, %v1840
        %v1844 = vpop.permute.xlu0 %1843
        %v1856 = vunpack.c.l.b16 %v1830
        %v1857 = vunpack.c.h.b16 %v1830
        %v1858 = vunpack.c.l.b16 %v1831
        %v1859 = vunpack.c.l.b16 %v1832
        %v1860 = vunpack.c.h.b16 %v1832
        %v1861 = vunpack.c.l.b16 %v1833
        %v1862 = vunpack.c.l.b16 %v1834
        %v1863 = vunpack.c.h.b16 %v1834
        %v1864 = vunpack.c.l.b16 %v1835
        %v1865 = vunpack.c.l.b16 %v1836
        %v1866 = vunpack.c.h.b16 %v1836
        %v1867 = vunpack.c.l.b16 %v1837
        %v1868 = vunpack.c.l.b16 %v1838
        %v1869 = vunpack.c.h.b16 %v1838
        %v1870 = vunpack.c.l.b16 %v1839
        %v1871 = vpack.c.b16 %v1859, %v1856
        %v1872 = vpack.c.b16 %v1860, %v1857
        %v1873 = vpack.c.b16 %v1861, %v1858
        %v1874 = vpack.c.b16 %v1865, %v1862
        %v1875 = vpack.c.b16 %v1866, %v1863
        %v1876 = vpack.c.b16 %v1867, %v1864
        %v1877 = vpack.c.b16 %v1868, %v1868
        %v1878 = vpack.c.b16 %v1869, %v1869
        %v1879 = vpack.c.b16 %v1870, %v1870
        %v1887 = vsel %vm400, %v1829, 0
        %v1890 = vsel %vm407, %v1877, 0
        %v1893 = vsel %vm407, %v1878, 0
        %v1896 = vsel %vm407, %v1879, 0
        %1898 = vmatprep.subr.bf16.mxu0 %v1872
        %1899 = vmatpush1.bf16.msra.mxu0 %v1871
        %1900 = vmatprep.subr.bf16.mxu0 %v1875
        %1901 = vmatpush1.bf16.msra.mxu0 %v1874
        %1902 = vmatprep.subr.bf16.mxu0 %v1893
        %1903 = vmatpush1.bf16.msra.mxu0 %v1890
        %1904 = vmatprep.subr.bf16.mxu0 0
        %1905 = vmatpush1.bf16.msra.mxu0 0
        %1906 = vmatprep.subr.bf16.mxu0 0
        %1907 = vmatpush1.bf16.msra.mxu0 0
        %1908 = vmatprep.subr.bf16.mxu0 0
        %1909 = vmatpush1.bf16.msra.mxu0 0
        %1910 = vmatprep.subr.bf16.mxu0 0
        %1911 = vmatpush1.bf16.msra.mxu0 0
        %1912 = vmatprep.subr.bf16.mxu0 0
        %1913 = vmatpush1.bf16.msra.mxu0 0
        %1914 = vmatprep.subr.bf16.mxu0 0
        %1915 = vmatpush1.bf16.msra.mxu0 0
        %1916 = vmatprep.subr.bf16.mxu0 0
        %1917 = vmatpush1.bf16.msra.mxu0 0
        %1918 = vmatprep.subr.bf16.mxu0 0
        %1919 = vmatpush1.bf16.msra.mxu0 0
        %1920 = vmatprep.subr.bf16.mxu0 0
        %1921 = vmatpush1.bf16.msra.mxu0 0
        %1922 = vmatprep.subr.bf16.mxu0 0
        %1923 = vmatpush1.bf16.msra.mxu0 0
        %1924 = vmatprep.subr.bf16.mxu0 0
        %1925 = vmatpush1.bf16.msra.mxu0 0
        %1926 = vmatprep.subr.bf16.mxu0 0
        %1927 = vmatpush1.bf16.msra.mxu0 0
        %1928 = vmatprep.subr.bf16.mxu0 0
        %1929 = vmatpush1.bf16.msra.mxu0 0
        %1930 = vmatprep.mubr.bf16.mxu0 0
        %1931 = vmatmul.mubr.bf16.gmra.mrb[0].mxu0 %v1887
        %v1932 = vpop.f32.mrb[0].mxu0
        %v1933 = vadd.f32 %v1844, %v1932
        %v1934 = vpop.f32.mrb[0].mxu0
        %v1935 = vadd.f32 %v1844, %v1934
        %v1936 = vpop.f32.mrb[0].mxu0
        %v1937 = vpop.f32.mrb[0].mxu0
        %1938 = vdwg.mxu0
        %1939 = vmatprep.subr.bf16.mxu0 0
        %1940 = vmatpush1.bf16.msra.mxu0 %v1873
        %1941 = vmatprep.subr.bf16.mxu0 0
        %1942 = vmatpush1.bf16.msra.mxu0 %v1876
        %1943 = vmatprep.subr.bf16.mxu0 0
        %1944 = vmatpush1.bf16.msra.mxu0 %v1896
        %1945 = vmatprep.subr.bf16.mxu0 0
        %1946 = vmatpush1.bf16.msra.mxu0 0
        %1947 = vmatprep.subr.bf16.mxu0 0
        %1948 = vmatpush1.bf16.msra.mxu0 0
        %1949 = vmatprep.subr.bf16.mxu0 0
        %1950 = vmatpush1.bf16.msra.mxu0 0
        %1951 = vmatprep.subr.bf16.mxu0 0
        %1952 = vmatpush1.bf16.msra.mxu0 0
        %1953 = vmatprep.subr.bf16.mxu0 0
        %1954 = vmatpush1.bf16.msra.mxu0 0
        %1955 = vmatprep.subr.bf16.mxu0 0
        %1956 = vmatpush1.bf16.msra.mxu0 0
        %1957 = vmatprep.subr.bf16.mxu0 0
        %1958 = vmatpush1.bf16.msra.mxu0 0
        %1959 = vmatprep.subr.bf16.mxu0 0
        %1960 = vmatpush1.bf16.msra.mxu0 0
        %1961 = vmatprep.subr.bf16.mxu0 0
        %1962 = vmatpush1.bf16.msra.mxu0 0
        %1963 = vmatprep.subr.bf16.mxu0 0
        %1964 = vmatpush1.bf16.msra.mxu0 0
        %1965 = vmatprep.subr.bf16.mxu0 0
        %1966 = vmatpush1.bf16.msra.mxu0 0
        %1967 = vmatprep.subr.bf16.mxu0 0
        %1968 = vmatpush1.bf16.msra.mxu0 0
        %1969 = vmatprep.subr.bf16.mxu0 0
        %1970 = vmatpush1.bf16.msra.mxu0 0
        %1971 = vmatprep.mubr.bf16.mxu0 0
        %1972 = vmatmul.mubr.bf16.gmra.mrb[0].mxu0 %v1887
        %v1973 = vpop.f32.mrb[0].mxu0
        %v1974 = vadd.f32 %v1844, %v1973
        %v1975 = vpop.f32.mrb[0].mxu0
        %v1976 = vpop.f32.mrb[0].mxu0
        %v1977 = vpop.f32.mrb[0].mxu0
        %1978 = vdwg.mxu0
        %v1979 = vld [vmem:[%s1 + $0x44] sm:$0xf]
        %v1980 = vld [vmem:[#allocation4] sm:$0xff]
        %v1981 = vld [vmem:[#allocation4 + $0x8] sm:$0xff]
        %v1982 = vld [vmem:[#allocation4 + $0x10] sm:$0xff]
        %v1983 = vld [vmem:[#allocation4 + $0x20] sm:$0xff]
        %v1984 = vld [vmem:[#allocation4 + $0x28] sm:$0xff]
        %v1985 = vld [vmem:[#allocation4 + $0x30] sm:$0xff]
        %vm1986 = vcmask 261120
        %v1988 = vsel %vm1986, %v1979, 0
        %1990 = vmatprep.subr.bf16.mxu0 %v1981
        %1991 = vmatpush1.bf16.msra.mxu0 %v1980
        %1992 = vmatprep.subr.bf16.mxu0 %v1984
        %1993 = vmatpush1.bf16.msra.mxu0 %v1983
        %1994 = vmatprep.subr.bf16.mxu0 0
        %1995 = vmatpush1.bf16.msra.mxu0 0
        %1996 = vmatprep.subr.bf16.mxu0 0
        %1997 = vmatpush1.bf16.msra.mxu0 0
        %1998 = vmatprep.subr.bf16.mxu0 0
        %1999 = vmatpush1.bf16.msra.mxu0 0
        %2000 = vmatprep.subr.bf16.mxu0 0
        %2001 = vmatpush1.bf16.msra.mxu0 0
        %2002 = vmatprep.subr.bf16.mxu0 0
        %2003 = vmatpush1.bf16.msra.mxu0 0
        %2004 = vmatprep.subr.bf16.mxu0 0
        %2005 = vmatpush1.bf16.msra.mxu0 0
        %2006 = vmatprep.subr.bf16.mxu0 0
        %2007 = vmatpush1.bf16.msra.mxu0 0
        %2008 = vmatprep.subr.bf16.mxu0 0
        %2009 = vmatpush1.bf16.msra.mxu0 0
        %2010 = vmatprep.subr.bf16.mxu0 0
        %2011 = vmatpush1.bf16.msra.mxu0 0
        %2012 = vmatprep.subr.bf16.mxu0 0
        %2013 = vmatpush1.bf16.msra.mxu0 0
        %2014 = vmatprep.subr.bf16.mxu0 0
        %2015 = vmatpush1.bf16.msra.mxu0 0
        %2016 = vmatprep.subr.bf16.mxu0 0
        %2017 = vmatpush1.bf16.msra.mxu0 0
        %2018 = vmatprep.subr.bf16.mxu0 0
        %2019 = vmatpush1.bf16.msra.mxu0 0
        %2020 = vmatprep.subr.bf16.mxu0 0
        %2021 = vmatpush1.bf16.msra.mxu0 0
        %2022 = vmatprep.mubr.bf16.mxu0 0
        %2023 = vmatmul.mubr.bf16.gmra.mrb[0].mxu0 %v1988
        %v2024 = vpop.f32.mrb[0].mxu0
        %v2025 = vadd.f32 0.0, %v2024
        %v2026 = vpop.f32.mrb[0].mxu0
        %v2027 = vadd.f32 0.0, %v2026
        %v2028 = vpop.f32.mrb[0].mxu0
        %v2029 = vpop.f32.mrb[0].mxu0
        %2030 = vdwg.mxu0
        %2031 = vmatprep.subr.bf16.mxu0 0
        %2032 = vmatpush1.bf16.msra.mxu0 %v1982
        %2033 = vmatprep.subr.bf16.mxu0 0
        %2034 = vmatpush1.bf16.msra.mxu0 %v1985
        %2035 = vmatprep.subr.bf16.mxu0 0
        %2036 = vmatpush1.bf16.msra.mxu0 0
        %2037 = vmatprep.subr.bf16.mxu0 0
        %2038 = vmatpush1.bf16.msra.mxu0 0
        %2039 = vmatprep.subr.bf16.mxu0 0
        %2040 = vmatpush1.bf16.msra.mxu0 0
        %2041 = vmatprep.subr.bf16.mxu0 0
        %2042 = vmatpush1.bf16.msra.mxu0 0
        %2043 = vmatprep.subr.bf16.mxu0 0
        %2044 = vmatpush1.bf16.msra.mxu0 0
        %2045 = vmatprep.subr.bf16.mxu0 0
        %2046 = vmatpush1.bf16.msra.mxu0 0
        %2047 = vmatprep.subr.bf16.mxu0 0
        %2048 = vmatpush1.bf16.msra.mxu0 0
        %2049 = vmatprep.subr.bf16.mxu0 0
        %2050 = vmatpush1.bf16.msra.mxu0 0
        %2051 = vmatprep.subr.bf16.mxu0 0
        %2052 = vmatpush1.bf16.msra.mxu0 0
        %2053 = vmatprep.subr.bf16.mxu0 0
        %2054 = vmatpush1.bf16.msra.mxu0 0
        %2055 = vmatprep.subr.bf16.mxu0 0
        %2056 = vmatpush1.bf16.msra.mxu0 0
        %2057 = vmatprep.subr.bf16.mxu0 0
        %2058 = vmatpush1.bf16.msra.mxu0 0
        %2059 = vmatprep.subr.bf16.mxu0 0
        %2060 = vmatpush1.bf16.msra.mxu0 0
        %2061 = vmatprep.subr.bf16.mxu0 0
        %2062 = vmatpush1.bf16.msra.mxu0 0
        %2063 = vmatprep.mubr.bf16.mxu0 0
        %2064 = vmatmul.mubr.bf16.gmra.mrb[0].mxu0 %v1988
        %v2065 = vpop.f32.mrb[0].mxu0
        %v2066 = vadd.f32 0.0, %v2065
        %v2067 = vpop.f32.mrb[0].mxu0
        %v2068 = vpop.f32.mrb[0].mxu0
        %v2069 = vpop.f32.mrb[0].mxu0
        %2070 = vdwg.mxu0
        %v2071 = vadd.f32 %v1933, %v2025
        %v2072 = vadd.f32 %v1935, %v2027
        %v2073 = vadd.f32 %v1974, %v2066
        %v2074 = vld [vmem:[%s1 + $0x48] sm:$0xf]
        %v2075 = vld [vmem:[#allocation4] sm:$0xff]
        %v2076 = vld [vmem:[#allocation4 + $0x8] sm:$0xff]
        %v2077 = vld [vmem:[#allocation4 + $0x10] sm:$0xff]
        %v2078 = vld [vmem:[#allocation4 + $0x18] sm:$0xff]
        %v2079 = vld [vmem:[#allocation4 + $0x20] sm:$0xff]
        %v2080 = vld [vmem:[#allocation4 + $0x28] sm:$0xff]
        %v2081 = vld [vmem:[#allocation4 + $0x30] sm:$0xff]
        %v2082 = vld [vmem:[#allocation4 + $0x38] sm:$0xff]
        %2091 = vrot.lane.b32.xlu0 %v2075, 127
        %v2092 = vpop.permute.xlu0 %2091
        %2093 = vrot.lane.b32.xlu0 %v2076, 127
        %v2094 = vpop.permute.xlu0 %2093
        %2095 = vrot.lane.b32.xlu0 %v2077, 127
        %v2096 = vpop.permute.xlu0 %2095
        %2097 = vrot.lane.b32.xlu0 %v2078, 127
        %v2098 = vpop.permute.xlu0 %2097
        %2099 = vrot.lane.b32.xlu0 %v2079, 127
        %v2100 = vpop.permute.xlu0 %2099
        %2101 = vrot.lane.b32.xlu0 %v2080, 127
        %v2102 = vpop.permute.xlu0 %2101
        %2103 = vrot.lane.b32.xlu0 %v2081, 127
        %v2104 = vpop.permute.xlu0 %2103
        %2105 = vrot.lane.b32.xlu0 %v2082, 127
        %v2106 = vpop.permute.xlu0 %2105
        %v2107 = vsel %vm207, %v2092, %v2094
        %v2108 = vsel %vm207, %v2094, %v2096
        %v2109 = vsel %vm207, %v2096, %v2098
        %v2110 = vsel %vm207, %v2100, %v2102
        %v2111 = vsel %vm207, %v2102, %v2104
        %v2112 = vsel %vm207, %v2104, %v2106
        %v2120 = vsel %vm1986, %v2074, 0
        %2122 = vmatprep.subr.bf16.mxu0 %v2108
        %2123 = vmatpush1.bf16.msra.mxu0 %v2107
        %2124 = vmatprep.subr.bf16.mxu0 %v2111
        %2125 = vmatpush1.bf16.msra.mxu0 %v2110
        %2126 = vmatprep.subr.bf16.mxu0 0
        %2127 = vmatpush1.bf16.msra.mxu0 0
        %2128 = vmatprep.subr.bf16.mxu0 0
        %2129 = vmatpush1.bf16.msra.mxu0 0
        %2130 = vmatprep.subr.bf16.mxu0 0
        %2131 = vmatpush1.bf16.msra.mxu0 0
        %2132 = vmatprep.subr.bf16.mxu0 0
        %2133 = vmatpush1.bf16.msra.mxu0 0
        %2134 = vmatprep.subr.bf16.mxu0 0
        %2135 = vmatpush1.bf16.msra.mxu0 0
        %2136 = vmatprep.subr.bf16.mxu0 0
        %2137 = vmatpush1.bf16.msra.mxu0 0
        %2138 = vmatprep.subr.bf16.mxu0 0
        %2139 = vmatpush1.bf16.msra.mxu0 0
        %2140 = vmatprep.subr.bf16.mxu0 0
        %2141 = vmatpush1.bf16.msra.mxu0 0
        %2142 = vmatprep.subr.bf16.mxu0 0
        %2143 = vmatpush1.bf16.msra.mxu0 0
        %2144 = vmatprep.subr.bf16.mxu0 0
        %2145 = vmatpush1.bf16.msra.mxu0 0
        %2146 = vmatprep.subr.bf16.mxu0 0
        %2147 = vmatpush1.bf16.msra.mxu0 0
        %2148 = vmatprep.subr.bf16.mxu0 0
        %2149 = vmatpush1.bf16.msra.mxu0 0
        %2150 = vmatprep.subr.bf16.mxu0 0
        %2151 = vmatpush1.bf16.msra.mxu0 0
        %2152 = vmatprep.subr.bf16.mxu0 0
        %2153 = vmatpush1.bf16.msra.mxu0 0
        %2154 = vmatprep.mubr.bf16.mxu0 0
        %2155 = vmatmul.mubr.bf16.gmra.mrb[0].mxu0 %v2120
        %v2156 = vpop.f32.mrb[0].mxu0
        %v2157 = vadd.f32 0.0, %v2156
        %v2158 = vpop.f32.mrb[0].mxu0
        %v2159 = vadd.f32 0.0, %v2158
        %v2160 = vpop.f32.mrb[0].mxu0
        %v2161 = vpop.f32.mrb[0].mxu0
        %2162 = vdwg.mxu0
        %2163 = vmatprep.subr.bf16.mxu0 0
        %2164 = vmatpush1.bf16.msra.mxu0 %v2109
        %2165 = vmatprep.subr.bf16.mxu0 0
        %2166 = vmatpush1.bf16.msra.mxu0 %v2112
        %2167 = vmatprep.subr.bf16.mxu0 0
        %2168 = vmatpush1.bf16.msra.mxu0 0
        %2169 = vmatprep.subr.bf16.mxu0 0
        %2170 = vmatpush1.bf16.msra.mxu0 0
        %2171 = vmatprep.subr.bf16.mxu0 0
        %2172 = vmatpush1.bf16.msra.mxu0 0
        %2173 = vmatprep.subr.bf16.mxu0 0
        %2174 = vmatpush1.bf16.msra.mxu0 0
        %2175 = vmatprep.subr.bf16.mxu0 0
        %2176 = vmatpush1.bf16.msra.mxu0 0
        %2177 = vmatprep.subr.bf16.mxu0 0
        %2178 = vmatpush1.bf16.msra.mxu0 0
        %2179 = vmatprep.subr.bf16.mxu0 0
        %2180 = vmatpush1.bf16.msra.mxu0 0
        %2181 = vmatprep.subr.bf16.mxu0 0
        %2182 = vmatpush1.bf16.msra.mxu0 0
        %2183 = vmatprep.subr.bf16.mxu0 0
        %2184 = vmatpush1.bf16.msra.mxu0 0
        %2185 = vmatprep.subr.bf16.mxu0 0
        %2186 = vmatpush1.bf16.msra.mxu0 0
        %2187 = vmatprep.subr.bf16.mxu0 0
        %2188 = vmatpush1.bf16.msra.mxu0 0
        %2189 = vmatprep.subr.bf16.mxu0 0
        %2190 = vmatpush1.bf16.msra.mxu0 0
        %2191 = vmatprep.subr.bf16.mxu0 0
        %2192 = vmatpush1.bf16.msra.mxu0 0
        %2193 = vmatprep.subr.bf16.mxu0 0
        %2194 = vmatpush1.bf16.msra.mxu0 0
        %2195 = vmatprep.mubr.bf16.mxu0 0
        %2196 = vmatmul.mubr.bf16.gmra.mrb[0].mxu0 %v2120
        %v2197 = vpop.f32.mrb[0].mxu0
        %v2198 = vadd.f32 0.0, %v2197
        %v2199 = vpop.f32.mrb[0].mxu0
        %v2200 = vpop.f32.mrb[0].mxu0
        %v2201 = vpop.f32.mrb[0].mxu0
        %2202 = vdwg.mxu0
        %v2203 = vadd.f32 %v2071, %v2157
        %v2204 = vadd.f32 %v2072, %v2159
        %v2205 = vadd.f32 %v2073, %v2198
        %v2206 = vld [vmem:[%s1 + $0x4c] sm:$0xf]
        %2207 = vrot.lane.b32.xlu0 %v2075, 126
        %v2208 = vpop.permute.xlu0 %2207
        %2209 = vrot.lane.b32.xlu0 %v2076, 126
        %v2210 = vpop.permute.xlu0 %2209
        %2211 = vrot.lane.b32.xlu0 %v2077, 126
        %v2212 = vpop.permute.xlu0 %2211
        %2213 = vrot.lane.b32.xlu0 %v2078, 126
        %v2214 = vpop.permute.xlu0 %2213
        %2215 = vrot.lane.b32.xlu0 %v2079, 126
        %v2216 = vpop.permute.xlu0 %2215
        %2217 = vrot.lane.b32.xlu0 %v2080, 126
        %v2218 = vpop.permute.xlu0 %2217
        %2219 = vrot.lane.b32.xlu0 %v2081, 126
        %v2220 = vpop.permute.xlu0 %2219
        %2221 = vrot.lane.b32.xlu0 %v2082, 126
        %v2222 = vpop.permute.xlu0 %2221
        %v2223 = vsel %vm221, %v2208, %v2210
        %v2224 = vsel %vm221, %v2210, %v2212
        %v2225 = vsel %vm221, %v2212, %v2214
        %v2226 = vsel %vm221, %v2216, %v2218
        %v2227 = vsel %vm221, %v2218, %v2220
        %v2228 = vsel %vm221, %v2220, %v2222
        %v2236 = vsel %vm1986, %v2206, 0
        %2238 = vmatprep.subr.bf16.mxu0 %v2224
        %2239 = vmatpush1.bf16.msra.mxu0 %v2223
        %2240 = vmatprep.subr.bf16.mxu0 %v2227
        %2241 = vmatpush1.bf16.msra.mxu0 %v2226
        %2242 = vmatprep.subr.bf16.mxu0 0
        %2243 = vmatpush1.bf16.msra.mxu0 0
        %2244 = vmatprep.subr.bf16.mxu0 0
        %2245 = vmatpush1.bf16.msra.mxu0 0
        %2246 = vmatprep.subr.bf16.mxu0 0
        %2247 = vmatpush1.bf16.msra.mxu0 0
        %2248 = vmatprep.subr.bf16.mxu0 0
        %2249 = vmatpush1.bf16.msra.mxu0 0
        %2250 = vmatprep.subr.bf16.mxu0 0
        %2251 = vmatpush1.bf16.msra.mxu0 0
        %2252 = vmatprep.subr.bf16.mxu0 0
        %2253 = vmatpush1.bf16.msra.mxu0 0
        %2254 = vmatprep.subr.bf16.mxu0 0
        %2255 = vmatpush1.bf16.msra.mxu0 0
        %2256 = vmatprep.subr.bf16.mxu0 0
        %2257 = vmatpush1.bf16.msra.mxu0 0
        %2258 = vmatprep.subr.bf16.mxu0 0
        %2259 = vmatpush1.bf16.msra.mxu0 0
        %2260 = vmatprep.subr.bf16.mxu0 0
        %2261 = vmatpush1.bf16.msra.mxu0 0
        %2262 = vmatprep.subr.bf16.mxu0 0
        %2263 = vmatpush1.bf16.msra.mxu0 0
        %2264 = vmatprep.subr.bf16.mxu0 0
        %2265 = vmatpush1.bf16.msra.mxu0 0
        %2266 = vmatprep.subr.bf16.mxu0 0
        %2267 = vmatpush1.bf16.msra.mxu0 0
        %2268 = vmatprep.subr.bf16.mxu0 0
        %2269 = vmatpush1.bf16.msra.mxu0 0
        %2270 = vmatprep.mubr.bf16.mxu0 0
        %2271 = vmatmul.mubr.bf16.gmra.mrb[0].mxu0 %v2236
        %v2272 = vpop.f32.mrb[0].mxu0
        %v2273 = vadd.f32 0.0, %v2272
        %v2274 = vpop.f32.mrb[0].mxu0
        %v2275 = vadd.f32 0.0, %v2274
        %v2276 = vpop.f32.mrb[0].mxu0
        %v2277 = vpop.f32.mrb[0].mxu0
        %2278 = vdwg.mxu0
        %2279 = vmatprep.subr.bf16.mxu0 0
        %2280 = vmatpush1.bf16.msra.mxu0 %v2225
        %2281 = vmatprep.subr.bf16.mxu0 0
        %2282 = vmatpush1.bf16.msra.mxu0 %v2228
        %2283 = vmatprep.subr.bf16.mxu0 0
        %2284 = vmatpush1.bf16.msra.mxu0 0
        %2285 = vmatprep.subr.bf16.mxu0 0
        %2286 = vmatpush1.bf16.msra.mxu0 0
        %2287 = vmatprep.subr.bf16.mxu0 0
        %2288 = vmatpush1.bf16.msra.mxu0 0
        %2289 = vmatprep.subr.bf16.mxu0 0
        %2290 = vmatpush1.bf16.msra.mxu0 0
        %2291 = vmatprep.subr.bf16.mxu0 0
        %2292 = vmatpush1.bf16.msra.mxu0 0
        %2293 = vmatprep.subr.bf16.mxu0 0
        %2294 = vmatpush1.bf16.msra.mxu0 0
        %2295 = vmatprep.subr.bf16.mxu0 0
        %2296 = vmatpush1.bf16.msra.mxu0 0
        %2297 = vmatprep.subr.bf16.mxu0 0
        %2298 = vmatpush1.bf16.msra.mxu0 0
        %2299 = vmatprep.subr.bf16.mxu0 0
        %2300 = vmatpush1.bf16.msra.mxu0 0
        %2301 = vmatprep.subr.bf16.mxu0 0
        %2302 = vmatpush1.bf16.msra.mxu0 0
        %2303 = vmatprep.subr.bf16.mxu0 0
        %2304 = vmatpush1.bf16.msra.mxu0 0
        %2305 = vmatprep.subr.bf16.mxu0 0
        %2306 = vmatpush1.bf16.msra.mxu0 0
        %2307 = vmatprep.subr.bf16.mxu0 0
        %2308 = vmatpush1.bf16.msra.mxu0 0
        %2309 = vmatprep.subr.bf16.mxu0 0
        %2310 = vmatpush1.bf16.msra.mxu0 0
        %2311 = vmatprep.mubr.bf16.mxu0 0
        %2312 = vmatmul.mubr.bf16.gmra.mrb[0].mxu0 %v2236
        %v2313 = vpop.f32.mrb[0].mxu0
        %v2314 = vadd.f32 0.0, %v2313
        %v2315 = vpop.f32.mrb[0].mxu0
        %v2316 = vpop.f32.mrb[0].mxu0
        %v2317 = vpop.f32.mrb[0].mxu0
        %2318 = vdwg.mxu0
        %v2319 = vadd.f32 %v2203, %v2273
        %v2320 = vadd.f32 %v2204, %v2275
        %v2321 = vadd.f32 %v2205, %v2314
        %v2322 = vld [vmem:[%s1 + $0x50] sm:$0xf]
        %2323 = vrot.lane.b32.xlu0 %v2075, 110
        %v2324 = vpop.permute.xlu0 %2323
        %2325 = vrot.lane.b32.xlu0 %v2076, 110
        %v2326 = vpop.permute.xlu0 %2325
        %2327 = vrot.lane.b32.xlu0 %v2077, 110
        %v2328 = vpop.permute.xlu0 %2327
        %2329 = vrot.lane.b32.xlu0 %v2078, 110
        %v2330 = vpop.permute.xlu0 %2329
        %2331 = vrot.lane.b32.xlu0 %v2079, 110
        %v2332 = vpop.permute.xlu0 %2331
        %2333 = vrot.lane.b32.xlu0 %v2080, 110
        %v2334 = vpop.permute.xlu0 %2333
        %2335 = vrot.lane.b32.xlu0 %v2081, 110
        %v2336 = vpop.permute.xlu0 %2335
        %2337 = vrot.lane.b32.xlu0 %v2082, 110
        %v2338 = vpop.permute.xlu0 %2337
        %v2339 = vsel %vm235, %v2324, %v2326
        %v2340 = vsel %vm235, %v2326, %v2328
        %v2341 = vsel %vm235, %v2328, %v2330
        %v2342 = vsel %vm235, %v2332, %v2334
        %v2343 = vsel %vm235, %v2334, %v2336
        %v2344 = vsel %vm235, %v2336, %v2338
        %v2352 = vsel %vm1986, %v2322, 0
        %2354 = vmatprep.subr.bf16.mxu0 %v2340
        %2355 = vmatpush1.bf16.msra.mxu0 %v2339
        %2356 = vmatprep.subr.bf16.mxu0 %v2343
        %2357 = vmatpush1.bf16.msra.mxu0 %v2342
        %2358 = vmatprep.subr.bf16.mxu0 0
        %2359 = vmatpush1.bf16.msra.mxu0 0
        %2360 = vmatprep.subr.bf16.mxu0 0
        %2361 = vmatpush1.bf16.msra.mxu0 0
        %2362 = vmatprep.subr.bf16.mxu0 0
        %2363 = vmatpush1.bf16.msra.mxu0 0
        %2364 = vmatprep.subr.bf16.mxu0 0
        %2365 = vmatpush1.bf16.msra.mxu0 0
        %2366 = vmatprep.subr.bf16.mxu0 0
        %2367 = vmatpush1.bf16.msra.mxu0 0
        %2368 = vmatprep.subr.bf16.mxu0 0
        %2369 = vmatpush1.bf16.msra.mxu0 0
        %2370 = vmatprep.subr.bf16.mxu0 0
        %2371 = vmatpush1.bf16.msra.mxu0 0
        %2372 = vmatprep.subr.bf16.mxu0 0
        %2373 = vmatpush1.bf16.msra.mxu0 0
        %2374 = vmatprep.subr.bf16.mxu0 0
        %2375 = vmatpush1.bf16.msra.mxu0 0
        %2376 = vmatprep.subr.bf16.mxu0 0
        %2377 = vmatpush1.bf16.msra.mxu0 0
        %2378 = vmatprep.subr.bf16.mxu0 0
        %2379 = vmatpush1.bf16.msra.mxu0 0
        %2380 = vmatprep.subr.bf16.mxu0 0
        %2381 = vmatpush1.bf16.msra.mxu0 0
        %2382 = vmatprep.subr.bf16.mxu0 0
        %2383 = vmatpush1.bf16.msra.mxu0 0
        %2384 = vmatprep.subr.bf16.mxu0 0
        %2385 = vmatpush1.bf16.msra.mxu0 0
        %2386 = vmatprep.mubr.bf16.mxu0 0
        %2387 = vmatmul.mubr.bf16.gmra.mrb[0].mxu0 %v2352
        %v2388 = vpop.f32.mrb[0].mxu0
        %v2389 = vadd.f32 0.0, %v2388
        %v2390 = vpop.f32.mrb[0].mxu0
        %v2391 = vadd.f32 0.0, %v2390
        %v2392 = vpop.f32.mrb[0].mxu0
        %v2393 = vpop.f32.mrb[0].mxu0
        %2394 = vdwg.mxu0
        %2395 = vmatprep.subr.bf16.mxu0 0
        %2396 = vmatpush1.bf16.msra.mxu0 %v2341
        %2397 = vmatprep.subr.bf16.mxu0 0
        %2398 = vmatpush1.bf16.msra.mxu0 %v2344
        %2399 = vmatprep.subr.bf16.mxu0 0
        %2400 = vmatpush1.bf16.msra.mxu0 0
        %2401 = vmatprep.subr.bf16.mxu0 0
        %2402 = vmatpush1.bf16.msra.mxu0 0
        %2403 = vmatprep.subr.bf16.mxu0 0
        %2404 = vmatpush1.bf16.msra.mxu0 0
        %2405 = vmatprep.subr.bf16.mxu0 0
        %2406 = vmatpush1.bf16.msra.mxu0 0
        %2407 = vmatprep.subr.bf16.mxu0 0
        %2408 = vmatpush1.bf16.msra.mxu0 0
        %2409 = vmatprep.subr.bf16.mxu0 0
        %2410 = vmatpush1.bf16.msra.mxu0 0
        %2411 = vmatprep.subr.bf16.mxu0 0
        %2412 = vmatpush1.bf16.msra.mxu0 0
        %2413 = vmatprep.subr.bf16.mxu0 0
        %2414 = vmatpush1.bf16.msra.mxu0 0
        %2415 = vmatprep.subr.bf16.mxu0 0
        %2416 = vmatpush1.bf16.msra.mxu0 0
        %2417 = vmatprep.subr.bf16.mxu0 0
        %2418 = vmatpush1.bf16.msra.mxu0 0
        %2419 = vmatprep.subr.bf16.mxu0 0
        %2420 = vmatpush1.bf16.msra.mxu0 0
        %2421 = vmatprep.subr.bf16.mxu0 0
        %2422 = vmatpush1.bf16.msra.mxu0 0
        %2423 = vmatprep.subr.bf16.mxu0 0
        %2424 = vmatpush1.bf16.msra.mxu0 0
        %2425 = vmatprep.subr.bf16.mxu0 0
        %2426 = vmatpush1.bf16.msra.mxu0 0
        %2427 = vmatprep.mubr.bf16.mxu0 0
        %2428 = vmatmul.mubr.bf16.gmra.mrb[0].mxu0 %v2352
        %v2429 = vpop.f32.mrb[0].mxu0
        %v2430 = vadd.f32 0.0, %v2429
        %v2431 = vpop.f32.mrb[0].mxu0
        %v2432 = vpop.f32.mrb[0].mxu0
        %v2433 = vpop.f32.mrb[0].mxu0
        %2434 = vdwg.mxu0
        %v2435 = vadd.f32 %v2319, %v2389
        %v2436 = vadd.f32 %v2320, %v2391
        %v2437 = vadd.f32 %v2321, %v2430
        %v2438 = vld [vmem:[%s1 + $0x54] sm:$0xf]
        %2439 = vrot.lane.b32.xlu0 %v2075, 109
        %v2440 = vpop.permute.xlu0 %2439
        %2441 = vrot.lane.b32.xlu0 %v2076, 109
        %v2442 = vpop.permute.xlu0 %2441
        %2443 = vrot.lane.b32.xlu0 %v2077, 109
        %v2444 = vpop.permute.xlu0 %2443
        %2445 = vrot.lane.b32.xlu0 %v2078, 109
        %v2446 = vpop.permute.xlu0 %2445
        %2447 = vrot.lane.b32.xlu0 %v2079, 109
        %v2448 = vpop.permute.xlu0 %2447
        %2449 = vrot.lane.b32.xlu0 %v2080, 109
        %v2450 = vpop.permute.xlu0 %2449
        %2451 = vrot.lane.b32.xlu0 %v2081, 109
        %v2452 = vpop.permute.xlu0 %2451
        %2453 = vrot.lane.b32.xlu0 %v2082, 109
        %v2454 = vpop.permute.xlu0 %2453
        %v2455 = vsel %vm249, %v2440, %v2442
        %v2456 = vsel %vm249, %v2442, %v2444
        %v2457 = vsel %vm249, %v2444, %v2446
        %v2458 = vsel %vm249, %v2448, %v2450
        %v2459 = vsel %vm249, %v2450, %v2452
        %v2460 = vsel %vm249, %v2452, %v2454
        %v2468 = vsel %vm1986, %v2438, 0
        %2470 = vmatprep.subr.bf16.mxu0 %v2456
        %2471 = vmatpush1.bf16.msra.mxu0 %v2455
        %2472 = vmatprep.subr.bf16.mxu0 %v2459
        %2473 = vmatpush1.bf16.msra.mxu0 %v2458
        %2474 = vmatprep.subr.bf16.mxu0 0
        %2475 = vmatpush1.bf16.msra.mxu0 0
        %2476 = vmatprep.subr.bf16.mxu0 0
        %2477 = vmatpush1.bf16.msra.mxu0 0
        %2478 = vmatprep.subr.bf16.mxu0 0
        %2479 = vmatpush1.bf16.msra.mxu0 0
        %2480 = vmatprep.subr.bf16.mxu0 0
        %2481 = vmatpush1.bf16.msra.mxu0 0
        %2482 = vmatprep.subr.bf16.mxu0 0
        %2483 = vmatpush1.bf16.msra.mxu0 0
        %2484 = vmatprep.subr.bf16.mxu0 0
        %2485 = vmatpush1.bf16.msra.mxu0 0
        %2486 = vmatprep.subr.bf16.mxu0 0
        %2487 = vmatpush1.bf16.msra.mxu0 0
        %2488 = vmatprep.subr.bf16.mxu0 0
        %2489 = vmatpush1.bf16.msra.mxu0 0
        %2490 = vmatprep.subr.bf16.mxu0 0
        %2491 = vmatpush1.bf16.msra.mxu0 0
        %2492 = vmatprep.subr.bf16.mxu0 0
        %2493 = vmatpush1.bf16.msra.mxu0 0
        %2494 = vmatprep.subr.bf16.mxu0 0
        %2495 = vmatpush1.bf16.msra.mxu0 0
        %2496 = vmatprep.subr.bf16.mxu0 0
        %2497 = vmatpush1.bf16.msra.mxu0 0
        %2498 = vmatprep.subr.bf16.mxu0 0
        %2499 = vmatpush1.bf16.msra.mxu0 0
        %2500 = vmatprep.subr.bf16.mxu0 0
        %2501 = vmatpush1.bf16.msra.mxu0 0
        %2502 = vmatprep.mubr.bf16.mxu0 0
        %2503 = vmatmul.mubr.bf16.gmra.mrb[0].mxu0 %v2468
        %v2504 = vpop.f32.mrb[0].mxu0
        %v2505 = vadd.f32 0.0, %v2504
        %v2506 = vpop.f32.mrb[0].mxu0
        %v2507 = vadd.f32 0.0, %v2506
        %v2508 = vpop.f32.mrb[0].mxu0
        %v2509 = vpop.f32.mrb[0].mxu0
        %2510 = vdwg.mxu0
        %2511 = vmatprep.subr.bf16.mxu0 0
        %2512 = vmatpush1.bf16.msra.mxu0 %v2457
        %2513 = vmatprep.subr.bf16.mxu0 0
        %2514 = vmatpush1.bf16.msra.mxu0 %v2460
        %2515 = vmatprep.subr.bf16.mxu0 0
        %2516 = vmatpush1.bf16.msra.mxu0 0
        %2517 = vmatprep.subr.bf16.mxu0 0
        %2518 = vmatpush1.bf16.msra.mxu0 0
        %2519 = vmatprep.subr.bf16.mxu0 0
        %2520 = vmatpush1.bf16.msra.mxu0 0
        %2521 = vmatprep.subr.bf16.mxu0 0
        %2522 = vmatpush1.bf16.msra.mxu0 0
        %2523 = vmatprep.subr.bf16.mxu0 0
        %2524 = vmatpush1.bf16.msra.mxu0 0
        %2525 = vmatprep.subr.bf16.mxu0 0
        %2526 = vmatpush1.bf16.msra.mxu0 0
        %2527 = vmatprep.subr.bf16.mxu0 0
        %2528 = vmatpush1.bf16.msra.mxu0 0
        %2529 = vmatprep.subr.bf16.mxu0 0
        %2530 = vmatpush1.bf16.msra.mxu0 0
        %2531 = vmatprep.subr.bf16.mxu0 0
        %2532 = vmatpush1.bf16.msra.mxu0 0
        %2533 = vmatprep.subr.bf16.mxu0 0
        %2534 = vmatpush1.bf16.msra.mxu0 0
        %2535 = vmatprep.subr.bf16.mxu0 0
        %2536 = vmatpush1.bf16.msra.mxu0 0
        %2537 = vmatprep.subr.bf16.mxu0 0
        %2538 = vmatpush1.bf16.msra.mxu0 0
        %2539 = vmatprep.subr.bf16.mxu0 0
        %2540 = vmatpush1.bf16.msra.mxu0 0
        %2541 = vmatprep.subr.bf16.mxu0 0
        %2542 = vmatpush1.bf16.msra.mxu0 0
        %2543 = vmatprep.mubr.bf16.mxu0 0
        %2544 = vmatmul.mubr.bf16.gmra.mrb[0].mxu0 %v2468
        %v2545 = vpop.f32.mrb[0].mxu0
        %v2546 = vadd.f32 0.0, %v2545
        %v2547 = vpop.f32.mrb[0].mxu0
        %v2548 = vpop.f32.mrb[0].mxu0
        %v2549 = vpop.f32.mrb[0].mxu0
        %2550 = vdwg.mxu0
        %v2551 = vadd.f32 %v2435, %v2505
        %v2552 = vadd.f32 %v2436, %v2507
        %v2553 = vadd.f32 %v2437, %v2546
        %v2554 = vld [vmem:[%s1 + $0x58] sm:$0xf]
        %2555 = vrot.lane.b32.xlu0 %v2075, 108
        %v2556 = vpop.permute.xlu0 %2555
        %2557 = vrot.lane.b32.xlu0 %v2076, 108
        %v2558 = vpop.permute.xlu0 %2557
        %2559 = vrot.lane.b32.xlu0 %v2077, 108
        %v2560 = vpop.permute.xlu0 %2559
        %2561 = vrot.lane.b32.xlu0 %v2078, 108
        %v2562 = vpop.permute.xlu0 %2561
        %2563 = vrot.lane.b32.xlu0 %v2079, 108
        %v2564 = vpop.permute.xlu0 %2563
        %2565 = vrot.lane.b32.xlu0 %v2080, 108
        %v2566 = vpop.permute.xlu0 %2565
        %2567 = vrot.lane.b32.xlu0 %v2081, 108
        %v2568 = vpop.permute.xlu0 %2567
        %2569 = vrot.lane.b32.xlu0 %v2082, 108
        %v2570 = vpop.permute.xlu0 %2569
        %v2571 = vsel %vm263, %v2556, %v2558
        %v2572 = vsel %vm263, %v2558, %v2560
        %v2573 = vsel %vm263, %v2560, %v2562
        %v2574 = vsel %vm263, %v2564, %v2566
        %v2575 = vsel %vm263, %v2566, %v2568
        %v2576 = vsel %vm263, %v2568, %v2570
        %v2584 = vsel %vm1986, %v2554, 0
        %2586 = vmatprep.subr.bf16.mxu0 %v2572
        %2587 = vmatpush1.bf16.msra.mxu0 %v2571
        %2588 = vmatprep.subr.bf16.mxu0 %v2575
        %2589 = vmatpush1.bf16.msra.mxu0 %v2574
        %2590 = vmatprep.subr.bf16.mxu0 0
        %2591 = vmatpush1.bf16.msra.mxu0 0
        %2592 = vmatprep.subr.bf16.mxu0 0
        %2593 = vmatpush1.bf16.msra.mxu0 0
        %2594 = vmatprep.subr.bf16.mxu0 0
        %2595 = vmatpush1.bf16.msra.mxu0 0
        %2596 = vmatprep.subr.bf16.mxu0 0
        %2597 = vmatpush1.bf16.msra.mxu0 0
        %2598 = vmatprep.subr.bf16.mxu0 0
        %2599 = vmatpush1.bf16.msra.mxu0 0
        %2600 = vmatprep.subr.bf16.mxu0 0
        %2601 = vmatpush1.bf16.msra.mxu0 0
        %2602 = vmatprep.subr.bf16.mxu0 0
        %2603 = vmatpush1.bf16.msra.mxu0 0
        %2604 = vmatprep.subr.bf16.mxu0 0
        %2605 = vmatpush1.bf16.msra.mxu0 0
        %2606 = vmatprep.subr.bf16.mxu0 0
        %2607 = vmatpush1.bf16.msra.mxu0 0
        %2608 = vmatprep.subr.bf16.mxu0 0
        %2609 = vmatpush1.bf16.msra.mxu0 0
        %2610 = vmatprep.subr.bf16.mxu0 0
        %2611 = vmatpush1.bf16.msra.mxu0 0
        %2612 = vmatprep.subr.bf16.mxu0 0
        %2613 = vmatpush1.bf16.msra.mxu0 0
        %2614 = vmatprep.subr.bf16.mxu0 0
        %2615 = vmatpush1.bf16.msra.mxu0 0
        %2616 = vmatprep.subr.bf16.mxu0 0
        %2617 = vmatpush1.bf16.msra.mxu0 0
        %2618 = vmatprep.mubr.bf16.mxu0 0
        %2619 = vmatmul.mubr.bf16.gmra.mrb[0].mxu0 %v2584
        %v2620 = vpop.f32.mrb[0].mxu0
        %v2621 = vadd.f32 0.0, %v2620
        %v2622 = vpop.f32.mrb[0].mxu0
        %v2623 = vadd.f32 0.0, %v2622
        %v2624 = vpop.f32.mrb[0].mxu0
        %v2625 = vpop.f32.mrb[0].mxu0
        %2626 = vdwg.mxu0
        %2627 = vmatprep.subr.bf16.mxu0 0
        %2628 = vmatpush1.bf16.msra.mxu0 %v2573
        %2629 = vmatprep.subr.bf16.mxu0 0
        %2630 = vmatpush1.bf16.msra.mxu0 %v2576
        %2631 = vmatprep.subr.bf16.mxu0 0
        %2632 = vmatpush1.bf16.msra.mxu0 0
        %2633 = vmatprep.subr.bf16.mxu0 0
        %2634 = vmatpush1.bf16.msra.mxu0 0
        %2635 = vmatprep.subr.bf16.mxu0 0
        %2636 = vmatpush1.bf16.msra.mxu0 0
        %2637 = vmatprep.subr.bf16.mxu0 0
        %2638 = vmatpush1.bf16.msra.mxu0 0
        %2639 = vmatprep.subr.bf16.mxu0 0
        %2640 = vmatpush1.bf16.msra.mxu0 0
        %2641 = vmatprep.subr.bf16.mxu0 0
        %2642 = vmatpush1.bf16.msra.mxu0 0
        %2643 = vmatprep.subr.bf16.mxu0 0
        %2644 = vmatpush1.bf16.msra.mxu0 0
        %2645 = vmatprep.subr.bf16.mxu0 0
        %2646 = vmatpush1.bf16.msra.mxu0 0
        %2647 = vmatprep.subr.bf16.mxu0 0
        %2648 = vmatpush1.bf16.msra.mxu0 0
        %2649 = vmatprep.subr.bf16.mxu0 0
        %2650 = vmatpush1.bf16.msra.mxu0 0
        %2651 = vmatprep.subr.bf16.mxu0 0
        %2652 = vmatpush1.bf16.msra.mxu0 0
        %2653 = vmatprep.subr.bf16.mxu0 0
        %2654 = vmatpush1.bf16.msra.mxu0 0
        %2655 = vmatprep.subr.bf16.mxu0 0
        %2656 = vmatpush1.bf16.msra.mxu0 0
        %2657 = vmatprep.subr.bf16.mxu0 0
        %2658 = vmatpush1.bf16.msra.mxu0 0
        %2659 = vmatprep.mubr.bf16.mxu0 0
        %2660 = vmatmul.mubr.bf16.gmra.mrb[0].mxu0 %v2584
        %v2661 = vpop.f32.mrb[0].mxu0
        %v2662 = vadd.f32 0.0, %v2661
        %v2663 = vpop.f32.mrb[0].mxu0
        %v2664 = vpop.f32.mrb[0].mxu0
        %v2665 = vpop.f32.mrb[0].mxu0
        %2666 = vdwg.mxu0
        %v2667 = vadd.f32 %v2551, %v2621
        %v2668 = vadd.f32 %v2552, %v2623
        %v2669 = vadd.f32 %v2553, %v2662
        %v2670 = vld [vmem:[%s1 + $0x5c] sm:$0xf]
        %2671 = vrot.lane.b32.xlu0 %v2075, 92
        %v2672 = vpop.permute.xlu0 %2671
        %2673 = vrot.lane.b32.xlu0 %v2076, 92
        %v2674 = vpop.permute.xlu0 %2673
        %2675 = vrot.lane.b32.xlu0 %v2077, 92
        %v2676 = vpop.permute.xlu0 %2675
        %2677 = vrot.lane.b32.xlu0 %v2078, 92
        %v2678 = vpop.permute.xlu0 %2677
        %2679 = vrot.lane.b32.xlu0 %v2079, 92
        %v2680 = vpop.permute.xlu0 %2679
        %2681 = vrot.lane.b32.xlu0 %v2080, 92
        %v2682 = vpop.permute.xlu0 %2681
        %2683 = vrot.lane.b32.xlu0 %v2081, 92
        %v2684 = vpop.permute.xlu0 %2683
        %2685 = vrot.lane.b32.xlu0 %v2082, 92
        %v2686 = vpop.permute.xlu0 %2685
        %v2687 = vsel %vm277, %v2672, %v2674
        %v2688 = vsel %vm277, %v2674, %v2676
        %v2689 = vsel %vm277, %v2676, %v2678
        %v2690 = vsel %vm277, %v2680, %v2682
        %v2691 = vsel %vm277, %v2682, %v2684
        %v2692 = vsel %vm277, %v2684, %v2686
        %v2700 = vsel %vm1986, %v2670, 0
        %2702 = vmatprep.subr.bf16.mxu0 %v2688
        %2703 = vmatpush1.bf16.msra.mxu0 %v2687
        %2704 = vmatprep.subr.bf16.mxu0 %v2691
        %2705 = vmatpush1.bf16.msra.mxu0 %v2690
        %2706 = vmatprep.subr.bf16.mxu0 0
        %2707 = vmatpush1.bf16.msra.mxu0 0
        %2708 = vmatprep.subr.bf16.mxu0 0
        %2709 = vmatpush1.bf16.msra.mxu0 0
        %2710 = vmatprep.subr.bf16.mxu0 0
        %2711 = vmatpush1.bf16.msra.mxu0 0
        %2712 = vmatprep.subr.bf16.mxu0 0
        %2713 = vmatpush1.bf16.msra.mxu0 0
        %2714 = vmatprep.subr.bf16.mxu0 0
        %2715 = vmatpush1.bf16.msra.mxu0 0
        %2716 = vmatprep.subr.bf16.mxu0 0
        %2717 = vmatpush1.bf16.msra.mxu0 0
        %2718 = vmatprep.subr.bf16.mxu0 0
        %2719 = vmatpush1.bf16.msra.mxu0 0
        %2720 = vmatprep.subr.bf16.mxu0 0
        %2721 = vmatpush1.bf16.msra.mxu0 0
        %2722 = vmatprep.subr.bf16.mxu0 0
        %2723 = vmatpush1.bf16.msra.mxu0 0
        %2724 = vmatprep.subr.bf16.mxu0 0
        %2725 = vmatpush1.bf16.msra.mxu0 0
        %2726 = vmatprep.subr.bf16.mxu0 0
        %2727 = vmatpush1.bf16.msra.mxu0 0
        %2728 = vmatprep.subr.bf16.mxu0 0
        %2729 = vmatpush1.bf16.msra.mxu0 0
        %2730 = vmatprep.subr.bf16.mxu0 0
        %2731 = vmatpush1.bf16.msra.mxu0 0
        %2732 = vmatprep.subr.bf16.mxu0 0
        %2733 = vmatpush1.bf16.msra.mxu0 0
        %2734 = vmatprep.mubr.bf16.mxu0 0
        %2735 = vmatmul.mubr.bf16.gmra.mrb[0].mxu0 %v2700
        %v2736 = vpop.f32.mrb[0].mxu0
        %v2737 = vadd.f32 0.0, %v2736
        %v2738 = vpop.f32.mrb[0].mxu0
        %v2739 = vadd.f32 0.0, %v2738
        %v2740 = vpop.f32.mrb[0].mxu0
        %v2741 = vpop.f32.mrb[0].mxu0
        %2742 = vdwg.mxu0
        %2743 = vmatprep.subr.bf16.mxu0 0
        %2744 = vmatpush1.bf16.msra.mxu0 %v2689
        %2745 = vmatprep.subr.bf16.mxu0 0
        %2746 = vmatpush1.bf16.msra.mxu0 %v2692
        %2747 = vmatprep.subr.bf16.mxu0 0
        %2748 = vmatpush1.bf16.msra.mxu0 0
        %2749 = vmatprep.subr.bf16.mxu0 0
        %2750 = vmatpush1.bf16.msra.mxu0 0
        %2751 = vmatprep.subr.bf16.mxu0 0
        %2752 = vmatpush1.bf16.msra.mxu0 0
        %2753 = vmatprep.subr.bf16.mxu0 0
        %2754 = vmatpush1.bf16.msra.mxu0 0
        %2755 = vmatprep.subr.bf16.mxu0 0
        %2756 = vmatpush1.bf16.msra.mxu0 0
        %2757 = vmatprep.subr.bf16.mxu0 0
        %2758 = vmatpush1.bf16.msra.mxu0 0
        %2759 = vmatprep.subr.bf16.mxu0 0
        %2760 = vmatpush1.bf16.msra.mxu0 0
        %2761 = vmatprep.subr.bf16.mxu0 0
        %2762 = vmatpush1.bf16.msra.mxu0 0
        %2763 = vmatprep.subr.bf16.mxu0 0
        %2764 = vmatpush1.bf16.msra.mxu0 0
        %2765 = vmatprep.subr.bf16.mxu0 0
        %2766 = vmatpush1.bf16.msra.mxu0 0
        %2767 = vmatprep.subr.bf16.mxu0 0
        %2768 = vmatpush1.bf16.msra.mxu0 0
        %2769 = vmatprep.subr.bf16.mxu0 0
        %2770 = vmatpush1.bf16.msra.mxu0 0
        %2771 = vmatprep.subr.bf16.mxu0 0
        %2772 = vmatpush1.bf16.msra.mxu0 0
        %2773 = vmatprep.subr.bf16.mxu0 0
        %2774 = vmatpush1.bf16.msra.mxu0 0
        %2775 = vmatprep.mubr.bf16.mxu0 0
        %2776 = vmatmul.mubr.bf16.gmra.mrb[0].mxu0 %v2700
        %v2777 = vpop.f32.mrb[0].mxu0
        %v2778 = vadd.f32 0.0, %v2777
        %v2779 = vpop.f32.mrb[0].mxu0
        %v2780 = vpop.f32.mrb[0].mxu0
        %v2781 = vpop.f32.mrb[0].mxu0
        %2782 = vdwg.mxu0
        %v2783 = vadd.f32 %v2667, %v2737
        %v2784 = vadd.f32 %v2668, %v2739
        %v2785 = vadd.f32 %v2669, %v2778
        %v2786 = vld [vmem:[%s1 + $0x60] sm:$0xf]
        %2787 = vrot.lane.b32.xlu0 %v2075, 91
        %v2788 = vpop.permute.xlu0 %2787
        %2789 = vrot.lane.b32.xlu0 %v2076, 91
        %v2790 = vpop.permute.xlu0 %2789
        %2791 = vrot.lane.b32.xlu0 %v2077, 91
        %v2792 = vpop.permute.xlu0 %2791
        %2793 = vrot.lane.b32.xlu0 %v2078, 91
        %v2794 = vpop.permute.xlu0 %2793
        %2795 = vrot.lane.b32.xlu0 %v2079, 91
        %v2796 = vpop.permute.xlu0 %2795
        %2797 = vrot.lane.b32.xlu0 %v2080, 91
        %v2798 = vpop.permute.xlu0 %2797
        %2799 = vrot.lane.b32.xlu0 %v2081, 91
        %v2800 = vpop.permute.xlu0 %2799
        %2801 = vrot.lane.b32.xlu0 %v2082, 91
        %v2802 = vpop.permute.xlu0 %2801
        %v2803 = vsel %vm291, %v2788, %v2790
        %v2804 = vsel %vm291, %v2790, %v2792
        %v2805 = vsel %vm291, %v2792, %v2794
        %v2806 = vsel %vm291, %v2796, %v2798
        %v2807 = vsel %vm291, %v2798, %v2800
        %v2808 = vsel %vm291, %v2800, %v2802
        %v2816 = vsel %vm1986, %v2786, 0
        %2818 = vmatprep.subr.bf16.mxu0 %v2804
        %2819 = vmatpush1.bf16.msra.mxu0 %v2803
        %2820 = vmatprep.subr.bf16.mxu0 %v2807
        %2821 = vmatpush1.bf16.msra.mxu0 %v2806
        %2822 = vmatprep.subr.bf16.mxu0 0
        %2823 = vmatpush1.bf16.msra.mxu0 0
        %2824 = vmatprep.subr.bf16.mxu0 0
        %2825 = vmatpush1.bf16.msra.mxu0 0
        %2826 = vmatprep.subr.bf16.mxu0 0
        %2827 = vmatpush1.bf16.msra.mxu0 0
        %2828 = vmatprep.subr.bf16.mxu0 0
        %2829 = vmatpush1.bf16.msra.mxu0 0
        %2830 = vmatprep.subr.bf16.mxu0 0
        %2831 = vmatpush1.bf16.msra.mxu0 0
        %2832 = vmatprep.subr.bf16.mxu0 0
        %2833 = vmatpush1.bf16.msra.mxu0 0
        %2834 = vmatprep.subr.bf16.mxu0 0
        %2835 = vmatpush1.bf16.msra.mxu0 0
        %2836 = vmatprep.subr.bf16.mxu0 0
        %2837 = vmatpush1.bf16.msra.mxu0 0
        %2838 = vmatprep.subr.bf16.mxu0 0
        %2839 = vmatpush1.bf16.msra.mxu0 0
        %2840 = vmatprep.subr.bf16.mxu0 0
        %2841 = vmatpush1.bf16.msra.mxu0 0
        %2842 = vmatprep.subr.bf16.mxu0 0
        %2843 = vmatpush1.bf16.msra.mxu0 0
        %2844 = vmatprep.subr.bf16.mxu0 0
        %2845 = vmatpush1.bf16.msra.mxu0 0
        %2846 = vmatprep.subr.bf16.mxu0 0
        %2847 = vmatpush1.bf16.msra.mxu0 0
        %2848 = vmatprep.subr.bf16.mxu0 0
        %2849 = vmatpush1.bf16.msra.mxu0 0
        %2850 = vmatprep.mubr.bf16.mxu0 0
        %2851 = vmatmul.mubr.bf16.gmra.mrb[0].mxu0 %v2816
        %v2852 = vpop.f32.mrb[0].mxu0
        %v2853 = vadd.f32 0.0, %v2852
        %v2854 = vpop.f32.mrb[0].mxu0
        %v2855 = vadd.f32 0.0, %v2854
        %v2856 = vpop.f32.mrb[0].mxu0
        %v2857 = vpop.f32.mrb[0].mxu0
        %2858 = vdwg.mxu0
        %2859 = vmatprep.subr.bf16.mxu0 0
        %2860 = vmatpush1.bf16.msra.mxu0 %v2805
        %2861 = vmatprep.subr.bf16.mxu0 0
        %2862 = vmatpush1.bf16.msra.mxu0 %v2808
        %2863 = vmatprep.subr.bf16.mxu0 0
        %2864 = vmatpush1.bf16.msra.mxu0 0
        %2865 = vmatprep.subr.bf16.mxu0 0
        %2866 = vmatpush1.bf16.msra.mxu0 0
        %2867 = vmatprep.subr.bf16.mxu0 0
        %2868 = vmatpush1.bf16.msra.mxu0 0
        %2869 = vmatprep.subr.bf16.mxu0 0
        %2870 = vmatpush1.bf16.msra.mxu0 0
        %2871 = vmatprep.subr.bf16.mxu0 0
        %2872 = vmatpush1.bf16.msra.mxu0 0
        %2873 = vmatprep.subr.bf16.mxu0 0
        %2874 = vmatpush1.bf16.msra.mxu0 0
        %2875 = vmatprep.subr.bf16.mxu0 0
        %2876 = vmatpush1.bf16.msra.mxu0 0
        %2877 = vmatprep.subr.bf16.mxu0 0
        %2878 = vmatpush1.bf16.msra.mxu0 0
        %2879 = vmatprep.subr.bf16.mxu0 0
        %2880 = vmatpush1.bf16.msra.mxu0 0
        %2881 = vmatprep.subr.bf16.mxu0 0
        %2882 = vmatpush1.bf16.msra.mxu0 0
        %2883 = vmatprep.subr.bf16.mxu0 0
        %2884 = vmatpush1.bf16.msra.mxu0 0
        %2885 = vmatprep.subr.bf16.mxu0 0
        %2886 = vmatpush1.bf16.msra.mxu0 0
        %2887 = vmatprep.subr.bf16.mxu0 0
        %2888 = vmatpush1.bf16.msra.mxu0 0
        %2889 = vmatprep.subr.bf16.mxu0 0
        %2890 = vmatpush1.bf16.msra.mxu0 0
        %2891 = vmatprep.mubr.bf16.mxu0 0
        %2892 = vmatmul.mubr.bf16.gmra.mrb[0].mxu0 %v2816
        %v2893 = vpop.f32.mrb[0].mxu0
        %v2894 = vadd.f32 0.0, %v2893
        %v2895 = vpop.f32.mrb[0].mxu0
        %v2896 = vpop.f32.mrb[0].mxu0
        %v2897 = vpop.f32.mrb[0].mxu0
        %2898 = vdwg.mxu0
        %v2899 = vadd.f32 %v2783, %v2853
        %v2900 = vadd.f32 %v2784, %v2855
        %v2901 = vadd.f32 %v2785, %v2894
        %v2902 = vld [vmem:[%s1 + $0x64] sm:$0xf]
        %2903 = vrot.lane.b32.xlu0 %v2075, 90
        %v2904 = vpop.permute.xlu0 %2903
        %2905 = vrot.lane.b32.xlu0 %v2076, 90
        %v2906 = vpop.permute.xlu0 %2905
        %2907 = vrot.lane.b32.xlu0 %v2077, 90
        %v2908 = vpop.permute.xlu0 %2907
        %2909 = vrot.lane.b32.xlu0 %v2078, 90
        %v2910 = vpop.permute.xlu0 %2909
        %2911 = vrot.lane.b32.xlu0 %v2079, 90
        %v2912 = vpop.permute.xlu0 %2911
        %2913 = vrot.lane.b32.xlu0 %v2080, 90
        %v2914 = vpop.permute.xlu0 %2913
        %2915 = vrot.lane.b32.xlu0 %v2081, 90
        %v2916 = vpop.permute.xlu0 %2915
        %2917 = vrot.lane.b32.xlu0 %v2082, 90
        %v2918 = vpop.permute.xlu0 %2917
        %v2919 = vsel %vm305, %v2904, %v2906
        %v2920 = vsel %vm305, %v2906, %v2908
        %v2921 = vsel %vm305, %v2908, %v2910
        %v2922 = vsel %vm305, %v2912, %v2914
        %v2923 = vsel %vm305, %v2914, %v2916
        %v2924 = vsel %vm305, %v2916, %v2918
        %v2932 = vsel %vm1986, %v2902, 0
        %2934 = vmatprep.subr.bf16.mxu0 %v2920
        %2935 = vmatpush1.bf16.msra.mxu0 %v2919
        %2936 = vmatprep.subr.bf16.mxu0 %v2923
        %2937 = vmatpush1.bf16.msra.mxu0 %v2922
        %2938 = vmatprep.subr.bf16.mxu0 0
        %2939 = vmatpush1.bf16.msra.mxu0 0
        %2940 = vmatprep.subr.bf16.mxu0 0
        %2941 = vmatpush1.bf16.msra.mxu0 0
        %2942 = vmatprep.subr.bf16.mxu0 0
        %2943 = vmatpush1.bf16.msra.mxu0 0
        %2944 = vmatprep.subr.bf16.mxu0 0
        %2945 = vmatpush1.bf16.msra.mxu0 0
        %2946 = vmatprep.subr.bf16.mxu0 0
        %2947 = vmatpush1.bf16.msra.mxu0 0
        %2948 = vmatprep.subr.bf16.mxu0 0
        %2949 = vmatpush1.bf16.msra.mxu0 0
        %2950 = vmatprep.subr.bf16.mxu0 0
        %2951 = vmatpush1.bf16.msra.mxu0 0
        %2952 = vmatprep.subr.bf16.mxu0 0
        %2953 = vmatpush1.bf16.msra.mxu0 0
        %2954 = vmatprep.subr.bf16.mxu0 0
        %2955 = vmatpush1.bf16.msra.mxu0 0
        %2956 = vmatprep.subr.bf16.mxu0 0
        %2957 = vmatpush1.bf16.msra.mxu0 0
        %2958 = vmatprep.subr.bf16.mxu0 0
        %2959 = vmatpush1.bf16.msra.mxu0 0
        %2960 = vmatprep.subr.bf16.mxu0 0
        %2961 = vmatpush1.bf16.msra.mxu0 0
        %2962 = vmatprep.subr.bf16.mxu0 0
        %2963 = vmatpush1.bf16.msra.mxu0 0
        %2964 = vmatprep.subr.bf16.mxu0 0
        %2965 = vmatpush1.bf16.msra.mxu0 0
        %2966 = vmatprep.mubr.bf16.mxu0 0
        %2967 = vmatmul.mubr.bf16.gmra.mrb[0].mxu0 %v2932
        %v2968 = vpop.f32.mrb[0].mxu0
        %v2969 = vadd.f32 0.0, %v2968
        %v2970 = vpop.f32.mrb[0].mxu0
        %v2971 = vadd.f32 0.0, %v2970
        %v2972 = vpop.f32.mrb[0].mxu0
        %v2973 = vpop.f32.mrb[0].mxu0
        %2974 = vdwg.mxu0
        %2975 = vmatprep.subr.bf16.mxu0 0
        %2976 = vmatpush1.bf16.msra.mxu0 %v2921
        %2977 = vmatprep.subr.bf16.mxu0 0
        %2978 = vmatpush1.bf16.msra.mxu0 %v2924
        %2979 = vmatprep.subr.bf16.mxu0 0
        %2980 = vmatpush1.bf16.msra.mxu0 0
        %2981 = vmatprep.subr.bf16.mxu0 0
        %2982 = vmatpush1.bf16.msra.mxu0 0
        %2983 = vmatprep.subr.bf16.mxu0 0
        %2984 = vmatpush1.bf16.msra.mxu0 0
        %2985 = vmatprep.subr.bf16.mxu0 0
        %2986 = vmatpush1.bf16.msra.mxu0 0
        %2987 = vmatprep.subr.bf16.mxu0 0
        %2988 = vmatpush1.bf16.msra.mxu0 0
        %2989 = vmatprep.subr.bf16.mxu0 0
        %2990 = vmatpush1.bf16.msra.mxu0 0
        %2991 = vmatprep.subr.bf16.mxu0 0
        %2992 = vmatpush1.bf16.msra.mxu0 0
        %2993 = vmatprep.subr.bf16.mxu0 0
        %2994 = vmatpush1.bf16.msra.mxu0 0
        %2995 = vmatprep.subr.bf16.mxu0 0
        %2996 = vmatpush1.bf16.msra.mxu0 0
        %2997 = vmatprep.subr.bf16.mxu0 0
        %2998 = vmatpush1.bf16.msra.mxu0 0
        %2999 = vmatprep.subr.bf16.mxu0 0
        %3000 = vmatpush1.bf16.msra.mxu0 0
        %3001 = vmatprep.subr.bf16.mxu0 0
        %3002 = vmatpush1.bf16.msra.mxu0 0
        %3003 = vmatprep.subr.bf16.mxu0 0
        %3004 = vmatpush1.bf16.msra.mxu0 0
        %3005 = vmatprep.subr.bf16.mxu0 0
        %3006 = vmatpush1.bf16.msra.mxu0 0
        %3007 = vmatprep.mubr.bf16.mxu0 0
        %3008 = vmatmul.mubr.bf16.gmra.mrb[0].mxu0 %v2932
        %v3009 = vpop.f32.mrb[0].mxu0
        %v3010 = vadd.f32 0.0, %v3009
        %v3011 = vpop.f32.mrb[0].mxu0
        %v3012 = vpop.f32.mrb[0].mxu0
        %v3013 = vpop.f32.mrb[0].mxu0
        %3014 = vdwg.mxu0
        %v3015 = vadd.f32 %v2899, %v2969
        %v3016 = vadd.f32 %v2900, %v2971
        %v3017 = vadd.f32 %v2901, %v3010
        %3018 = vst [vmem:[%s163] sm:$0xff] %v3015
        %3019 = vst [vmem:[%s163 + $0x8] sm:$0xff] %v3016
        %3020 = vst [vmem:[%s163 + $0x10] sm:$0xff] %v3017
        %s3021 = sand.u32 %s93, 1
        %s3022 = scalar_lea.sflag [#allocation6], %s3021
        %s3023 = sand.u32 %s93, 1
        %s3024 = smul.addr %s3023, 24
        %s3025 = scalar_lea.vmem [#allocation5], %s3024
        // Predicated region
        $region33: #{tpu_custom_call.1} parent=31 // pred_check
          %p3026 = pneg %p103
        $region34: #{tpu_custom_call.1} parent=31 // pred_check_branch
          %3028 = sbr.rel (%p3026) target = $region36
        $region35: #{tpu_custom_call.1} parent=31 // pred_region
          %s3030 = ssub.s32 384, 384
          %3031 = vsyncadd %s3022, %s3030
          %s3032 = smul.addr %s17, 3
          %s3033 = smul.addr %s3032, 128
          %s3034 = scalar_lea.hbm %s3, %s3033
          %s3036 = sshll.u32 %s3025, 4
          %s3037 = int_to_ptr.vmem [resolvable:$true] %s3036
          %3039 = dma.vmem_to_hbm [thread:$0]  %s3037, 384, %s3034, %s3022
        $region36: #{tpu_custom_call.1} parent=31 // pred_fallthru
          _
      $region32: #{tpu_custom_call.1} parent=5 // pred_fallthru
        _
      %p3040 = scmp.le.s32.totalorder 2, %s12
      // Predicated region
      $region37: #{tpu_custom_call.1} parent=5 // pred_check
        %p3041 = pneg %p3040
      $region38: #{tpu_custom_call.1} parent=5 // pred_check_branch
        %3043 = sbr.rel (%p3041) target = $region40
      $region39: #{tpu_custom_call.1} parent=5 // pred_region
        %s3044 = ssub.s32 %s12, 2
        // Predicated region
        $region41: #{tpu_custom_call.1} parent=39 // pred_check
          %p3045 = pneg %p109
        $region42: #{tpu_custom_call.1} parent=39 // pred_check_branch
          %3047 = sbr.rel (%p3045) target = $region44
        $region43: #{tpu_custom_call.1} parent=39 // pred_region
          %s3048 = sand.u32 %s94, 1
          %s3049 = scalar_lea.sflag [#allocation6], %s3048
          %s3050 = sand.u32 %s94, 1
          %s3051 = smul.addr %s3050, 24
          %s3052 = scalar_lea.vmem [#allocation5], %s3051
          %3053 = dma.done %s3049, 384
        $region44: #{tpu_custom_call.1} parent=39 // pred_fallthru
          _
      $region40: #{tpu_custom_call.1} parent=5 // pred_fallthru
        _
    $region6: #{tpu_custom_call.1} parent=1 // loop_footer
      %s16 = sadd.s32 1, %s12
    $region7: #{tpu_custom_call.1} parent=1 // loop_footer_branch
      %11 = sbr.rel target = $region3
    $region8: #{tpu_custom_call.1} parent=1 // loop_exit
      _
    %3054 = vsyncpa [#allocation6], 1
    %s3055 = scalar_lea.sflag [#allocation6], 1
    %3056 = vsyncpa %s3055, 1

</llo_original>
